<compile_context>
chip_gen: v7x
topology: tpu7x:2x2x1
jax: 0.10.0
libtpu: 0.0.40
codegen_flags: <defaults>
</compile_context>

<pallas_src>
import functools

import jax
import jax.numpy as jnp
from jax import lax
from jax.experimental import pallas as pl
from jax.experimental.pallas import tpu as pltpu


def _round_up(n, m):
    return (n + m - 1) // m * m


# ----------------------------- Pallas kernel -------------------------------

def _stnkd_kernel(x_ref,
                  w1_ref, t1_ref, w2_ref, t2_ref, w3_ref, t3_ref,
                  wf1_ref, t4_ref, wf2_ref, t5_ref, wf3_ref, bi_ref,
                  o_ref, acc_ref,
                  *, n_points, tn, chunk, ragged):
    """Fused STNkd forward.

    x_ref:   (TB, k, TN) f32 tile, native channels-first layout
    w*_ref:  bf16 weights, BN scale folded into columns (layers 1/2 lane-padded)
    t*_ref:  (1, C) f32 folded BN shifts (include conv/fc bias)
    wf3_ref: (256, KKp) bf16 ; bi_ref: (1, KKp) f32 = fc3 bias + identity (padded)
    o_ref:   (TB, KKp) f32
    acc_ref: (TB, 1024) f32 running RAW max over point tiles (VMEM scratch)
    """
    nt = pl.program_id(1)
    tb = x_ref.shape[0]
    n_chunks = acc_ref.shape[1] // chunk

    # Accumulator holds the raw layer-3 pre-activation maxima (shift + ReLU are
    # deferred past the max), so it must start at -inf.
    @pl.when(nt == 0)
    def _():
        acc_ref[...] = jnp.full(acc_ref.shape, -jnp.inf, acc_ref.dtype)

    if ragged:
        pidx = nt * tn + lax.broadcasted_iota(jnp.int32, (tn, 1), 0)
        valid = pidx < n_points  # (TN, 1) mask of real points in this tile

    # --- point MLP, one batch of the tile at a time (static unrolled loop) ---
    for b in range(tb):
        xb = x_ref[b].astype(jnp.bfloat16)                            # (k, TN)
        # layer 1: contract over k (dim 0 of both operands -> no transpose op)
        h = lax.dot_general(xb, w1_ref[...], (((0,), (0,)), ((), ())),
                            preferred_element_type=jnp.float32)       # (TN, 128)
        h = jnp.maximum(h + t1_ref[...], 0.0).astype(jnp.bfloat16)
        # layer 2
        h = jnp.dot(h, w2_ref[...], preferred_element_type=jnp.float32)
        h = jnp.maximum(h + t2_ref[...], 0.0).astype(jnp.bfloat16)    # (TN, 128)
        # layer 3, chunked over output channels; shift+ReLU deferred past max
        for c in range(n_chunks):
            cs = c * chunk
            hc = jnp.dot(h, w3_ref[:, cs:cs + chunk],
                         preferred_element_type=jnp.float32)          # (TN, CH)
            if ragged:
                hc = jnp.where(valid, hc, -jnp.inf)
            m = jnp.max(hc, axis=0, keepdims=True)                    # (1, CH)
            cur = acc_ref[b:b + 1, cs:cs + chunk]
            acc_ref[b:b + 1, cs:cs + chunk] = jnp.maximum(cur, m)

    # --- FC head fused into the last reduction step ---
    @pl.when(nt == pl.num_programs(1) - 1)
    def _():
        g = jnp.maximum(acc_ref[...] + t3_ref[...], 0.0)   # deferred bn3 shift + ReLU
        g = g.astype(jnp.bfloat16)                                    # (TB, 1024)
        y = jnp.dot(g, wf1_ref[...], preferred_element_type=jnp.float32)
        y = jnp.maximum(y + t4_ref[...], 0.0).astype(jnp.bfloat16)    # (TB, 512)
        y = jnp.dot(y, wf2_ref[...], preferred_element_type=jnp.float32)
        y = jnp.maximum(y + t5_ref[...], 0.0).astype(jnp.bfloat16)    # (TB, 256)
        y = jnp.dot(y, wf3_ref[...], preferred_element_type=jnp.float32)
        o_ref[...] = y + bi_ref[...]                                  # (TB, KKp)


# ------------------------------ params / folding ---------------------------

def _fold_bn(gamma, beta, mean, var, bias, eps=1e-5):
    """Fold eval-mode BatchNorm (+ preceding layer bias) into scale/shift."""
    scale = gamma / jnp.sqrt(var + eps)
    shift = beta - mean * scale + bias * scale
    return scale, shift


def init_stnkd_params(key, k):
    """Deterministic synthetic parameters matching STNkd(k).__init__ shapes."""
    dims_conv = [(k, 64), (64, 128), (128, 1024)]
    dims_fc = [(1024, 512), (512, 256), (256, k * k)]
    p = {}
    keys = jax.random.split(key, 32)
    ki = iter(range(32))

    def bn_params(c):
        gamma = 1.0 + 0.1 * jax.random.normal(keys[next(ki)], (c,), jnp.float32)
        beta = 0.1 * jax.random.normal(keys[next(ki)], (c,), jnp.float32)
        mean = 0.1 * jax.random.normal(keys[next(ki)], (c,), jnp.float32)
        var = jax.random.uniform(keys[next(ki)], (c,), jnp.float32, 0.5, 1.5)
        return gamma, beta, mean, var

    # conv1..conv3 (weights stored as (Cin, Cout)), bn1..bn3
    for i, (cin, cout) in enumerate(dims_conv, start=1):
        w = 0.1 * jax.random.normal(keys[next(ki)], (cin, cout), jnp.float32)
        b = 0.1 * jax.random.normal(keys[next(ki)], (cout,), jnp.float32)
        g, be, m, v = bn_params(cout)
        s, t = _fold_bn(g, be, m, v, b)
        p[f'w{i}'] = w
        p[f's{i}'] = s
        p[f't{i}'] = t

    # fc1, fc2 with bn4, bn5
    for j, (cin, cout) in enumerate(dims_fc[:2], start=1):
        w = 0.1 * jax.random.normal(keys[next(ki)], (cin, cout), jnp.float32)
        b = 0.1 * jax.random.normal(keys[next(ki)], (cout,), jnp.float32)
        g, be, m, v = bn_params(cout)
        s, t = _fold_bn(g, be, m, v, b)
        p[f'wf{j}'] = w
        p[f's{j + 3}'] = s
        p[f't{j + 3}'] = t

    # fc3 (no BN)
    cin, cout = dims_fc[2]
    p['wf3'] = 0.1 * jax.random.normal(keys[next(ki)], (cin, cout), jnp.float32)
    p['bf3'] = 0.1 * jax.random.normal(keys[next(ki)], (cout,), jnp.float32)
    return p


def _fold_unpadded(params, k):
    """BN scale folded into weight columns; bf16 weights, (1,C) f32 shifts."""
    def wfold(w, s):
        return (w * s[None, :]).astype(jnp.bfloat16)
    row = lambda v: v.reshape(1, -1).astype(jnp.float32)
    iden = jnp.eye(k, dtype=jnp.float32).reshape(1, k * k)
    return dict(
        w1=wfold(params['w1'], params['s1']), t1=row(params['t1']),
        w2=wfold(params['w2'], params['s2']), t2=row(params['t2']),
        w3=wfold(params['w3'], params['s3']), t3=row(params['t3']),
        wf1=wfold(params['wf1'], params['s4']), t4=row(params['t4']),
        wf2=wfold(params['wf2'], params['s5']), t5=row(params['t5']),
        wf3=params['wf3'].astype(jnp.bfloat16), bi=row(params['bf3']) + iden,
    )


def _fold_params(params, k):
    """Kernel operands: lane-dense zero-padded versions of the folded weights.

    w1 columns 64->128 (t1 padded with zeros), w2 rows 64->128, wf3/bi columns
    k*k -> round_up(k*k, 128).  All padding is exact zeros, so the math is
    unchanged (padded channels stay exactly 0 through ReLU).
    """
    f = _fold_unpadded(params, k)
    kk = k * k
    kkp = _round_up(kk, 128)
    w1 = jnp.pad(f['w1'], ((0, 0), (0, 128 - 64)))
    t1 = jnp.pad(f['t1'], ((0, 0), (0, 128 - 64)))
    w2 = jnp.pad(f['w2'], ((0, 128 - 64), (0, 0)))
    wf3 = jnp.pad(f['wf3'], ((0, 0), (0, kkp - kk)))
    bi = jnp.pad(f['bi'], ((0, 0), (0, kkp - kk)))
    return (w1, t1, w2, f['t2'], f['w3'], f['t3'],
            f['wf1'], f['t4'], f['wf2'], f['t5'], wf3, bi)


# ------------------------------ wrapper / glue ------------------------------

@functools.partial(jax.jit, static_argnames=('k',))
def stnkd_forward(x_ncw, params, k):
    """x_ncw: (B, k, N) float32 (PyTorch Conv1d layout). Returns (B, k, k)."""
    B, C, N = x_ncw.shape
    assert C == k

    ops = _fold_params(params, k)
    kkp = ops[-1].shape[1]            # padded k*k output width (multiple of 128)
    chunk = 256                       # layer-3 output-channel chunk width

    # Tile sizes: TB batches per output block (<=8, sublane-dense writeback);
    # TN points per tile (big tiles amortize the ~0.35us/step overhead).
    TB = 8 if B >= 8 else B
    if N <= 512:
        TN = N
    elif N % 512 == 0:
        TN = 512
    else:
        TN = 256
    ragged = (N % TN) != 0            # last point tile partially out of bounds
    grid_b = pl.cdiv(B, TB)
    grid_n = pl.cdiv(N, TN)

    kernel = functools.partial(_stnkd_kernel, n_points=N, tn=TN,
                               chunk=chunk, ragged=ragged)

    def rep_spec(a):
        # Replicated constant operand: full block, constant index map,
        # single-buffered (nothing to double-buffer -> halves resident VMEM).
        nd = a.ndim
        return pl.BlockSpec(a.shape, lambda b, n, _nd=nd: (0,) * _nd,
                            pipeline_mode=pl.Buffered(1))

    in_specs = [pl.BlockSpec((TB, C, TN), lambda b, n: (b, 0, n))]
    in_specs += [rep_spec(a) for a in ops]

    flops = (2 * B * N * (k * 128 + 128 * 128 + 128 * 1024)
             + 2 * B * (1024 * 512 + 512 * 256 + 256 * kkp))
    bytes_accessed = (x_ncw.size * x_ncw.dtype.itemsize
                      + sum(int(a.size) * a.dtype.itemsize for a in ops)
                      + grid_b * TB * kkp * 4)

    out_flat = pl.pallas_call(
        kernel,
        out_shape=jax.ShapeDtypeStruct((grid_b * TB, kkp), jnp.float32),
        grid_spec=pltpu.PrefetchScalarGridSpec(
            num_scalar_prefetch=0,
            grid=(grid_b, grid_n),
            in_specs=in_specs,
            out_specs=pl.BlockSpec((TB, kkp), lambda b, n: (b, 0)),
            scratch_shapes=[pltpu.VMEM((TB, 1024), jnp.float32)]),
        compiler_params=pltpu.CompilerParams(
            dimension_semantics=("parallel", "arbitrary"),
            vmem_limit_bytes=32 * 1024 * 1024),
        cost_estimate=pl.CostEstimate(flops=flops, transcendentals=0,
                                      bytes_accessed=bytes_accessed),
    )(x_ncw, *ops)

    return out_flat[:B, :k * k].reshape(B, k, k)


def stnkd_reference(x_ncw, params, k):
    """Pure-JAX reference with matching mixed precision (bf16 inputs, f32 accum)."""
    f = _fold_unpadded(params, k)
    B, C, N = x_ncw.shape
    x = jnp.transpose(x_ncw, (0, 2, 1)).reshape(B * N, C).astype(jnp.bfloat16)
    h = jnp.maximum(jnp.dot(x, f['w1'], preferred_element_type=jnp.float32) + f['t1'], 0.0).astype(jnp.bfloat16)
    h = jnp.maximum(jnp.dot(h, f['w2'], preferred_element_type=jnp.float32) + f['t2'], 0.0).astype(jnp.bfloat16)
    h = jnp.maximum(jnp.dot(h, f['w3'], preferred_element_type=jnp.float32) + f['t3'], 0.0)
    g = jnp.max(h.reshape(B, N, 1024), axis=1).astype(jnp.bfloat16)
    y = jnp.maximum(jnp.dot(g, f['wf1'], preferred_element_type=jnp.float32) + f['t4'], 0.0).astype(jnp.bfloat16)
    y = jnp.maximum(jnp.dot(y, f['wf2'], preferred_element_type=jnp.float32) + f['t5'], 0.0).astype(jnp.bfloat16)
    y = jnp.dot(y, f['wf3'], preferred_element_type=jnp.float32) + f['bi']
    return y.reshape(B, k, k)


if __name__ == "__main__":
    B, K, N = 2, 16, 32  # small shapes: batch=2, k=16 channels, 32 points
    key = jax.random.PRNGKey(0)
    kx, kp = jax.random.split(key)
    x = jax.random.normal(kx, (B, K, N), jnp.float32)  # PyTorch (B, C, N) layout
    params = init_stnkd_params(kp, K)

    out = jax.block_until_ready(stnkd_forward(x, params, K))
    ref = stnkd_reference(x, params, K)

    assert out.shape == (B, K, K)
    max_err = float(jnp.max(jnp.abs(out - ref)))
    assert jnp.allclose(out, ref, atol=2e-2, rtol=2e-2), \
        f"mismatch vs reference (max abs err {max_err})"

    print("KERNEL_OK")
</pallas_src>

<mosaic_0001>
module attributes {stable_mosaic.version = 11 : i64} {
  func.func @_stnkd_kernel(%arg0: i32, %arg1: i32, %arg2: memref<2x16x32xf32, #tpu.memory_space<vmem>>, %arg3: memref<16x128xbf16, #tpu.memory_space<vmem>>, %arg4: memref<1x128xf32, #tpu.memory_space<vmem>>, %arg5: memref<128x128xbf16, #tpu.memory_space<vmem>>, %arg6: memref<1x128xf32, #tpu.memory_space<vmem>>, %arg7: memref<128x1024xbf16, #tpu.memory_space<vmem>>, %arg8: memref<1x1024xf32, #tpu.memory_space<vmem>>, %arg9: memref<1024x512xbf16, #tpu.memory_space<vmem>>, %arg10: memref<1x512xf32, #tpu.memory_space<vmem>>, %arg11: memref<512x256xbf16, #tpu.memory_space<vmem>>, %arg12: memref<1x256xf32, #tpu.memory_space<vmem>>, %arg13: memref<256x256xbf16, #tpu.memory_space<vmem>>, %arg14: memref<1x256xf32, #tpu.memory_space<vmem>>, %arg15: memref<2x256xf32, #tpu.memory_space<vmem>>, %arg16: memref<2x1024xf32, #tpu.memory_space<vmem>>) attributes {dimension_semantics = [#tpu.dimension_semantics<parallel>, #tpu.dimension_semantics<arbitrary>], iteration_bounds = array<i64: 1, 1>, scalar_prefetch = 0 : i64, scratch_operands = 1 : i64, tpu.core_type = #tpu.core_type<tc>, window_params = [{transform_indices = @transform_0, window_bounds = array<i64: 2, 16, 32>}, {pipeline_mode = #tpu.pipeline_mode<synchronous>, transform_indices = @transform_1, window_bounds = array<i64: 16, 128>}, {pipeline_mode = #tpu.pipeline_mode<synchronous>, transform_indices = @transform_2, window_bounds = array<i64: 1, 128>}, {pipeline_mode = #tpu.pipeline_mode<synchronous>, transform_indices = @transform_3, window_bounds = array<i64: 128, 128>}, {pipeline_mode = #tpu.pipeline_mode<synchronous>, transform_indices = @transform_4, window_bounds = array<i64: 1, 128>}, {pipeline_mode = #tpu.pipeline_mode<synchronous>, transform_indices = @transform_5, window_bounds = array<i64: 128, 1024>}, {pipeline_mode = #tpu.pipeline_mode<synchronous>, transform_indices = @transform_6, window_bounds = array<i64: 1, 1024>}, {pipeline_mode = #tpu.pipeline_mode<synchronous>, transform_indices = @transform_7, window_bounds = array<i64: 1024, 512>}, {pipeline_mode = #tpu.pipeline_mode<synchronous>, transform_indices = @transform_8, window_bounds = array<i64: 1, 512>}, {pipeline_mode = #tpu.pipeline_mode<synchronous>, transform_indices = @transform_9, window_bounds = array<i64: 512, 256>}, {pipeline_mode = #tpu.pipeline_mode<synchronous>, transform_indices = @transform_10, window_bounds = array<i64: 1, 256>}, {pipeline_mode = #tpu.pipeline_mode<synchronous>, transform_indices = @transform_11, window_bounds = array<i64: 256, 256>}, {pipeline_mode = #tpu.pipeline_mode<synchronous>, transform_indices = @transform_12, window_bounds = array<i64: 1, 256>}, {transform_indices = @transform_13, window_bounds = array<i64: 2, 256>}]} {
    %c0_i32 = arith.constant 0 : i32
    %0 = arith.cmpi eq, %arg1, %c0_i32 : i32
    %1 = arith.extui %0 : i1 to i32
    %c0_i32_0 = arith.constant 0 : i32
    %2 = arith.cmpi ne, %1, %c0_i32_0 : i32
    scf.if %2 {
      %cst_91 = arith.constant 0xFF800000 : f32
      %100 = vector.broadcast %cst_91 : f32 to vector<2x1024xf32>
      %c0_92 = arith.constant 0 : index
      %c0_93 = arith.constant 0 : index
      %101 = vector.load %arg16[%c0_92, %c0_93] : memref<2x1024xf32, #tpu.memory_space<vmem>>, vector<2x1024xf32>
      tpu.vector_store %arg16[%c0_92, %c0_93], %100 {strides = array<i32>} : memref<2x1024xf32, #tpu.memory_space<vmem>>, vector<2x1024xf32>,
    } else {
    }
    %c0 = arith.constant 0 : index
    %c0_1 = arith.constant 0 : index
    %c0_2 = arith.constant 0 : index
    %3 = vector.load %arg2[%c0, %c0_1, %c0_2] : memref<2x16x32xf32, #tpu.memory_space<vmem>>, vector<1x16x32xf32>
    %4 = vector.shape_cast %3 : vector<1x16x32xf32> to vector<16x32xf32>
    %5 = arith.truncf %4 : vector<16x32xf32> to vector<16x32xbf16>
    %c0_3 = arith.constant 0 : index
    %c0_4 = arith.constant 0 : index
    %6 = vector.load %arg3[%c0_3, %c0_4] : memref<16x128xbf16, #tpu.memory_space<vmem>>, vector<16x128xbf16>
    %cst = arith.constant dense<0.000000e+00> : vector<32x128xf32>
    %7 = tpu.matmul %5, %6, %cst {dimension_numbers = #tpu.dot_dimension_numbers<[0], [0], [1], [1], [0, 1, 1, 1], [], []>} : vector<16x32xbf16>, vector<16x128xbf16>, vector<32x128xf32> -> vector<32x128xf32>
    %c0_5 = arith.constant 0 : index
    %c0_6 = arith.constant 0 : index
    %8 = vector.load %arg4[%c0_5, %c0_6] : memref<1x128xf32, #tpu.memory_space<vmem>>, vector<1x128xf32>
    %9 = vector.broadcast %8 : vector<1x128xf32> to vector<32x128xf32>
    %10 = arith.addf %7, %9 : vector<32x128xf32>
    %cst_7 = arith.constant 0.000000e+00 : f32
    %11 = vector.broadcast %cst_7 : f32 to vector<32x128xf32>
    %12 = arith.maximumf %10, %11 : vector<32x128xf32>
    %13 = arith.truncf %12 : vector<32x128xf32> to vector<32x128xbf16>
    %c0_8 = arith.constant 0 : index
    %c0_9 = arith.constant 0 : index
    %14 = vector.load %arg5[%c0_8, %c0_9] : memref<128x128xbf16, #tpu.memory_space<vmem>>, vector<128x128xbf16>
    %cst_10 = arith.constant dense<0.000000e+00> : vector<32x128xf32>
    %15 = tpu.matmul %13, %14, %cst_10 {dimension_numbers = #tpu.dot_dimension_numbers<[1], [0], [0], [1], [0, 0, 1, 1], [], []>} : vector<32x128xbf16>, vector<128x128xbf16>, vector<32x128xf32> -> vector<32x128xf32>
    %c0_11 = arith.constant 0 : index
    %c0_12 = arith.constant 0 : index
    %16 = vector.load %arg6[%c0_11, %c0_12] : memref<1x128xf32, #tpu.memory_space<vmem>>, vector<1x128xf32>
    %17 = vector.broadcast %16 : vector<1x128xf32> to vector<32x128xf32>
    %18 = arith.addf %15, %17 : vector<32x128xf32>
    %cst_13 = arith.constant 0.000000e+00 : f32
    %19 = vector.broadcast %cst_13 : f32 to vector<32x128xf32>
    %20 = arith.maximumf %18, %19 : vector<32x128xf32>
    %21 = arith.truncf %20 : vector<32x128xf32> to vector<32x128xbf16>
    %c0_14 = arith.constant 0 : index
    %c0_15 = arith.constant 0 : index
    %22 = vector.load %arg7[%c0_14, %c0_15] : memref<128x1024xbf16, #tpu.memory_space<vmem>>, vector<128x256xbf16>
    %cst_16 = arith.constant dense<0.000000e+00> : vector<32x256xf32>
    %23 = tpu.matmul %21, %22, %cst_16 {dimension_numbers = #tpu.dot_dimension_numbers<[1], [0], [0], [1], [0, 0, 1, 1], [], []>} : vector<32x128xbf16>, vector<128x256xbf16>, vector<32x256xf32> -> vector<32x256xf32>
    %cst_17 = arith.constant dense<0xFF800000> : vector<256xf32>
    %24 = vector.multi_reduction <maximumf>, %23, %cst_17 [0] : vector<32x256xf32> to vector<256xf32>
    %25 = vector.shape_cast %24 : vector<256xf32> to vector<1x256xf32>
    %c0_18 = arith.constant 0 : index
    %c0_19 = arith.constant 0 : index
    %26 = vector.load %arg16[%c0_18, %c0_19] : memref<2x1024xf32, #tpu.memory_space<vmem>>, vector<1x256xf32>
    %27 = arith.maximumf %26, %25 : vector<1x256xf32>
    %c0_20 = arith.constant 0 : index
    %c0_21 = arith.constant 0 : index
    %28 = vector.load %arg16[%c0_20, %c0_21] : memref<2x1024xf32, #tpu.memory_space<vmem>>, vector<1x256xf32>
    tpu.vector_store %arg16[%c0_20, %c0_21], %27 {strides = array<i32>} : memref<2x1024xf32, #tpu.memory_space<vmem>>, vector<1x256xf32>,
    %c0_22 = arith.constant 0 : index
    %c256 = arith.constant 256 : index
    %29 = vector.load %arg7[%c0_22, %c256] : memref<128x1024xbf16, #tpu.memory_space<vmem>>, vector<128x256xbf16>
    %cst_23 = arith.constant dense<0.000000e+00> : vector<32x256xf32>
    %30 = tpu.matmul %21, %29, %cst_23 {dimension_numbers = #tpu.dot_dimension_numbers<[1], [0], [0], [1], [0, 0, 1, 1], [], []>} : vector<32x128xbf16>, vector<128x256xbf16>, vector<32x256xf32> -> vector<32x256xf32>
    %cst_24 = arith.constant dense<0xFF800000> : vector<256xf32>
    %31 = vector.multi_reduction <maximumf>, %30, %cst_24 [0] : vector<32x256xf32> to vector<256xf32>
    %32 = vector.shape_cast %31 : vector<256xf32> to vector<1x256xf32>
    %c0_25 = arith.constant 0 : index
    %c256_26 = arith.constant 256 : index
    %33 = vector.load %arg16[%c0_25, %c256_26] : memref<2x1024xf32, #tpu.memory_space<vmem>>, vector<1x256xf32>
    %34 = arith.maximumf %33, %32 : vector<1x256xf32>
    %c0_27 = arith.constant 0 : index
    %c256_28 = arith.constant 256 : index
    %35 = vector.load %arg16[%c0_27, %c256_28] : memref<2x1024xf32, #tpu.memory_space<vmem>>, vector<1x256xf32>
    tpu.vector_store %arg16[%c0_27, %c256_28], %34 {strides = array<i32>} : memref<2x1024xf32, #tpu.memory_space<vmem>>, vector<1x256xf32>,
    %c0_29 = arith.constant 0 : index
    %c512 = arith.constant 512 : index
    %36 = vector.load %arg7[%c0_29, %c512] : memref<128x1024xbf16, #tpu.memory_space<vmem>>, vector<128x256xbf16>
    %cst_30 = arith.constant dense<0.000000e+00> : vector<32x256xf32>
    %37 = tpu.matmul %21, %36, %cst_30 {dimension_numbers = #tpu.dot_dimension_numbers<[1], [0], [0], [1], [0, 0, 1, 1], [], []>} : vector<32x128xbf16>, vector<128x256xbf16>, vector<32x256xf32> -> vector<32x256xf32>
    %cst_31 = arith.constant dense<0xFF800000> : vector<256xf32>
    %38 = vector.multi_reduction <maximumf>, %37, %cst_31 [0] : vector<32x256xf32> to vector<256xf32>
    %39 = vector.shape_cast %38 : vector<256xf32> to vector<1x256xf32>
    %c0_32 = arith.constant 0 : index
    %c512_33 = arith.constant 512 : index
    %40 = vector.load %arg16[%c0_32, %c512_33] : memref<2x1024xf32, #tpu.memory_space<vmem>>, vector<1x256xf32>
    %41 = arith.maximumf %40, %39 : vector<1x256xf32>
    %c0_34 = arith.constant 0 : index
    %c512_35 = arith.constant 512 : index
    %42 = vector.load %arg16[%c0_34, %c512_35] : memref<2x1024xf32, #tpu.memory_space<vmem>>, vector<1x256xf32>
    tpu.vector_store %arg16[%c0_34, %c512_35], %41 {strides = array<i32>} : memref<2x1024xf32, #tpu.memory_space<vmem>>, vector<1x256xf32>,
    %c0_36 = arith.constant 0 : index
    %c768 = arith.constant 768 : index
    %43 = vector.load %arg7[%c0_36, %c768] : memref<128x1024xbf16, #tpu.memory_space<vmem>>, vector<128x256xbf16>
    %cst_37 = arith.constant dense<0.000000e+00> : vector<32x256xf32>
    %44 = tpu.matmul %21, %43, %cst_37 {dimension_numbers = #tpu.dot_dimension_numbers<[1], [0], [0], [1], [0, 0, 1, 1], [], []>} : vector<32x128xbf16>, vector<128x256xbf16>, vector<32x256xf32> -> vector<32x256xf32>
    %cst_38 = arith.constant dense<0xFF800000> : vector<256xf32>
    %45 = vector.multi_reduction <maximumf>, %44, %cst_38 [0] : vector<32x256xf32> to vector<256xf32>
    %46 = vector.shape_cast %45 : vector<256xf32> to vector<1x256xf32>
    %c0_39 = arith.constant 0 : index
    %c768_40 = arith.constant 768 : index
    %47 = vector.load %arg16[%c0_39, %c768_40] : memref<2x1024xf32, #tpu.memory_space<vmem>>, vector<1x256xf32>
    %48 = arith.maximumf %47, %46 : vector<1x256xf32>
    %c0_41 = arith.constant 0 : index
    %c768_42 = arith.constant 768 : index
    %49 = vector.load %arg16[%c0_41, %c768_42] : memref<2x1024xf32, #tpu.memory_space<vmem>>, vector<1x256xf32>
    tpu.vector_store %arg16[%c0_41, %c768_42], %48 {strides = array<i32>} : memref<2x1024xf32, #tpu.memory_space<vmem>>, vector<1x256xf32>,
    %c1 = arith.constant 1 : index
    %c0_43 = arith.constant 0 : index
    %c0_44 = arith.constant 0 : index
    %50 = vector.load %arg2[%c1, %c0_43, %c0_44] : memref<2x16x32xf32, #tpu.memory_space<vmem>>, vector<1x16x32xf32>
    %51 = vector.shape_cast %50 : vector<1x16x32xf32> to vector<16x32xf32>
    %52 = arith.truncf %51 : vector<16x32xf32> to vector<16x32xbf16>
    %c0_45 = arith.constant 0 : index
    %c0_46 = arith.constant 0 : index
    %53 = vector.load %arg3[%c0_45, %c0_46] : memref<16x128xbf16, #tpu.memory_space<vmem>>, vector<16x128xbf16>
    %cst_47 = arith.constant dense<0.000000e+00> : vector<32x128xf32>
    %54 = tpu.matmul %52, %53, %cst_47 {dimension_numbers = #tpu.dot_dimension_numbers<[0], [0], [1], [1], [0, 1, 1, 1], [], []>} : vector<16x32xbf16>, vector<16x128xbf16>, vector<32x128xf32> -> vector<32x128xf32>
    %c0_48 = arith.constant 0 : index
    %c0_49 = arith.constant 0 : index
    %55 = vector.load %arg4[%c0_48, %c0_49] : memref<1x128xf32, #tpu.memory_space<vmem>>, vector<1x128xf32>
    %56 = vector.broadcast %55 : vector<1x128xf32> to vector<32x128xf32>
    %57 = arith.addf %54, %56 : vector<32x128xf32>
    %cst_50 = arith.constant 0.000000e+00 : f32
    %58 = vector.broadcast %cst_50 : f32 to vector<32x128xf32>
    %59 = arith.maximumf %57, %58 : vector<32x128xf32>
    %60 = arith.truncf %59 : vector<32x128xf32> to vector<32x128xbf16>
    %c0_51 = arith.constant 0 : index
    %c0_52 = arith.constant 0 : index
    %61 = vector.load %arg5[%c0_51, %c0_52] : memref<128x128xbf16, #tpu.memory_space<vmem>>, vector<128x128xbf16>
    %cst_53 = arith.constant dense<0.000000e+00> : vector<32x128xf32>
    %62 = tpu.matmul %60, %61, %cst_53 {dimension_numbers = #tpu.dot_dimension_numbers<[1], [0], [0], [1], [0, 0, 1, 1], [], []>} : vector<32x128xbf16>, vector<128x128xbf16>, vector<32x128xf32> -> vector<32x128xf32>
    %c0_54 = arith.constant 0 : index
    %c0_55 = arith.constant 0 : index
    %63 = vector.load %arg6[%c0_54, %c0_55] : memref<1x128xf32, #tpu.memory_space<vmem>>, vector<1x128xf32>
    %64 = vector.broadcast %63 : vector<1x128xf32> to vector<32x128xf32>
    %65 = arith.addf %62, %64 : vector<32x128xf32>
    %cst_56 = arith.constant 0.000000e+00 : f32
    %66 = vector.broadcast %cst_56 : f32 to vector<32x128xf32>
    %67 = arith.maximumf %65, %66 : vector<32x128xf32>
    %68 = arith.truncf %67 : vector<32x128xf32> to vector<32x128xbf16>
    %c0_57 = arith.constant 0 : index
    %c0_58 = arith.constant 0 : index
    %69 = vector.load %arg7[%c0_57, %c0_58] : memref<128x1024xbf16, #tpu.memory_space<vmem>>, vector<128x256xbf16>
    %cst_59 = arith.constant dense<0.000000e+00> : vector<32x256xf32>
    %70 = tpu.matmul %68, %69, %cst_59 {dimension_numbers = #tpu.dot_dimension_numbers<[1], [0], [0], [1], [0, 0, 1, 1], [], []>} : vector<32x128xbf16>, vector<128x256xbf16>, vector<32x256xf32> -> vector<32x256xf32>
    %cst_60 = arith.constant dense<0xFF800000> : vector<256xf32>
    %71 = vector.multi_reduction <maximumf>, %70, %cst_60 [0] : vector<32x256xf32> to vector<256xf32>
    %72 = vector.shape_cast %71 : vector<256xf32> to vector<1x256xf32>
    %c1_61 = arith.constant 1 : index
    %c0_62 = arith.constant 0 : index
    %73 = vector.load %arg16[%c1_61, %c0_62] : memref<2x1024xf32, #tpu.memory_space<vmem>>, vector<1x256xf32>
    %74 = arith.maximumf %73, %72 : vector<1x256xf32>
    %c1_63 = arith.constant 1 : index
    %c0_64 = arith.constant 0 : index
    %75 = vector.load %arg16[%c1_63, %c0_64] : memref<2x1024xf32, #tpu.memory_space<vmem>>, vector<1x256xf32>
    tpu.vector_store %arg16[%c1_63, %c0_64], %74 {strides = array<i32>} : memref<2x1024xf32, #tpu.memory_space<vmem>>, vector<1x256xf32>,
    %c0_65 = arith.constant 0 : index
    %c256_66 = arith.constant 256 : index
    %76 = vector.load %arg7[%c0_65, %c256_66] : memref<128x1024xbf16, #tpu.memory_space<vmem>>, vector<128x256xbf16>
    %cst_67 = arith.constant dense<0.000000e+00> : vector<32x256xf32>
    %77 = tpu.matmul %68, %76, %cst_67 {dimension_numbers = #tpu.dot_dimension_numbers<[1], [0], [0], [1], [0, 0, 1, 1], [], []>} : vector<32x128xbf16>, vector<128x256xbf16>, vector<32x256xf32> -> vector<32x256xf32>
    %cst_68 = arith.constant dense<0xFF800000> : vector<256xf32>
    %78 = vector.multi_reduction <maximumf>, %77, %cst_68 [0] : vector<32x256xf32> to vector<256xf32>
    %79 = vector.shape_cast %78 : vector<256xf32> to vector<1x256xf32>
    %c1_69 = arith.constant 1 : index
    %c256_70 = arith.constant 256 : index
    %80 = vector.load %arg16[%c1_69, %c256_70] : memref<2x1024xf32, #tpu.memory_space<vmem>>, vector<1x256xf32>
    %81 = arith.maximumf %80, %79 : vector<1x256xf32>
    %c1_71 = arith.constant 1 : index
    %c256_72 = arith.constant 256 : index
    %82 = vector.load %arg16[%c1_71, %c256_72] : memref<2x1024xf32, #tpu.memory_space<vmem>>, vector<1x256xf32>
    tpu.vector_store %arg16[%c1_71, %c256_72], %81 {strides = array<i32>} : memref<2x1024xf32, #tpu.memory_space<vmem>>, vector<1x256xf32>,
    %c0_73 = arith.constant 0 : index
    %c512_74 = arith.constant 512 : index
    %83 = vector.load %arg7[%c0_73, %c512_74] : memref<128x1024xbf16, #tpu.memory_space<vmem>>, vector<128x256xbf16>
    %cst_75 = arith.constant dense<0.000000e+00> : vector<32x256xf32>
    %84 = tpu.matmul %68, %83, %cst_75 {dimension_numbers = #tpu.dot_dimension_numbers<[1], [0], [0], [1], [0, 0, 1, 1], [], []>} : vector<32x128xbf16>, vector<128x256xbf16>, vector<32x256xf32> -> vector<32x256xf32>
    %cst_76 = arith.constant dense<0xFF800000> : vector<256xf32>
    %85 = vector.multi_reduction <maximumf>, %84, %cst_76 [0] : vector<32x256xf32> to vector<256xf32>
    %86 = vector.shape_cast %85 : vector<256xf32> to vector<1x256xf32>
    %c1_77 = arith.constant 1 : index
    %c512_78 = arith.constant 512 : index
    %87 = vector.load %arg16[%c1_77, %c512_78] : memref<2x1024xf32, #tpu.memory_space<vmem>>, vector<1x256xf32>
    %88 = arith.maximumf %87, %86 : vector<1x256xf32>
    %c1_79 = arith.constant 1 : index
    %c512_80 = arith.constant 512 : index
    %89 = vector.load %arg16[%c1_79, %c512_80] : memref<2x1024xf32, #tpu.memory_space<vmem>>, vector<1x256xf32>
    tpu.vector_store %arg16[%c1_79, %c512_80], %88 {strides = array<i32>} : memref<2x1024xf32, #tpu.memory_space<vmem>>, vector<1x256xf32>,
    %c0_81 = arith.constant 0 : index
    %c768_82 = arith.constant 768 : index
    %90 = vector.load %arg7[%c0_81, %c768_82] : memref<128x1024xbf16, #tpu.memory_space<vmem>>, vector<128x256xbf16>
    %cst_83 = arith.constant dense<0.000000e+00> : vector<32x256xf32>
    %91 = tpu.matmul %68, %90, %cst_83 {dimension_numbers = #tpu.dot_dimension_numbers<[1], [0], [0], [1], [0, 0, 1, 1], [], []>} : vector<32x128xbf16>, vector<128x256xbf16>, vector<32x256xf32> -> vector<32x256xf32>
    %cst_84 = arith.constant dense<0xFF800000> : vector<256xf32>
    %92 = vector.multi_reduction <maximumf>, %91, %cst_84 [0] : vector<32x256xf32> to vector<256xf32>
    %93 = vector.shape_cast %92 : vector<256xf32> to vector<1x256xf32>
    %c1_85 = arith.constant 1 : index
    %c768_86 = arith.constant 768 : index
    %94 = vector.load %arg16[%c1_85, %c768_86] : memref<2x1024xf32, #tpu.memory_space<vmem>>, vector<1x256xf32>
    %95 = arith.maximumf %94, %93 : vector<1x256xf32>
    %c1_87 = arith.constant 1 : index
    %c768_88 = arith.constant 768 : index
    %96 = vector.load %arg16[%c1_87, %c768_88] : memref<2x1024xf32, #tpu.memory_space<vmem>>, vector<1x256xf32>
    tpu.vector_store %arg16[%c1_87, %c768_88], %95 {strides = array<i32>} : memref<2x1024xf32, #tpu.memory_space<vmem>>, vector<1x256xf32>,
    %c0_i32_89 = arith.constant 0 : i32
    %97 = arith.cmpi eq, %arg1, %c0_i32_89 : i32
    %98 = arith.extui %97 : i1 to i32
    %c0_i32_90 = arith.constant 0 : i32
    %99 = arith.cmpi ne, %98, %c0_i32_90 : i32
    scf.if %99 {
      %c0_91 = arith.constant 0 : index
      %c0_92 = arith.constant 0 : index
      %100 = vector.load %arg16[%c0_91, %c0_92] : memref<2x1024xf32, #tpu.memory_space<vmem>>, vector<2x1024xf32>
      %c0_93 = arith.constant 0 : index
      %c0_94 = arith.constant 0 : index
      %101 = vector.load %arg8[%c0_93, %c0_94] : memref<1x1024xf32, #tpu.memory_space<vmem>>, vector<1x1024xf32>
      %102 = vector.broadcast %101 : vector<1x1024xf32> to vector<2x1024xf32>
      %103 = arith.addf %100, %102 : vector<2x1024xf32>
      %cst_95 = arith.constant 0.000000e+00 : f32
      %104 = vector.broadcast %cst_95 : f32 to vector<2x1024xf32>
      %105 = arith.maximumf %103, %104 : vector<2x1024xf32>
      %106 = arith.truncf %105 : vector<2x1024xf32> to vector<2x1024xbf16>
      %c0_96 = arith.constant 0 : index
      %c0_97 = arith.constant 0 : index
      %107 = vector.load %arg9[%c0_96, %c0_97] : memref<1024x512xbf16, #tpu.memory_space<vmem>>, vector<1024x512xbf16>
      %cst_98 = arith.constant dense<0.000000e+00> : vector<2x512xf32>
      %108 = tpu.matmul %106, %107, %cst_98 {dimension_numbers = #tpu.dot_dimension_numbers<[1], [0], [0], [1], [0, 0, 1, 1], [], []>} : vector<2x1024xbf16>, vector<1024x512xbf16>, vector<2x512xf32> -> vector<2x512xf32>
      %c0_99 = arith.constant 0 : index
      %c0_100 = arith.constant 0 : index
      %109 = vector.load %arg10[%c0_99, %c0_100] : memref<1x512xf32, #tpu.memory_space<vmem>>, vector<1x512xf32>
      %110 = vector.broadcast %109 : vector<1x512xf32> to vector<2x512xf32>
      %111 = arith.addf %108, %110 : vector<2x512xf32>
      %cst_101 = arith.constant 0.000000e+00 : f32
      %112 = vector.broadcast %cst_101 : f32 to vector<2x512xf32>
      %113 = arith.maximumf %111, %112 : vector<2x512xf32>
      %114 = arith.truncf %113 : vector<2x512xf32> to vector<2x512xbf16>
      %c0_102 = arith.constant 0 : index
      %c0_103 = arith.constant 0 : index
      %115 = vector.load %arg11[%c0_102, %c0_103] : memref<512x256xbf16, #tpu.memory_space<vmem>>, vector<512x256xbf16>
      %cst_104 = arith.constant dense<0.000000e+00> : vector<2x256xf32>
      %116 = tpu.matmul %114, %115, %cst_104 {dimension_numbers = #tpu.dot_dimension_numbers<[1], [0], [0], [1], [0, 0, 1, 1], [], []>} : vector<2x512xbf16>, vector<512x256xbf16>, vector<2x256xf32> -> vector<2x256xf32>
      %c0_105 = arith.constant 0 : index
      %c0_106 = arith.constant 0 : index
      %117 = vector.load %arg12[%c0_105, %c0_106] : memref<1x256xf32, #tpu.memory_space<vmem>>, vector<1x256xf32>
      %118 = vector.broadcast %117 : vector<1x256xf32> to vector<2x256xf32>
      %119 = arith.addf %116, %118 : vector<2x256xf32>
      %cst_107 = arith.constant 0.000000e+00 : f32
      %120 = vector.broadcast %cst_107 : f32 to vector<2x256xf32>
      %121 = arith.maximumf %119, %120 : vector<2x256xf32>
      %122 = arith.truncf %121 : vector<2x256xf32> to vector<2x256xbf16>
      %c0_108 = arith.constant 0 : index
      %c0_109 = arith.constant 0 : index
      %123 = vector.load %arg13[%c0_108, %c0_109] : memref<256x256xbf16, #tpu.memory_space<vmem>>, vector<256x256xbf16>
      %cst_110 = arith.constant dense<0.000000e+00> : vector<2x256xf32>
      %124 = tpu.matmul %122, %123, %cst_110 {dimension_numbers = #tpu.dot_dimension_numbers<[1], [0], [0], [1], [0, 0, 1, 1], [], []>} : vector<2x256xbf16>, vector<256x256xbf16>, vector<2x256xf32> -> vector<2x256xf32>
      %c0_111 = arith.constant 0 : index
      %c0_112 = arith.constant 0 : index
      %125 = vector.load %arg14[%c0_111, %c0_112] : memref<1x256xf32, #tpu.memory_space<vmem>>, vector<1x256xf32>
      %126 = vector.broadcast %125 : vector<1x256xf32> to vector<2x256xf32>
      %127 = arith.addf %124, %126 : vector<2x256xf32>
      %c0_113 = arith.constant 0 : index
      %c0_114 = arith.constant 0 : index
      %128 = vector.load %arg15[%c0_113, %c0_114] : memref<2x256xf32, #tpu.memory_space<vmem>>, vector<2x256xf32>
      tpu.vector_store %arg15[%c0_113, %c0_114], %127 {strides = array<i32>} : memref<2x256xf32, #tpu.memory_space<vmem>>, vector<2x256xf32>,
    } else {
    }
    return
  }
  func.func @transform_0(%arg0: i32, %arg1: i32) -> (i32, i32, i32) {
    %c0_i32 = arith.constant 0 : i32
    %c0_i32_0 = arith.constant 0 : i32
    return %arg0, %c0_i32, %arg1 : i32, i32, i32
  }
  func.func @transform_1(%arg0: i32, %arg1: i32) -> (i32, i32) {
    %c0_i32 = arith.constant 0 : i32
    %c0_i32_0 = arith.constant 0 : i32
    %c0_i32_1 = arith.constant 0 : i32
    return %c0_i32, %c0_i32_0 : i32, i32
  }
  func.func @transform_2(%arg0: i32, %arg1: i32) -> (i32, i32) {
    %c0_i32 = arith.constant 0 : i32
    %c0_i32_0 = arith.constant 0 : i32
    %c0_i32_1 = arith.constant 0 : i32
    return %c0_i32, %c0_i32_0 : i32, i32
  }
  func.func @transform_3(%arg0: i32, %arg1: i32) -> (i32, i32) {
    %c0_i32 = arith.constant 0 : i32
    %c0_i32_0 = arith.constant 0 : i32
    %c0_i32_1 = arith.constant 0 : i32
    return %c0_i32, %c0_i32_0 : i32, i32
  }
  func.func @transform_4(%arg0: i32, %arg1: i32) -> (i32, i32) {
    %c0_i32 = arith.constant 0 : i32
    %c0_i32_0 = arith.constant 0 : i32
    %c0_i32_1 = arith.constant 0 : i32
    return %c0_i32, %c0_i32_0 : i32, i32
  }
  func.func @transform_5(%arg0: i32, %arg1: i32) -> (i32, i32) {
    %c0_i32 = arith.constant 0 : i32
    %c0_i32_0 = arith.constant 0 : i32
    %c0_i32_1 = arith.constant 0 : i32
    return %c0_i32, %c0_i32_0 : i32, i32
  }
  func.func @transform_6(%arg0: i32, %arg1: i32) -> (i32, i32) {
    %c0_i32 = arith.constant 0 : i32
    %c0_i32_0 = arith.constant 0 : i32
    %c0_i32_1 = arith.constant 0 : i32
    return %c0_i32, %c0_i32_0 : i32, i32
  }
  func.func @transform_7(%arg0: i32, %arg1: i32) -> (i32, i32) {
    %c0_i32 = arith.constant 0 : i32
    %c0_i32_0 = arith.constant 0 : i32
    %c0_i32_1 = arith.constant 0 : i32
    return %c0_i32, %c0_i32_0 : i32, i32
  }
  func.func @transform_8(%arg0: i32, %arg1: i32) -> (i32, i32) {
    %c0_i32 = arith.constant 0 : i32
    %c0_i32_0 = arith.constant 0 : i32
    %c0_i32_1 = arith.constant 0 : i32
    return %c0_i32, %c0_i32_0 : i32, i32
  }
  func.func @transform_9(%arg0: i32, %arg1: i32) -> (i32, i32) {
    %c0_i32 = arith.constant 0 : i32
    %c0_i32_0 = arith.constant 0 : i32
    %c0_i32_1 = arith.constant 0 : i32
    return %c0_i32, %c0_i32_0 : i32, i32
  }
  func.func @transform_10(%arg0: i32, %arg1: i32) -> (i32, i32) {
    %c0_i32 = arith.constant 0 : i32
    %c0_i32_0 = arith.constant 0 : i32
    %c0_i32_1 = arith.constant 0 : i32
    return %c0_i32, %c0_i32_0 : i32, i32
  }
  func.func @transform_11(%arg0: i32, %arg1: i32) -> (i32, i32) {
    %c0_i32 = arith.constant 0 : i32
    %c0_i32_0 = arith.constant 0 : i32
    %c0_i32_1 = arith.constant 0 : i32
    return %c0_i32, %c0_i32_0 : i32, i32
  }
  func.func @transform_12(%arg0: i32, %arg1: i32) -> (i32, i32) {
    %c0_i32 = arith.constant 0 : i32
    %c0_i32_0 = arith.constant 0 : i32
    %c0_i32_1 = arith.constant 0 : i32
    return %c0_i32, %c0_i32_0 : i32, i32
  }
  func.func @transform_13(%arg0: i32, %arg1: i32) -> (i32, i32) {
    %c0_i32 = arith.constant 0 : i32
    %c0_i32_0 = arith.constant 0 : i32
    return %arg0, %c0_i32 : i32, i32
  }
}

</mosaic_0001>

<llo_original>
// kernel: stnkd_forward.1
$region0: #{stnkd_forward.1}
  #allocation0 [shape = 'u32[]', space=smem, size = 0x4, offset = 0x4, fixed_abs, tag = 'smem constant byte address 0x4 - core index']
  #allocation1 [shape = 'u32[144,128]{1,0:T(1,128)}', space=vmem, size = 0x12000, scoped, tag = 'internal scratch']
  #allocation2 [shape = 'f32[2,1024]{1,0:T(2,128)}', space=vmem, size = 0x2000, scoped, tag = 'scratch operand']
  %s0 = inlined_call_operand.vmem [shape: f32[2,16,32], index: 0, kind: input, shape index: {}]
  %s1 = inlined_call_operand.vmem [shape: bf16[16,128], index: 1, kind: input, shape index: {}]
  %s2 = inlined_call_operand.vmem [shape: f32[1,128], index: 2, kind: input, shape index: {}]
  %s3 = inlined_call_operand.vmem [shape: bf16[128,128], index: 3, kind: input, shape index: {}]
  %s4 = inlined_call_operand.vmem [shape: f32[1,128], index: 4, kind: input, shape index: {}]
  %s5 = inlined_call_operand.vmem [shape: bf16[128,1024], index: 5, kind: input, shape index: {}]
  %s6 = inlined_call_operand.vmem [shape: f32[1,1024], index: 6, kind: input, shape index: {}]
  %s7 = inlined_call_operand.vmem [shape: bf16[1024,512], index: 7, kind: input, shape index: {}]
  %s8 = inlined_call_operand.vmem [shape: f32[1,512], index: 8, kind: input, shape index: {}]
  %s9 = inlined_call_operand.vmem [shape: bf16[512,256], index: 9, kind: input, shape index: {}]
  %s10 = inlined_call_operand.vmem [shape: f32[1,256], index: 10, kind: input, shape index: {}]
  %s11 = inlined_call_operand.vmem [shape: bf16[256,256], index: 11, kind: input, shape index: {}]
  %s12 = inlined_call_operand.vmem [shape: f32[1,256], index: 12, kind: input, shape index: {}]
  %s13 = inlined_call_operand.vmem [shape: f32[2,256], index: 13, kind: output, shape index: {}]
  %s14 = sld [smem:[#allocation0]]
  $region70: #{stnkd_forward.1} parent=0
    _
  %s16 = ssub.s32 1, %s14
  %s17 = scalar_select 0, %s16, %s14
  // Predicated region
  $region2: #{stnkd_forward.1} parent=0 // pred_check
    _
  $region3: #{stnkd_forward.1} parent=0 // pred_check_branch
    %19 = sbr.rel (0) target = $region5
  $region4: #{stnkd_forward.1} parent=0 // pred_region
    _
  $region5: #{stnkd_forward.1} parent=0 // pred_fallthru
    _
  // Predicated region
  $region6: #{stnkd_forward.1} parent=0 // pred_check
    _
  $region7: #{stnkd_forward.1} parent=0 // pred_check_branch
    %21 = sbr.rel (0) target = $region9
  $region8: #{stnkd_forward.1} parent=0 // pred_region
    _
  $region9: #{stnkd_forward.1} parent=0 // pred_fallthru
    _
  // Predicated region
  $region10: #{stnkd_forward.1} parent=0 // pred_check
    _
  $region11: #{stnkd_forward.1} parent=0 // pred_check_branch
    %23 = sbr.rel (0) target = $region13
  $region12: #{stnkd_forward.1} parent=0 // pred_region
    _
  $region13: #{stnkd_forward.1} parent=0 // pred_fallthru
    _
  // Predicated region
  $region14: #{stnkd_forward.1} parent=0 // pred_check
    _
  $region15: #{stnkd_forward.1} parent=0 // pred_check_branch
    %25 = sbr.rel (0) target = $region17
  $region16: #{stnkd_forward.1} parent=0 // pred_region
    _
  $region17: #{stnkd_forward.1} parent=0 // pred_fallthru
    _
  // Predicated region
  $region18: #{stnkd_forward.1} parent=0 // pred_check
    _
  $region19: #{stnkd_forward.1} parent=0 // pred_check_branch
    %27 = sbr.rel (0) target = $region21
  $region20: #{stnkd_forward.1} parent=0 // pred_region
    _
  $region21: #{stnkd_forward.1} parent=0 // pred_fallthru
    _
  // Predicated region
  $region22: #{stnkd_forward.1} parent=0 // pred_check
    _
  $region23: #{stnkd_forward.1} parent=0 // pred_check_branch
    %29 = sbr.rel (0) target = $region25
  $region24: #{stnkd_forward.1} parent=0 // pred_region
    _
  $region25: #{stnkd_forward.1} parent=0 // pred_fallthru
    _
  // Predicated region
  $region26: #{stnkd_forward.1} parent=0 // pred_check
    _
  $region27: #{stnkd_forward.1} parent=0 // pred_check_branch
    %31 = sbr.rel (0) target = $region29
  $region28: #{stnkd_forward.1} parent=0 // pred_region
    _
  $region29: #{stnkd_forward.1} parent=0 // pred_fallthru
    _
  // Predicated region
  $region30: #{stnkd_forward.1} parent=0 // pred_check
    _
  $region31: #{stnkd_forward.1} parent=0 // pred_check_branch
    %33 = sbr.rel (0) target = $region33
  $region32: #{stnkd_forward.1} parent=0 // pred_region
    _
  $region33: #{stnkd_forward.1} parent=0 // pred_fallthru
    _
  // Predicated region
  $region34: #{stnkd_forward.1} parent=0 // pred_check
    _
  $region35: #{stnkd_forward.1} parent=0 // pred_check_branch
    %35 = sbr.rel (0) target = $region37
  $region36: #{stnkd_forward.1} parent=0 // pred_region
    _
  $region37: #{stnkd_forward.1} parent=0 // pred_fallthru
    _
  // Predicated region
  $region38: #{stnkd_forward.1} parent=0 // pred_check
    _
  $region39: #{stnkd_forward.1} parent=0 // pred_check_branch
    %37 = sbr.rel (0) target = $region41
  $region40: #{stnkd_forward.1} parent=0 // pred_region
    _
  $region41: #{stnkd_forward.1} parent=0 // pred_fallthru
    _
  // Predicated region
  $region42: #{stnkd_forward.1} parent=0 // pred_check
    _
  $region43: #{stnkd_forward.1} parent=0 // pred_check_branch
    %39 = sbr.rel (0) target = $region45
  $region44: #{stnkd_forward.1} parent=0 // pred_region
    _
  $region45: #{stnkd_forward.1} parent=0 // pred_fallthru
    _
  // Predicated region
  $region46: #{stnkd_forward.1} parent=0 // pred_check
    _
  $region47: #{stnkd_forward.1} parent=0 // pred_check_branch
    %41 = sbr.rel (0) target = $region49
  $region48: #{stnkd_forward.1} parent=0 // pred_region
    _
  $region49: #{stnkd_forward.1} parent=0 // pred_fallthru
    _
  // Predicated region
  $region50: #{stnkd_forward.1} parent=0 // pred_check
    _
  $region51: #{stnkd_forward.1} parent=0 // pred_check_branch
    %43 = sbr.rel (0) target = $region53
  $region52: #{stnkd_forward.1} parent=0 // pred_region
    _
  $region53: #{stnkd_forward.1} parent=0 // pred_fallthru
    _
  %p45 = scmp.eq.s32.totalorder 0, 0
  // Predicated region
  $region54: #{stnkd_forward.1} parent=0 // pred_check
    %p46 = pneg %p45
  $region55: #{stnkd_forward.1} parent=0 // pred_check_branch
    %48 = sbr.rel (%p46) target = $region57
  $region56: #{stnkd_forward.1} parent=0 // pred_region
    %49 = vst [vmem:[#allocation2] sm:$0xff] -inf
    %50 = vst [vmem:[#allocation2 + $0x8] sm:$0xff] -inf
  $region57: #{stnkd_forward.1} parent=0 // pred_fallthru
    _
  %v51 = vld [vmem:[%s0] sm:$0xff]
  %v52 = vld [vmem:[%s0 + $0x8] sm:$0xff]
  %v53 = vpack.c.bf16 %v52, %v51
  %v54 = vld [vmem:[%s1] sm:$0xf]
  %v55 = vld [vmem:[%s1 + $0x4] sm:$0xf]
  %v56 = vld [vmem:[%s2] sm:$0x1]
  %v58 = vlaneseq
  %v59 = vshrl.u32 %v58, 7
  %v60 = vsub.s32 0, %v59
  %v61 = vrot.slane %v56, %v60
  %63 = vxpose.xlu0.c.b16.start [1/8] %v53, 128
  %64 = vxpose.xlu0.c.b16.cont [2/8] 0, 128
  %65 = vxpose.xlu0.c.b16.cont [3/8] 0, 128
  %66 = vxpose.xlu0.c.b16.cont [4/8] 0, 128
  %67 = vxpose.xlu0.c.b16.cont [5/8] 0, 128
  %68 = vxpose.xlu0.c.b16.cont [6/8] 0, 128
  %69 = vxpose.xlu0.c.b16.cont [7/8] 0, 128
  %70 = vxpose.xlu0.c.b16.end [8/8] 0, 128
  %v71 = vpop.trf.xlu0
  %v72 = vpop.trf.xlu0
  %v73 = vpop.trf.xlu0
  %v74 = vpop.trf.xlu0
  %v75 = vpop.trf.xlu0
  %v76 = vpop.trf.xlu0
  %v77 = vpop.trf.xlu0
  %v78 = vpop.trf.xlu0
  %v81 = vunpack.c.l.b16 %v54
  %v82 = vunpack.c.l.b16 %v55
  %v83 = vpack.c.b16 %v82, %v81
  %vm85 = vcmask 130048
  %v87 = vsel %vm85, %v71, 0
  %v90 = vsel %vm85, %v72, 0
  %92 = vmatprep.subr.bf16.mxu0 0
  %93 = vmatpush1.bf16.msra.mxu0 %v83
  %94 = vmatprep.subr.bf16.mxu0 0
  %95 = vmatpush1.bf16.msra.mxu0 0
  %96 = vmatprep.subr.bf16.mxu0 0
  %97 = vmatpush1.bf16.msra.mxu0 0
  %98 = vmatprep.subr.bf16.mxu0 0
  %99 = vmatpush1.bf16.msra.mxu0 0
  %100 = vmatprep.subr.bf16.mxu0 0
  %101 = vmatpush1.bf16.msra.mxu0 0
  %102 = vmatprep.subr.bf16.mxu0 0
  %103 = vmatpush1.bf16.msra.mxu0 0
  %104 = vmatprep.subr.bf16.mxu0 0
  %105 = vmatpush1.bf16.msra.mxu0 0
  %106 = vmatprep.subr.bf16.mxu0 0
  %107 = vmatpush1.bf16.msra.mxu0 0
  %108 = vmatprep.subr.bf16.mxu0 0
  %109 = vmatpush1.bf16.msra.mxu0 0
  %110 = vmatprep.subr.bf16.mxu0 0
  %111 = vmatpush1.bf16.msra.mxu0 0
  %112 = vmatprep.subr.bf16.mxu0 0
  %113 = vmatpush1.bf16.msra.mxu0 0
  %114 = vmatprep.subr.bf16.mxu0 0
  %115 = vmatpush1.bf16.msra.mxu0 0
  %116 = vmatprep.subr.bf16.mxu0 0
  %117 = vmatpush1.bf16.msra.mxu0 0
  %118 = vmatprep.subr.bf16.mxu0 0
  %119 = vmatpush1.bf16.msra.mxu0 0
  %120 = vmatprep.subr.bf16.mxu0 0
  %121 = vmatpush1.bf16.msra.mxu0 0
  %122 = vmatprep.subr.bf16.mxu0 0
  %123 = vmatpush1.bf16.msra.mxu0 0
  %124 = vmatprep.mubr.bf16.mxu0 0
  %125 = vmatmul.mubr.bf16.gmra.mrb[0].mxu0 %v87
  %v126 = vpop.f32.mrb[0].mxu0
  %v127 = vadd.f32 %v61, %v126
  %v128 = vpop.f32.mrb[0].mxu0
  %v129 = vpop.f32.mrb[0].mxu0
  %v130 = vadd.f32 %v61, %v129
  %v131 = vpop.f32.mrb[0].mxu0
  %132 = vmatprep.mubr.bf16.mxu0 0
  %133 = vmatmul.mubr.bf16.gmra.mrb[0].mxu0 %v90
  %v134 = vpop.f32.mrb[0].mxu0
  %v135 = vadd.f32 %v61, %v134
  %v136 = vpop.f32.mrb[0].mxu0
  %v137 = vpop.f32.mrb[0].mxu0
  %v138 = vadd.f32 %v61, %v137
  %v139 = vpop.f32.mrb[0].mxu0
  %140 = vdwg.mxu0
  %v141 = vmax.f32 %v127, 0.0
  %v142 = vmax.f32 %v130, 0.0
  %v143 = vmax.f32 %v135, 0.0
  %v144 = vmax.f32 %v138, 0.0
  %v145 = vpack.c.bf16 %v142, %v141
  %v146 = vpack.c.bf16 %v144, %v143
  %v147 = vld [vmem:[%s3] sm:$0xf]
  %v148 = vld [vmem:[%s3 + $0x4] sm:$0xf]
  %v149 = vld [vmem:[%s3 + $0x8] sm:$0xf]
  %v150 = vld [vmem:[%s3 + $0xc] sm:$0xf]
  %v151 = vld [vmem:[%s3 + $0x10] sm:$0xf]
  %v152 = vld [vmem:[%s3 + $0x14] sm:$0xf]
  %v153 = vld [vmem:[%s3 + $0x18] sm:$0xf]
  %v154 = vld [vmem:[%s3 + $0x1c] sm:$0xf]
  %v155 = vld [vmem:[%s3 + $0x20] sm:$0xf]
  %v156 = vld [vmem:[%s3 + $0x24] sm:$0xf]
  %v157 = vld [vmem:[%s3 + $0x28] sm:$0xf]
  %v158 = vld [vmem:[%s3 + $0x2c] sm:$0xf]
  %v159 = vld [vmem:[%s3 + $0x30] sm:$0xf]
  %v160 = vld [vmem:[%s3 + $0x34] sm:$0xf]
  %v161 = vld [vmem:[%s3 + $0x38] sm:$0xf]
  %v162 = vld [vmem:[%s3 + $0x3c] sm:$0xf]
  %v163 = vld [vmem:[%s4] sm:$0x1]
  %v165 = vlaneseq
  %v166 = vshrl.u32 %v165, 7
  %v167 = vsub.s32 0, %v166
  %v168 = vrot.slane %v163, %v167
  %v186 = vunpack.c.l.b16 %v147
  %v187 = vunpack.c.l.b16 %v148
  %v188 = vunpack.c.l.b16 %v149
  %v189 = vunpack.c.l.b16 %v150
  %v190 = vunpack.c.l.b16 %v151
  %v191 = vunpack.c.l.b16 %v152
  %v192 = vunpack.c.l.b16 %v153
  %v193 = vunpack.c.l.b16 %v154
  %v194 = vunpack.c.l.b16 %v155
  %v195 = vunpack.c.l.b16 %v156
  %v196 = vunpack.c.l.b16 %v157
  %v197 = vunpack.c.l.b16 %v158
  %v198 = vunpack.c.l.b16 %v159
  %v199 = vunpack.c.l.b16 %v160
  %v200 = vunpack.c.l.b16 %v161
  %v201 = vunpack.c.l.b16 %v162
  %v202 = vpack.c.b16 %v187, %v186
  %v203 = vpack.c.b16 %v189, %v188
  %v204 = vpack.c.b16 %v191, %v190
  %v205 = vpack.c.b16 %v193, %v192
  %v206 = vpack.c.b16 %v195, %v194
  %v207 = vpack.c.b16 %v197, %v196
  %v208 = vpack.c.b16 %v199, %v198
  %v209 = vpack.c.b16 %v201, %v200
  %218 = vmatprep.subr.bf16.mxu0 0
  %219 = vmatpush1.bf16.msra.mxu0 %v202
  %220 = vmatprep.subr.bf16.mxu0 0
  %221 = vmatpush1.bf16.msra.mxu0 %v203
  %222 = vmatprep.subr.bf16.mxu0 0
  %223 = vmatpush1.bf16.msra.mxu0 %v204
  %224 = vmatprep.subr.bf16.mxu0 0
  %225 = vmatpush1.bf16.msra.mxu0 %v205
  %226 = vmatprep.subr.bf16.mxu0 0
  %227 = vmatpush1.bf16.msra.mxu0 %v206
  %228 = vmatprep.subr.bf16.mxu0 0
  %229 = vmatpush1.bf16.msra.mxu0 %v207
  %230 = vmatprep.subr.bf16.mxu0 0
  %231 = vmatpush1.bf16.msra.mxu0 %v208
  %232 = vmatprep.subr.bf16.mxu0 0
  %233 = vmatpush1.bf16.msra.mxu0 %v209
  %234 = vmatprep.subr.bf16.mxu0 0
  %235 = vmatpush1.bf16.msra.mxu0 0
  %236 = vmatprep.subr.bf16.mxu0 0
  %237 = vmatpush1.bf16.msra.mxu0 0
  %238 = vmatprep.subr.bf16.mxu0 0
  %239 = vmatpush1.bf16.msra.mxu0 0
  %240 = vmatprep.subr.bf16.mxu0 0
  %241 = vmatpush1.bf16.msra.mxu0 0
  %242 = vmatprep.subr.bf16.mxu0 0
  %243 = vmatpush1.bf16.msra.mxu0 0
  %244 = vmatprep.subr.bf16.mxu0 0
  %245 = vmatpush1.bf16.msra.mxu0 0
  %246 = vmatprep.subr.bf16.mxu0 0
  %247 = vmatpush1.bf16.msra.mxu0 0
  %248 = vmatprep.subr.bf16.mxu0 0
  %249 = vmatpush1.bf16.msra.mxu0 0
  %250 = vmatprep.mubr.bf16.mxu0 0
  %251 = vmatmul.mubr.bf16.gmra.mrb[0].mxu0 %v145
  %v252 = vpop.f32.mrb[0].mxu0
  %v253 = vadd.f32 %v168, %v252
  %v254 = vpop.f32.mrb[0].mxu0
  %v255 = vpop.f32.mrb[0].mxu0
  %v256 = vadd.f32 %v168, %v255
  %v257 = vpop.f32.mrb[0].mxu0
  %258 = vmatprep.mubr.bf16.mxu0 0
  %259 = vmatmul.mubr.bf16.gmra.mrb[0].mxu0 %v146
  %v260 = vpop.f32.mrb[0].mxu0
  %v261 = vadd.f32 %v168, %v260
  %v262 = vpop.f32.mrb[0].mxu0
  %v263 = vpop.f32.mrb[0].mxu0
  %v264 = vadd.f32 %v168, %v263
  %v265 = vpop.f32.mrb[0].mxu0
  %266 = vdwg.mxu0
  %v267 = vmax.f32 %v253, 0.0
  %v268 = vmax.f32 %v256, 0.0
  %v269 = vmax.f32 %v261, 0.0
  %v270 = vmax.f32 %v264, 0.0
  %v271 = vpack.c.bf16 %v268, %v267
  %v272 = vpack.c.bf16 %v270, %v269
  %v273 = vld [vmem:[%s5] sm:$0xff]
  %v274 = vld [vmem:[%s5 + $0x20] sm:$0xff]
  %v275 = vld [vmem:[%s5 + $0x40] sm:$0xff]
  %v276 = vld [vmem:[%s5 + $0x60] sm:$0xff]
  %v277 = vld [vmem:[%s5 + $0x80] sm:$0xff]
  %v278 = vld [vmem:[%s5 + $0xa0] sm:$0xff]
  %v279 = vld [vmem:[%s5 + $0xc0] sm:$0xff]
  %v280 = vld [vmem:[%s5 + $0xe0] sm:$0xff]
  %v281 = vld [vmem:[%s5 + $0x100] sm:$0xff]
  %v282 = vld [vmem:[%s5 + $0x120] sm:$0xff]
  %v283 = vld [vmem:[%s5 + $0x140] sm:$0xff]
  %v284 = vld [vmem:[%s5 + $0x160] sm:$0xff]
  %v285 = vld [vmem:[%s5 + $0x180] sm:$0xff]
  %v286 = vld [vmem:[%s5 + $0x1a0] sm:$0xff]
  %v287 = vld [vmem:[%s5 + $0x1c0] sm:$0xff]
  %v288 = vld [vmem:[%s5 + $0x1e0] sm:$0xff]
  %v305 = vunpack.c.l.b16 %v273
  %v306 = vunpack.c.h.b16 %v273
  %v307 = vunpack.c.l.b16 %v274
  %v308 = vunpack.c.h.b16 %v274
  %v309 = vunpack.c.l.b16 %v275
  %v310 = vunpack.c.h.b16 %v275
  %v311 = vunpack.c.l.b16 %v276
  %v312 = vunpack.c.h.b16 %v276
  %v313 = vunpack.c.l.b16 %v277
  %v314 = vunpack.c.h.b16 %v277
  %v315 = vunpack.c.l.b16 %v278
  %v316 = vunpack.c.h.b16 %v278
  %v317 = vunpack.c.l.b16 %v279
  %v318 = vunpack.c.h.b16 %v279
  %v319 = vunpack.c.l.b16 %v280
  %v320 = vunpack.c.h.b16 %v280
  %v321 = vunpack.c.l.b16 %v281
  %v322 = vunpack.c.h.b16 %v281
  %v323 = vunpack.c.l.b16 %v282
  %v324 = vunpack.c.h.b16 %v282
  %v325 = vunpack.c.l.b16 %v283
  %v326 = vunpack.c.h.b16 %v283
  %v327 = vunpack.c.l.b16 %v284
  %v328 = vunpack.c.h.b16 %v284
  %v329 = vunpack.c.l.b16 %v285
  %v330 = vunpack.c.h.b16 %v285
  %v331 = vunpack.c.l.b16 %v286
  %v332 = vunpack.c.h.b16 %v286
  %v333 = vunpack.c.l.b16 %v287
  %v334 = vunpack.c.h.b16 %v287
  %v335 = vunpack.c.l.b16 %v288
  %v336 = vunpack.c.h.b16 %v288
  %v337 = vpack.c.b16 %v307, %v305
  %v338 = vpack.c.b16 %v308, %v306
  %v339 = vpack.c.b16 %v311, %v309
  %v340 = vpack.c.b16 %v312, %v310
  %v341 = vpack.c.b16 %v315, %v313
  %v342 = vpack.c.b16 %v316, %v314
  %v343 = vpack.c.b16 %v319, %v317
  %v344 = vpack.c.b16 %v320, %v318
  %v345 = vpack.c.b16 %v323, %v321
  %v346 = vpack.c.b16 %v324, %v322
  %v347 = vpack.c.b16 %v327, %v325
  %v348 = vpack.c.b16 %v328, %v326
  %v349 = vpack.c.b16 %v331, %v329
  %v350 = vpack.c.b16 %v332, %v330
  %v351 = vpack.c.b16 %v335, %v333
  %v352 = vpack.c.b16 %v336, %v334
  %369 = vmatprep.subr.bf16.mxu0 %v338
  %370 = vmatpush1.bf16.msra.mxu0 %v337
  %371 = vmatprep.subr.bf16.mxu0 %v340
  %372 = vmatpush1.bf16.msra.mxu0 %v339
  %373 = vmatprep.subr.bf16.mxu0 %v342
  %374 = vmatpush1.bf16.msra.mxu0 %v341
  %375 = vmatprep.subr.bf16.mxu0 %v344
  %376 = vmatpush1.bf16.msra.mxu0 %v343
  %377 = vmatprep.subr.bf16.mxu0 %v346
  %378 = vmatpush1.bf16.msra.mxu0 %v345
  %379 = vmatprep.subr.bf16.mxu0 %v348
  %380 = vmatpush1.bf16.msra.mxu0 %v347
  %381 = vmatprep.subr.bf16.mxu0 %v350
  %382 = vmatpush1.bf16.msra.mxu0 %v349
  %383 = vmatprep.subr.bf16.mxu0 %v352
  %384 = vmatpush1.bf16.msra.mxu0 %v351
  %385 = vmatprep.subr.bf16.mxu0 0
  %386 = vmatpush1.bf16.msra.mxu0 0
  %387 = vmatprep.subr.bf16.mxu0 0
  %388 = vmatpush1.bf16.msra.mxu0 0
  %389 = vmatprep.subr.bf16.mxu0 0
  %390 = vmatpush1.bf16.msra.mxu0 0
  %391 = vmatprep.subr.bf16.mxu0 0
  %392 = vmatpush1.bf16.msra.mxu0 0
  %393 = vmatprep.subr.bf16.mxu0 0
  %394 = vmatpush1.bf16.msra.mxu0 0
  %395 = vmatprep.subr.bf16.mxu0 0
  %396 = vmatpush1.bf16.msra.mxu0 0
  %397 = vmatprep.subr.bf16.mxu0 0
  %398 = vmatpush1.bf16.msra.mxu0 0
  %399 = vmatprep.subr.bf16.mxu0 0
  %400 = vmatpush1.bf16.msra.mxu0 0
  %401 = vmatprep.mubr.bf16.mxu0 0
  %402 = vmatmul.mubr.bf16.gmra.mrb[0].mxu0 %v271
  %v403 = vpop.f32.mrb[0].mxu0
  %v404 = vadd.f32 0.0, %v403
  %v405 = vpop.f32.mrb[0].mxu0
  %v406 = vadd.f32 0.0, %v405
  %v407 = vpop.f32.mrb[0].mxu0
  %v408 = vadd.f32 0.0, %v407
  %v409 = vpop.f32.mrb[0].mxu0
  %v410 = vadd.f32 0.0, %v409
  %411 = vmatprep.mubr.bf16.mxu0 0
  %412 = vmatmul.mubr.bf16.gmra.mrb[0].mxu0 %v272
  %v413 = vpop.f32.mrb[0].mxu0
  %v414 = vadd.f32 0.0, %v413
  %v415 = vpop.f32.mrb[0].mxu0
  %v416 = vadd.f32 0.0, %v415
  %v417 = vpop.f32.mrb[0].mxu0
  %v418 = vadd.f32 0.0, %v417
  %v419 = vpop.f32.mrb[0].mxu0
  %v420 = vadd.f32 0.0, %v419
  %421 = vdwg.mxu0
  %v422 = vmax.f32 %v404, %v414
  %v423 = vmax.f32 %v408, %v418
  %v424 = vmax.f32 %v422, %v423
  %v425 = vrot.slane %v424, 4
  %v426 = vmax.f32 %v424, %v425
  %v427 = vrot.slane %v426, 2
  %v428 = vmax.f32 %v426, %v427
  %v429 = vrot.slane %v428, 1
  %v430 = vmax.f32 %v428, %v429
  %v431 = vmax.f32 %v406, %v416
  %v432 = vmax.f32 %v410, %v420
  %v433 = vmax.f32 %v431, %v432
  %v434 = vrot.slane %v433, 4
  %v435 = vmax.f32 %v433, %v434
  %v436 = vrot.slane %v435, 2
  %v437 = vmax.f32 %v435, %v436
  %v438 = vrot.slane %v437, 1
  %v439 = vmax.f32 %v437, %v438
  %v440 = vld [vmem:[#allocation2] ss:$2 sm:$0x3]
  %v443 = vcombine.low %v430, %v439
  %v445 = vunpack.c.l.s4 1966171168
  %v446 = vunpack.c.0.s8 %v445
  %v447 = vlaneseq
  %v448 = vshrl.u32 %v447, 7
  %v449 = vsub.s32 %v446, %v448
  %v450 = vrot.slane %v443, %v449
  %v452 = vunpack.c.l.s4 1966171168
  %v453 = vunpack.c.0.s8 %v452
  %v454 = vlaneseq
  %v455 = vshrl.u32 %v454, 7
  %v456 = vsub.s32 %v453, %v455
  %v457 = vrot.slane %v450, %v456
  %v459 = vmax.f32 %v440, %v457
  %v460 = vlaneseq
  %vm461 = vcmp.ge.s32.totalorder %v460, 0
  %vm462 = vcmp.lt.s32.totalorder %v460, 256
  %vm463 = vmand %vm461, %vm462
  %464 = vst.msk [vmem:[#allocation2] ss:$2 sm:$0x3] %vm463, %v459
  %v465 = vld [vmem:[%s5 + $0x8] sm:$0xff]
  %v466 = vld [vmem:[%s5 + $0x28] sm:$0xff]
  %v467 = vld [vmem:[%s5 + $0x48] sm:$0xff]
  %v468 = vld [vmem:[%s5 + $0x68] sm:$0xff]
  %v469 = vld [vmem:[%s5 + $0x88] sm:$0xff]
  %v470 = vld [vmem:[%s5 + $0xa8] sm:$0xff]
  %v471 = vld [vmem:[%s5 + $0xc8] sm:$0xff]
  %v472 = vld [vmem:[%s5 + $0xe8] sm:$0xff]
  %v473 = vld [vmem:[%s5 + $0x108] sm:$0xff]
  %v474 = vld [vmem:[%s5 + $0x128] sm:$0xff]
  %v475 = vld [vmem:[%s5 + $0x148] sm:$0xff]
  %v476 = vld [vmem:[%s5 + $0x168] sm:$0xff]
  %v477 = vld [vmem:[%s5 + $0x188] sm:$0xff]
  %v478 = vld [vmem:[%s5 + $0x1a8] sm:$0xff]
  %v479 = vld [vmem:[%s5 + $0x1c8] sm:$0xff]
  %v480 = vld [vmem:[%s5 + $0x1e8] sm:$0xff]
  %v497 = vunpack.c.l.b16 %v465
  %v498 = vunpack.c.h.b16 %v465
  %v499 = vunpack.c.l.b16 %v466
  %v500 = vunpack.c.h.b16 %v466
  %v501 = vunpack.c.l.b16 %v467
  %v502 = vunpack.c.h.b16 %v467
  %v503 = vunpack.c.l.b16 %v468
  %v504 = vunpack.c.h.b16 %v468
  %v505 = vunpack.c.l.b16 %v469
  %v506 = vunpack.c.h.b16 %v469
  %v507 = vunpack.c.l.b16 %v470
  %v508 = vunpack.c.h.b16 %v470
  %v509 = vunpack.c.l.b16 %v471
  %v510 = vunpack.c.h.b16 %v471
  %v511 = vunpack.c.l.b16 %v472
  %v512 = vunpack.c.h.b16 %v472
  %v513 = vunpack.c.l.b16 %v473
  %v514 = vunpack.c.h.b16 %v473
  %v515 = vunpack.c.l.b16 %v474
  %v516 = vunpack.c.h.b16 %v474
  %v517 = vunpack.c.l.b16 %v475
  %v518 = vunpack.c.h.b16 %v475
  %v519 = vunpack.c.l.b16 %v476
  %v520 = vunpack.c.h.b16 %v476
  %v521 = vunpack.c.l.b16 %v477
  %v522 = vunpack.c.h.b16 %v477
  %v523 = vunpack.c.l.b16 %v478
  %v524 = vunpack.c.h.b16 %v478
  %v525 = vunpack.c.l.b16 %v479
  %v526 = vunpack.c.h.b16 %v479
  %v527 = vunpack.c.l.b16 %v480
  %v528 = vunpack.c.h.b16 %v480
  %v529 = vpack.c.b16 %v499, %v497
  %v530 = vpack.c.b16 %v500, %v498
  %v531 = vpack.c.b16 %v503, %v501
  %v532 = vpack.c.b16 %v504, %v502
  %v533 = vpack.c.b16 %v507, %v505
  %v534 = vpack.c.b16 %v508, %v506
  %v535 = vpack.c.b16 %v511, %v509
  %v536 = vpack.c.b16 %v512, %v510
  %v537 = vpack.c.b16 %v515, %v513
  %v538 = vpack.c.b16 %v516, %v514
  %v539 = vpack.c.b16 %v519, %v517
  %v540 = vpack.c.b16 %v520, %v518
  %v541 = vpack.c.b16 %v523, %v521
  %v542 = vpack.c.b16 %v524, %v522
  %v543 = vpack.c.b16 %v527, %v525
  %v544 = vpack.c.b16 %v528, %v526
  %561 = vmatprep.subr.bf16.mxu0 %v530
  %562 = vmatpush1.bf16.msra.mxu0 %v529
  %563 = vmatprep.subr.bf16.mxu0 %v532
  %564 = vmatpush1.bf16.msra.mxu0 %v531
  %565 = vmatprep.subr.bf16.mxu0 %v534
  %566 = vmatpush1.bf16.msra.mxu0 %v533
  %567 = vmatprep.subr.bf16.mxu0 %v536
  %568 = vmatpush1.bf16.msra.mxu0 %v535
  %569 = vmatprep.subr.bf16.mxu0 %v538
  %570 = vmatpush1.bf16.msra.mxu0 %v537
  %571 = vmatprep.subr.bf16.mxu0 %v540
  %572 = vmatpush1.bf16.msra.mxu0 %v539
  %573 = vmatprep.subr.bf16.mxu0 %v542
  %574 = vmatpush1.bf16.msra.mxu0 %v541
  %575 = vmatprep.subr.bf16.mxu0 %v544
  %576 = vmatpush1.bf16.msra.mxu0 %v543
  %577 = vmatprep.subr.bf16.mxu0 0
  %578 = vmatpush1.bf16.msra.mxu0 0
  %579 = vmatprep.subr.bf16.mxu0 0
  %580 = vmatpush1.bf16.msra.mxu0 0
  %581 = vmatprep.subr.bf16.mxu0 0
  %582 = vmatpush1.bf16.msra.mxu0 0
  %583 = vmatprep.subr.bf16.mxu0 0
  %584 = vmatpush1.bf16.msra.mxu0 0
  %585 = vmatprep.subr.bf16.mxu0 0
  %586 = vmatpush1.bf16.msra.mxu0 0
  %587 = vmatprep.subr.bf16.mxu0 0
  %588 = vmatpush1.bf16.msra.mxu0 0
  %589 = vmatprep.subr.bf16.mxu0 0
  %590 = vmatpush1.bf16.msra.mxu0 0
  %591 = vmatprep.subr.bf16.mxu0 0
  %592 = vmatpush1.bf16.msra.mxu0 0
  %593 = vmatprep.mubr.bf16.mxu0 0
  %594 = vmatmul.mubr.bf16.gmra.mrb[0].mxu0 %v271
  %v595 = vpop.f32.mrb[0].mxu0
  %v596 = vadd.f32 0.0, %v595
  %v597 = vpop.f32.mrb[0].mxu0
  %v598 = vadd.f32 0.0, %v597
  %v599 = vpop.f32.mrb[0].mxu0
  %v600 = vadd.f32 0.0, %v599
  %v601 = vpop.f32.mrb[0].mxu0
  %v602 = vadd.f32 0.0, %v601
  %603 = vmatprep.mubr.bf16.mxu0 0
  %604 = vmatmul.mubr.bf16.gmra.mrb[0].mxu0 %v272
  %v605 = vpop.f32.mrb[0].mxu0
  %v606 = vadd.f32 0.0, %v605
  %v607 = vpop.f32.mrb[0].mxu0
  %v608 = vadd.f32 0.0, %v607
  %v609 = vpop.f32.mrb[0].mxu0
  %v610 = vadd.f32 0.0, %v609
  %v611 = vpop.f32.mrb[0].mxu0
  %v612 = vadd.f32 0.0, %v611
  %613 = vdwg.mxu0
  %v614 = vmax.f32 %v596, %v606
  %v615 = vmax.f32 %v600, %v610
  %v616 = vmax.f32 %v614, %v615
  %v617 = vrot.slane %v616, 4
  %v618 = vmax.f32 %v616, %v617
  %v619 = vrot.slane %v618, 2
  %v620 = vmax.f32 %v618, %v619
  %v621 = vrot.slane %v620, 1
  %v622 = vmax.f32 %v620, %v621
  %v623 = vmax.f32 %v598, %v608
  %v624 = vmax.f32 %v602, %v612
  %v625 = vmax.f32 %v623, %v624
  %v626 = vrot.slane %v625, 4
  %v627 = vmax.f32 %v625, %v626
  %v628 = vrot.slane %v627, 2
  %v629 = vmax.f32 %v627, %v628
  %v630 = vrot.slane %v629, 1
  %v631 = vmax.f32 %v629, %v630
  %s632 = scalar_lea.vmem [#allocation2], 4
  %v633 = vld [vmem:[%s632] ss:$2 sm:$0x3]
  %v636 = vcombine.low %v622, %v631
  %v638 = vunpack.c.l.s4 1966171168
  %v639 = vunpack.c.0.s8 %v638
  %v640 = vlaneseq
  %v641 = vshrl.u32 %v640, 7
  %v642 = vsub.s32 %v639, %v641
  %v643 = vrot.slane %v636, %v642
  %v645 = vunpack.c.l.s4 1966171168
  %v646 = vunpack.c.0.s8 %v645
  %v647 = vlaneseq
  %v648 = vshrl.u32 %v647, 7
  %v649 = vsub.s32 %v646, %v648
  %v650 = vrot.slane %v643, %v649
  %v652 = vmax.f32 %v633, %v650
  %653 = vst.msk [vmem:[%s632] ss:$2 sm:$0x3] %vm463, %v652
  %v654 = vld [vmem:[%s5 + $0x10] sm:$0xff]
  %v655 = vld [vmem:[%s5 + $0x30] sm:$0xff]
  %v656 = vld [vmem:[%s5 + $0x50] sm:$0xff]
  %v657 = vld [vmem:[%s5 + $0x70] sm:$0xff]
  %v658 = vld [vmem:[%s5 + $0x90] sm:$0xff]
  %v659 = vld [vmem:[%s5 + $0xb0] sm:$0xff]
  %v660 = vld [vmem:[%s5 + $0xd0] sm:$0xff]
  %v661 = vld [vmem:[%s5 + $0xf0] sm:$0xff]
  %v662 = vld [vmem:[%s5 + $0x110] sm:$0xff]
  %v663 = vld [vmem:[%s5 + $0x130] sm:$0xff]
  %v664 = vld [vmem:[%s5 + $0x150] sm:$0xff]
  %v665 = vld [vmem:[%s5 + $0x170] sm:$0xff]
  %v666 = vld [vmem:[%s5 + $0x190] sm:$0xff]
  %v667 = vld [vmem:[%s5 + $0x1b0] sm:$0xff]
  %v668 = vld [vmem:[%s5 + $0x1d0] sm:$0xff]
  %v669 = vld [vmem:[%s5 + $0x1f0] sm:$0xff]
  %v686 = vunpack.c.l.b16 %v654
  %v687 = vunpack.c.h.b16 %v654
  %v688 = vunpack.c.l.b16 %v655
  %v689 = vunpack.c.h.b16 %v655
  %v690 = vunpack.c.l.b16 %v656
  %v691 = vunpack.c.h.b16 %v656
  %v692 = vunpack.c.l.b16 %v657
  %v693 = vunpack.c.h.b16 %v657
  %v694 = vunpack.c.l.b16 %v658
  %v695 = vunpack.c.h.b16 %v658
  %v696 = vunpack.c.l.b16 %v659
  %v697 = vunpack.c.h.b16 %v659
  %v698 = vunpack.c.l.b16 %v660
  %v699 = vunpack.c.h.b16 %v660
  %v700 = vunpack.c.l.b16 %v661
  %v701 = vunpack.c.h.b16 %v661
  %v702 = vunpack.c.l.b16 %v662
  %v703 = vunpack.c.h.b16 %v662
  %v704 = vunpack.c.l.b16 %v663
  %v705 = vunpack.c.h.b16 %v663
  %v706 = vunpack.c.l.b16 %v664
  %v707 = vunpack.c.h.b16 %v664
  %v708 = vunpack.c.l.b16 %v665
  %v709 = vunpack.c.h.b16 %v665
  %v710 = vunpack.c.l.b16 %v666
  %v711 = vunpack.c.h.b16 %v666
  %v712 = vunpack.c.l.b16 %v667
  %v713 = vunpack.c.h.b16 %v667
  %v714 = vunpack.c.l.b16 %v668
  %v715 = vunpack.c.h.b16 %v668
  %v716 = vunpack.c.l.b16 %v669
  %v717 = vunpack.c.h.b16 %v669
  %v718 = vpack.c.b16 %v688, %v686
  %v719 = vpack.c.b16 %v689, %v687
  %v720 = vpack.c.b16 %v692, %v690
  %v721 = vpack.c.b16 %v693, %v691
  %v722 = vpack.c.b16 %v696, %v694
  %v723 = vpack.c.b16 %v697, %v695
  %v724 = vpack.c.b16 %v700, %v698
  %v725 = vpack.c.b16 %v701, %v699
  %v726 = vpack.c.b16 %v704, %v702
  %v727 = vpack.c.b16 %v705, %v703
  %v728 = vpack.c.b16 %v708, %v706
  %v729 = vpack.c.b16 %v709, %v707
  %v730 = vpack.c.b16 %v712, %v710
  %v731 = vpack.c.b16 %v713, %v711
  %v732 = vpack.c.b16 %v716, %v714
  %v733 = vpack.c.b16 %v717, %v715
  %750 = vmatprep.subr.bf16.mxu0 %v719
  %751 = vmatpush1.bf16.msra.mxu0 %v718
  %752 = vmatprep.subr.bf16.mxu0 %v721
  %753 = vmatpush1.bf16.msra.mxu0 %v720
  %754 = vmatprep.subr.bf16.mxu0 %v723
  %755 = vmatpush1.bf16.msra.mxu0 %v722
  %756 = vmatprep.subr.bf16.mxu0 %v725
  %757 = vmatpush1.bf16.msra.mxu0 %v724
  %758 = vmatprep.subr.bf16.mxu0 %v727
  %759 = vmatpush1.bf16.msra.mxu0 %v726
  %760 = vmatprep.subr.bf16.mxu0 %v729
  %761 = vmatpush1.bf16.msra.mxu0 %v728
  %762 = vmatprep.subr.bf16.mxu0 %v731
  %763 = vmatpush1.bf16.msra.mxu0 %v730
  %764 = vmatprep.subr.bf16.mxu0 %v733
  %765 = vmatpush1.bf16.msra.mxu0 %v732
  %766 = vmatprep.subr.bf16.mxu0 0
  %767 = vmatpush1.bf16.msra.mxu0 0
  %768 = vmatprep.subr.bf16.mxu0 0
  %769 = vmatpush1.bf16.msra.mxu0 0
  %770 = vmatprep.subr.bf16.mxu0 0
  %771 = vmatpush1.bf16.msra.mxu0 0
  %772 = vmatprep.subr.bf16.mxu0 0
  %773 = vmatpush1.bf16.msra.mxu0 0
  %774 = vmatprep.subr.bf16.mxu0 0
  %775 = vmatpush1.bf16.msra.mxu0 0
  %776 = vmatprep.subr.bf16.mxu0 0
  %777 = vmatpush1.bf16.msra.mxu0 0
  %778 = vmatprep.subr.bf16.mxu0 0
  %779 = vmatpush1.bf16.msra.mxu0 0
  %780 = vmatprep.subr.bf16.mxu0 0
  %781 = vmatpush1.bf16.msra.mxu0 0
  %782 = vmatprep.mubr.bf16.mxu0 0
  %783 = vmatmul.mubr.bf16.gmra.mrb[0].mxu0 %v271
  %v784 = vpop.f32.mrb[0].mxu0
  %v785 = vadd.f32 0.0, %v784
  %v786 = vpop.f32.mrb[0].mxu0
  %v787 = vadd.f32 0.0, %v786
  %v788 = vpop.f32.mrb[0].mxu0
  %v789 = vadd.f32 0.0, %v788
  %v790 = vpop.f32.mrb[0].mxu0
  %v791 = vadd.f32 0.0, %v790
  %792 = vmatprep.mubr.bf16.mxu0 0
  %793 = vmatmul.mubr.bf16.gmra.mrb[0].mxu0 %v272
  %v794 = vpop.f32.mrb[0].mxu0
  %v795 = vadd.f32 0.0, %v794
  %v796 = vpop.f32.mrb[0].mxu0
  %v797 = vadd.f32 0.0, %v796
  %v798 = vpop.f32.mrb[0].mxu0
  %v799 = vadd.f32 0.0, %v798
  %v800 = vpop.f32.mrb[0].mxu0
  %v801 = vadd.f32 0.0, %v800
  %802 = vdwg.mxu0
  %v803 = vmax.f32 %v785, %v795
  %v804 = vmax.f32 %v789, %v799
  %v805 = vmax.f32 %v803, %v804
  %v806 = vrot.slane %v805, 4
  %v807 = vmax.f32 %v805, %v806
  %v808 = vrot.slane %v807, 2
  %v809 = vmax.f32 %v807, %v808
  %v810 = vrot.slane %v809, 1
  %v811 = vmax.f32 %v809, %v810
  %v812 = vmax.f32 %v787, %v797
  %v813 = vmax.f32 %v791, %v801
  %v814 = vmax.f32 %v812, %v813
  %v815 = vrot.slane %v814, 4
  %v816 = vmax.f32 %v814, %v815
  %v817 = vrot.slane %v816, 2
  %v818 = vmax.f32 %v816, %v817
  %v819 = vrot.slane %v818, 1
  %v820 = vmax.f32 %v818, %v819
  %s821 = scalar_lea.vmem [#allocation2], 8
  %v822 = vld [vmem:[%s821] ss:$2 sm:$0x3]
  %v825 = vcombine.low %v811, %v820
  %v827 = vunpack.c.l.s4 1966171168
  %v828 = vunpack.c.0.s8 %v827
  %v829 = vlaneseq
  %v830 = vshrl.u32 %v829, 7
  %v831 = vsub.s32 %v828, %v830
  %v832 = vrot.slane %v825, %v831
  %v834 = vunpack.c.l.s4 1966171168
  %v835 = vunpack.c.0.s8 %v834
  %v836 = vlaneseq
  %v837 = vshrl.u32 %v836, 7
  %v838 = vsub.s32 %v835, %v837
  %v839 = vrot.slane %v832, %v838
  %v841 = vmax.f32 %v822, %v839
  %842 = vst.msk [vmem:[%s821] ss:$2 sm:$0x3] %vm463, %v841
  %v843 = vld [vmem:[%s5 + $0x18] sm:$0xff]
  %v844 = vld [vmem:[%s5 + $0x38] sm:$0xff]
  %v845 = vld [vmem:[%s5 + $0x58] sm:$0xff]
  %v846 = vld [vmem:[%s5 + $0x78] sm:$0xff]
  %v847 = vld [vmem:[%s5 + $0x98] sm:$0xff]
  %v848 = vld [vmem:[%s5 + $0xb8] sm:$0xff]
  %v849 = vld [vmem:[%s5 + $0xd8] sm:$0xff]
  %v850 = vld [vmem:[%s5 + $0xf8] sm:$0xff]
  %v851 = vld [vmem:[%s5 + $0x118] sm:$0xff]
  %v852 = vld [vmem:[%s5 + $0x138] sm:$0xff]
  %v853 = vld [vmem:[%s5 + $0x158] sm:$0xff]
  %v854 = vld [vmem:[%s5 + $0x178] sm:$0xff]
  %v855 = vld [vmem:[%s5 + $0x198] sm:$0xff]
  %v856 = vld [vmem:[%s5 + $0x1b8] sm:$0xff]
  %v857 = vld [vmem:[%s5 + $0x1d8] sm:$0xff]
  %v858 = vld [vmem:[%s5 + $0x1f8] sm:$0xff]
  %v875 = vunpack.c.l.b16 %v843
  %v876 = vunpack.c.h.b16 %v843
  %v877 = vunpack.c.l.b16 %v844
  %v878 = vunpack.c.h.b16 %v844
  %v879 = vunpack.c.l.b16 %v845
  %v880 = vunpack.c.h.b16 %v845
  %v881 = vunpack.c.l.b16 %v846
  %v882 = vunpack.c.h.b16 %v846
  %v883 = vunpack.c.l.b16 %v847
  %v884 = vunpack.c.h.b16 %v847
  %v885 = vunpack.c.l.b16 %v848
  %v886 = vunpack.c.h.b16 %v848
  %v887 = vunpack.c.l.b16 %v849
  %v888 = vunpack.c.h.b16 %v849
  %v889 = vunpack.c.l.b16 %v850
  %v890 = vunpack.c.h.b16 %v850
  %v891 = vunpack.c.l.b16 %v851
  %v892 = vunpack.c.h.b16 %v851
  %v893 = vunpack.c.l.b16 %v852
  %v894 = vunpack.c.h.b16 %v852
  %v895 = vunpack.c.l.b16 %v853
  %v896 = vunpack.c.h.b16 %v853
  %v897 = vunpack.c.l.b16 %v854
  %v898 = vunpack.c.h.b16 %v854
  %v899 = vunpack.c.l.b16 %v855
  %v900 = vunpack.c.h.b16 %v855
  %v901 = vunpack.c.l.b16 %v856
  %v902 = vunpack.c.h.b16 %v856
  %v903 = vunpack.c.l.b16 %v857
  %v904 = vunpack.c.h.b16 %v857
  %v905 = vunpack.c.l.b16 %v858
  %v906 = vunpack.c.h.b16 %v858
  %v907 = vpack.c.b16 %v877, %v875
  %v908 = vpack.c.b16 %v878, %v876
  %v909 = vpack.c.b16 %v881, %v879
  %v910 = vpack.c.b16 %v882, %v880
  %v911 = vpack.c.b16 %v885, %v883
  %v912 = vpack.c.b16 %v886, %v884
  %v913 = vpack.c.b16 %v889, %v887
  %v914 = vpack.c.b16 %v890, %v888
  %v915 = vpack.c.b16 %v893, %v891
  %v916 = vpack.c.b16 %v894, %v892
  %v917 = vpack.c.b16 %v897, %v895
  %v918 = vpack.c.b16 %v898, %v896
  %v919 = vpack.c.b16 %v901, %v899
  %v920 = vpack.c.b16 %v902, %v900
  %v921 = vpack.c.b16 %v905, %v903
  %v922 = vpack.c.b16 %v906, %v904
  %939 = vmatprep.subr.bf16.mxu0 %v908
  %940 = vmatpush1.bf16.msra.mxu0 %v907
  %941 = vmatprep.subr.bf16.mxu0 %v910
  %942 = vmatpush1.bf16.msra.mxu0 %v909
  %943 = vmatprep.subr.bf16.mxu0 %v912
  %944 = vmatpush1.bf16.msra.mxu0 %v911
  %945 = vmatprep.subr.bf16.mxu0 %v914
  %946 = vmatpush1.bf16.msra.mxu0 %v913
  %947 = vmatprep.subr.bf16.mxu0 %v916
  %948 = vmatpush1.bf16.msra.mxu0 %v915
  %949 = vmatprep.subr.bf16.mxu0 %v918
  %950 = vmatpush1.bf16.msra.mxu0 %v917
  %951 = vmatprep.subr.bf16.mxu0 %v920
  %952 = vmatpush1.bf16.msra.mxu0 %v919
  %953 = vmatprep.subr.bf16.mxu0 %v922
  %954 = vmatpush1.bf16.msra.mxu0 %v921
  %955 = vmatprep.subr.bf16.mxu0 0
  %956 = vmatpush1.bf16.msra.mxu0 0
  %957 = vmatprep.subr.bf16.mxu0 0
  %958 = vmatpush1.bf16.msra.mxu0 0
  %959 = vmatprep.subr.bf16.mxu0 0
  %960 = vmatpush1.bf16.msra.mxu0 0
  %961 = vmatprep.subr.bf16.mxu0 0
  %962 = vmatpush1.bf16.msra.mxu0 0
  %963 = vmatprep.subr.bf16.mxu0 0
  %964 = vmatpush1.bf16.msra.mxu0 0
  %965 = vmatprep.subr.bf16.mxu0 0
  %966 = vmatpush1.bf16.msra.mxu0 0
  %967 = vmatprep.subr.bf16.mxu0 0
  %968 = vmatpush1.bf16.msra.mxu0 0
  %969 = vmatprep.subr.bf16.mxu0 0
  %970 = vmatpush1.bf16.msra.mxu0 0
  %971 = vmatprep.mubr.bf16.mxu0 0
  %972 = vmatmul.mubr.bf16.gmra.mrb[0].mxu0 %v271
  %v973 = vpop.f32.mrb[0].mxu0
  %v974 = vadd.f32 0.0, %v973
  %v975 = vpop.f32.mrb[0].mxu0
  %v976 = vadd.f32 0.0, %v975
  %v977 = vpop.f32.mrb[0].mxu0
  %v978 = vadd.f32 0.0, %v977
  %v979 = vpop.f32.mrb[0].mxu0
  %v980 = vadd.f32 0.0, %v979
  %981 = vmatprep.mubr.bf16.mxu0 0
  %982 = vmatmul.mubr.bf16.gmra.mrb[0].mxu0 %v272
  %v983 = vpop.f32.mrb[0].mxu0
  %v984 = vadd.f32 0.0, %v983
  %v985 = vpop.f32.mrb[0].mxu0
  %v986 = vadd.f32 0.0, %v985
  %v987 = vpop.f32.mrb[0].mxu0
  %v988 = vadd.f32 0.0, %v987
  %v989 = vpop.f32.mrb[0].mxu0
  %v990 = vadd.f32 0.0, %v989
  %991 = vdwg.mxu0
  %v992 = vmax.f32 %v974, %v984
  %v993 = vmax.f32 %v978, %v988
  %v994 = vmax.f32 %v992, %v993
  %v995 = vrot.slane %v994, 4
  %v996 = vmax.f32 %v994, %v995
  %v997 = vrot.slane %v996, 2
  %v998 = vmax.f32 %v996, %v997
  %v999 = vrot.slane %v998, 1
  %v1000 = vmax.f32 %v998, %v999
  %v1001 = vmax.f32 %v976, %v986
  %v1002 = vmax.f32 %v980, %v990
  %v1003 = vmax.f32 %v1001, %v1002
  %v1004 = vrot.slane %v1003, 4
  %v1005 = vmax.f32 %v1003, %v1004
  %v1006 = vrot.slane %v1005, 2
  %v1007 = vmax.f32 %v1005, %v1006
  %v1008 = vrot.slane %v1007, 1
  %v1009 = vmax.f32 %v1007, %v1008
  %s1010 = scalar_lea.vmem [#allocation2], 12
  %v1011 = vld [vmem:[%s1010] ss:$2 sm:$0x3]
  %v1014 = vcombine.low %v1000, %v1009
  %v1016 = vunpack.c.l.s4 1966171168
  %v1017 = vunpack.c.0.s8 %v1016
  %v1018 = vlaneseq
  %v1019 = vshrl.u32 %v1018, 7
  %v1020 = vsub.s32 %v1017, %v1019
  %v1021 = vrot.slane %v1014, %v1020
  %v1023 = vunpack.c.l.s4 1966171168
  %v1024 = vunpack.c.0.s8 %v1023
  %v1025 = vlaneseq
  %v1026 = vshrl.u32 %v1025, 7
  %v1027 = vsub.s32 %v1024, %v1026
  %v1028 = vrot.slane %v1021, %v1027
  %v1030 = vmax.f32 %v1011, %v1028
  %1031 = vst.msk [vmem:[%s1010] ss:$2 sm:$0x3] %vm463, %v1030
  %s1032 = scalar_lea.vmem %s0, 16
  %v1033 = vld [vmem:[%s1032] sm:$0xff]
  %v1034 = vld [vmem:[%s1032 + $0x8] sm:$0xff]
  %v1035 = vpack.c.bf16 %v1034, %v1033
  %v1036 = vld [vmem:[%s1] sm:$0xf]
  %v1037 = vld [vmem:[%s1 + $0x4] sm:$0xf]
  %v1038 = vld [vmem:[%s2] sm:$0x1]
  %v1040 = vlaneseq
  %v1041 = vshrl.u32 %v1040, 7
  %v1042 = vsub.s32 0, %v1041
  %v1043 = vrot.slane %v1038, %v1042
  %1045 = vxpose.xlu0.c.b16.start [1/8] %v1035, 128
  %1046 = vxpose.xlu0.c.b16.cont [2/8] 0, 128
  %1047 = vxpose.xlu0.c.b16.cont [3/8] 0, 128
  %1048 = vxpose.xlu0.c.b16.cont [4/8] 0, 128
  %1049 = vxpose.xlu0.c.b16.cont [5/8] 0, 128
  %1050 = vxpose.xlu0.c.b16.cont [6/8] 0, 128
  %1051 = vxpose.xlu0.c.b16.cont [7/8] 0, 128
  %1052 = vxpose.xlu0.c.b16.end [8/8] 0, 128
  %v1053 = vpop.trf.xlu0
  %v1054 = vpop.trf.xlu0
  %v1055 = vpop.trf.xlu0
  %v1056 = vpop.trf.xlu0
  %v1057 = vpop.trf.xlu0
  %v1058 = vpop.trf.xlu0
  %v1059 = vpop.trf.xlu0
  %v1060 = vpop.trf.xlu0
  %v1063 = vunpack.c.l.b16 %v1036
  %v1064 = vunpack.c.l.b16 %v1037
  %v1065 = vpack.c.b16 %v1064, %v1063
  %v1068 = vsel %vm85, %v1053, 0
  %v1071 = vsel %vm85, %v1054, 0
  %1073 = vmatprep.subr.bf16.mxu0 0
  %1074 = vmatpush1.bf16.msra.mxu0 %v1065
  %1075 = vmatprep.subr.bf16.mxu0 0
  %1076 = vmatpush1.bf16.msra.mxu0 0
  %1077 = vmatprep.subr.bf16.mxu0 0
  %1078 = vmatpush1.bf16.msra.mxu0 0
  %1079 = vmatprep.subr.bf16.mxu0 0
  %1080 = vmatpush1.bf16.msra.mxu0 0
  %1081 = vmatprep.subr.bf16.mxu0 0
  %1082 = vmatpush1.bf16.msra.mxu0 0
  %1083 = vmatprep.subr.bf16.mxu0 0
  %1084 = vmatpush1.bf16.msra.mxu0 0
  %1085 = vmatprep.subr.bf16.mxu0 0
  %1086 = vmatpush1.bf16.msra.mxu0 0
  %1087 = vmatprep.subr.bf16.mxu0 0
  %1088 = vmatpush1.bf16.msra.mxu0 0
  %1089 = vmatprep.subr.bf16.mxu0 0
  %1090 = vmatpush1.bf16.msra.mxu0 0
  %1091 = vmatprep.subr.bf16.mxu0 0
  %1092 = vmatpush1.bf16.msra.mxu0 0
  %1093 = vmatprep.subr.bf16.mxu0 0
  %1094 = vmatpush1.bf16.msra.mxu0 0
  %1095 = vmatprep.subr.bf16.mxu0 0
  %1096 = vmatpush1.bf16.msra.mxu0 0
  %1097 = vmatprep.subr.bf16.mxu0 0
  %1098 = vmatpush1.bf16.msra.mxu0 0
  %1099 = vmatprep.subr.bf16.mxu0 0
  %1100 = vmatpush1.bf16.msra.mxu0 0
  %1101 = vmatprep.subr.bf16.mxu0 0
  %1102 = vmatpush1.bf16.msra.mxu0 0
  %1103 = vmatprep.subr.bf16.mxu0 0
  %1104 = vmatpush1.bf16.msra.mxu0 0
  %1105 = vmatprep.mubr.bf16.mxu0 0
  %1106 = vmatmul.mubr.bf16.gmra.mrb[0].mxu0 %v1068
  %v1107 = vpop.f32.mrb[0].mxu0
  %v1108 = vadd.f32 %v1043, %v1107
  %v1109 = vpop.f32.mrb[0].mxu0
  %v1110 = vpop.f32.mrb[0].mxu0
  %v1111 = vadd.f32 %v1043, %v1110
  %v1112 = vpop.f32.mrb[0].mxu0
  %1113 = vmatprep.mubr.bf16.mxu0 0
  %1114 = vmatmul.mubr.bf16.gmra.mrb[0].mxu0 %v1071
  %v1115 = vpop.f32.mrb[0].mxu0
  %v1116 = vadd.f32 %v1043, %v1115
  %v1117 = vpop.f32.mrb[0].mxu0
  %v1118 = vpop.f32.mrb[0].mxu0
  %v1119 = vadd.f32 %v1043, %v1118
  %v1120 = vpop.f32.mrb[0].mxu0
  %1121 = vdwg.mxu0
  %v1122 = vmax.f32 %v1108, 0.0
  %v1123 = vmax.f32 %v1111, 0.0
  %v1124 = vmax.f32 %v1116, 0.0
  %v1125 = vmax.f32 %v1119, 0.0
  %v1126 = vpack.c.bf16 %v1123, %v1122
  %v1127 = vpack.c.bf16 %v1125, %v1124
  %v1128 = vld [vmem:[%s3] sm:$0xf]
  %v1129 = vld [vmem:[%s3 + $0x4] sm:$0xf]
  %v1130 = vld [vmem:[%s3 + $0x8] sm:$0xf]
  %v1131 = vld [vmem:[%s3 + $0xc] sm:$0xf]
  %v1132 = vld [vmem:[%s3 + $0x10] sm:$0xf]
  %v1133 = vld [vmem:[%s3 + $0x14] sm:$0xf]
  %v1134 = vld [vmem:[%s3 + $0x18] sm:$0xf]
  %v1135 = vld [vmem:[%s3 + $0x1c] sm:$0xf]
  %v1136 = vld [vmem:[%s3 + $0x20] sm:$0xf]
  %v1137 = vld [vmem:[%s3 + $0x24] sm:$0xf]
  %v1138 = vld [vmem:[%s3 + $0x28] sm:$0xf]
  %v1139 = vld [vmem:[%s3 + $0x2c] sm:$0xf]
  %v1140 = vld [vmem:[%s3 + $0x30] sm:$0xf]
  %v1141 = vld [vmem:[%s3 + $0x34] sm:$0xf]
  %v1142 = vld [vmem:[%s3 + $0x38] sm:$0xf]
  %v1143 = vld [vmem:[%s3 + $0x3c] sm:$0xf]
  %v1144 = vld [vmem:[%s4] sm:$0x1]
  %v1146 = vlaneseq
  %v1147 = vshrl.u32 %v1146, 7
  %v1148 = vsub.s32 0, %v1147
  %v1149 = vrot.slane %v1144, %v1148
  %v1167 = vunpack.c.l.b16 %v1128
  %v1168 = vunpack.c.l.b16 %v1129
  %v1169 = vunpack.c.l.b16 %v1130
  %v1170 = vunpack.c.l.b16 %v1131
  %v1171 = vunpack.c.l.b16 %v1132
  %v1172 = vunpack.c.l.b16 %v1133
  %v1173 = vunpack.c.l.b16 %v1134
  %v1174 = vunpack.c.l.b16 %v1135
  %v1175 = vunpack.c.l.b16 %v1136
  %v1176 = vunpack.c.l.b16 %v1137
  %v1177 = vunpack.c.l.b16 %v1138
  %v1178 = vunpack.c.l.b16 %v1139
  %v1179 = vunpack.c.l.b16 %v1140
  %v1180 = vunpack.c.l.b16 %v1141
  %v1181 = vunpack.c.l.b16 %v1142
  %v1182 = vunpack.c.l.b16 %v1143
  %v1183 = vpack.c.b16 %v1168, %v1167
  %v1184 = vpack.c.b16 %v1170, %v1169
  %v1185 = vpack.c.b16 %v1172, %v1171
  %v1186 = vpack.c.b16 %v1174, %v1173
  %v1187 = vpack.c.b16 %v1176, %v1175
  %v1188 = vpack.c.b16 %v1178, %v1177
  %v1189 = vpack.c.b16 %v1180, %v1179
  %v1190 = vpack.c.b16 %v1182, %v1181
  %1199 = vmatprep.subr.bf16.mxu0 0
  %1200 = vmatpush1.bf16.msra.mxu0 %v1183
  %1201 = vmatprep.subr.bf16.mxu0 0
  %1202 = vmatpush1.bf16.msra.mxu0 %v1184
  %1203 = vmatprep.subr.bf16.mxu0 0
  %1204 = vmatpush1.bf16.msra.mxu0 %v1185
  %1205 = vmatprep.subr.bf16.mxu0 0
  %1206 = vmatpush1.bf16.msra.mxu0 %v1186
  %1207 = vmatprep.subr.bf16.mxu0 0
  %1208 = vmatpush1.bf16.msra.mxu0 %v1187
  %1209 = vmatprep.subr.bf16.mxu0 0
  %1210 = vmatpush1.bf16.msra.mxu0 %v1188
  %1211 = vmatprep.subr.bf16.mxu0 0
  %1212 = vmatpush1.bf16.msra.mxu0 %v1189
  %1213 = vmatprep.subr.bf16.mxu0 0
  %1214 = vmatpush1.bf16.msra.mxu0 %v1190
  %1215 = vmatprep.subr.bf16.mxu0 0
  %1216 = vmatpush1.bf16.msra.mxu0 0
  %1217 = vmatprep.subr.bf16.mxu0 0
  %1218 = vmatpush1.bf16.msra.mxu0 0
  %1219 = vmatprep.subr.bf16.mxu0 0
  %1220 = vmatpush1.bf16.msra.mxu0 0
  %1221 = vmatprep.subr.bf16.mxu0 0
  %1222 = vmatpush1.bf16.msra.mxu0 0
  %1223 = vmatprep.subr.bf16.mxu0 0
  %1224 = vmatpush1.bf16.msra.mxu0 0
  %1225 = vmatprep.subr.bf16.mxu0 0
  %1226 = vmatpush1.bf16.msra.mxu0 0
  %1227 = vmatprep.subr.bf16.mxu0 0
  %1228 = vmatpush1.bf16.msra.mxu0 0
  %1229 = vmatprep.subr.bf16.mxu0 0
  %1230 = vmatpush1.bf16.msra.mxu0 0
  %1231 = vmatprep.mubr.bf16.mxu0 0
  %1232 = vmatmul.mubr.bf16.gmra.mrb[0].mxu0 %v1126
  %v1233 = vpop.f32.mrb[0].mxu0
  %v1234 = vadd.f32 %v1149, %v1233
  %v1235 = vpop.f32.mrb[0].mxu0
  %v1236 = vpop.f32.mrb[0].mxu0
  %v1237 = vadd.f32 %v1149, %v1236
  %v1238 = vpop.f32.mrb[0].mxu0
  %1239 = vmatprep.mubr.bf16.mxu0 0
  %1240 = vmatmul.mubr.bf16.gmra.mrb[0].mxu0 %v1127
  %v1241 = vpop.f32.mrb[0].mxu0
  %v1242 = vadd.f32 %v1149, %v1241
  %v1243 = vpop.f32.mrb[0].mxu0
  %v1244 = vpop.f32.mrb[0].mxu0
  %v1245 = vadd.f32 %v1149, %v1244
  %v1246 = vpop.f32.mrb[0].mxu0
  %1247 = vdwg.mxu0
  %v1248 = vmax.f32 %v1234, 0.0
  %v1249 = vmax.f32 %v1237, 0.0
  %v1250 = vmax.f32 %v1242, 0.0
  %v1251 = vmax.f32 %v1245, 0.0
  %v1252 = vpack.c.bf16 %v1249, %v1248
  %v1253 = vpack.c.bf16 %v1251, %v1250
  %v1254 = vld [vmem:[%s5] sm:$0xff]
  %v1255 = vld [vmem:[%s5 + $0x20] sm:$0xff]
  %v1256 = vld [vmem:[%s5 + $0x40] sm:$0xff]
  %v1257 = vld [vmem:[%s5 + $0x60] sm:$0xff]
  %v1258 = vld [vmem:[%s5 + $0x80] sm:$0xff]
  %v1259 = vld [vmem:[%s5 + $0xa0] sm:$0xff]
  %v1260 = vld [vmem:[%s5 + $0xc0] sm:$0xff]
  %v1261 = vld [vmem:[%s5 + $0xe0] sm:$0xff]
  %v1262 = vld [vmem:[%s5 + $0x100] sm:$0xff]
  %v1263 = vld [vmem:[%s5 + $0x120] sm:$0xff]
  %v1264 = vld [vmem:[%s5 + $0x140] sm:$0xff]
  %v1265 = vld [vmem:[%s5 + $0x160] sm:$0xff]
  %v1266 = vld [vmem:[%s5 + $0x180] sm:$0xff]
  %v1267 = vld [vmem:[%s5 + $0x1a0] sm:$0xff]
  %v1268 = vld [vmem:[%s5 + $0x1c0] sm:$0xff]
  %v1269 = vld [vmem:[%s5 + $0x1e0] sm:$0xff]
  %v1286 = vunpack.c.l.b16 %v1254
  %v1287 = vunpack.c.h.b16 %v1254
  %v1288 = vunpack.c.l.b16 %v1255
  %v1289 = vunpack.c.h.b16 %v1255
  %v1290 = vunpack.c.l.b16 %v1256
  %v1291 = vunpack.c.h.b16 %v1256
  %v1292 = vunpack.c.l.b16 %v1257
  %v1293 = vunpack.c.h.b16 %v1257
  %v1294 = vunpack.c.l.b16 %v1258
  %v1295 = vunpack.c.h.b16 %v1258
  %v1296 = vunpack.c.l.b16 %v1259
  %v1297 = vunpack.c.h.b16 %v1259
  %v1298 = vunpack.c.l.b16 %v1260
  %v1299 = vunpack.c.h.b16 %v1260
  %v1300 = vunpack.c.l.b16 %v1261
  %v1301 = vunpack.c.h.b16 %v1261
  %v1302 = vunpack.c.l.b16 %v1262
  %v1303 = vunpack.c.h.b16 %v1262
  %v1304 = vunpack.c.l.b16 %v1263
  %v1305 = vunpack.c.h.b16 %v1263
  %v1306 = vunpack.c.l.b16 %v1264
  %v1307 = vunpack.c.h.b16 %v1264
  %v1308 = vunpack.c.l.b16 %v1265
  %v1309 = vunpack.c.h.b16 %v1265
  %v1310 = vunpack.c.l.b16 %v1266
  %v1311 = vunpack.c.h.b16 %v1266
  %v1312 = vunpack.c.l.b16 %v1267
  %v1313 = vunpack.c.h.b16 %v1267
  %v1314 = vunpack.c.l.b16 %v1268
  %v1315 = vunpack.c.h.b16 %v1268
  %v1316 = vunpack.c.l.b16 %v1269
  %v1317 = vunpack.c.h.b16 %v1269
  %v1318 = vpack.c.b16 %v1288, %v1286
  %v1319 = vpack.c.b16 %v1289, %v1287
  %v1320 = vpack.c.b16 %v1292, %v1290
  %v1321 = vpack.c.b16 %v1293, %v1291
  %v1322 = vpack.c.b16 %v1296, %v1294
  %v1323 = vpack.c.b16 %v1297, %v1295
  %v1324 = vpack.c.b16 %v1300, %v1298
  %v1325 = vpack.c.b16 %v1301, %v1299
  %v1326 = vpack.c.b16 %v1304, %v1302
  %v1327 = vpack.c.b16 %v1305, %v1303
  %v1328 = vpack.c.b16 %v1308, %v1306
  %v1329 = vpack.c.b16 %v1309, %v1307
  %v1330 = vpack.c.b16 %v1312, %v1310
  %v1331 = vpack.c.b16 %v1313, %v1311
  %v1332 = vpack.c.b16 %v1316, %v1314
  %v1333 = vpack.c.b16 %v1317, %v1315
  %1350 = vmatprep.subr.bf16.mxu0 %v1319
  %1351 = vmatpush1.bf16.msra.mxu0 %v1318
  %1352 = vmatprep.subr.bf16.mxu0 %v1321
  %1353 = vmatpush1.bf16.msra.mxu0 %v1320
  %1354 = vmatprep.subr.bf16.mxu0 %v1323
  %1355 = vmatpush1.bf16.msra.mxu0 %v1322
  %1356 = vmatprep.subr.bf16.mxu0 %v1325
  %1357 = vmatpush1.bf16.msra.mxu0 %v1324
  %1358 = vmatprep.subr.bf16.mxu0 %v1327
  %1359 = vmatpush1.bf16.msra.mxu0 %v1326
  %1360 = vmatprep.subr.bf16.mxu0 %v1329
  %1361 = vmatpush1.bf16.msra.mxu0 %v1328
  %1362 = vmatprep.subr.bf16.mxu0 %v1331
  %1363 = vmatpush1.bf16.msra.mxu0 %v1330
  %1364 = vmatprep.subr.bf16.mxu0 %v1333
  %1365 = vmatpush1.bf16.msra.mxu0 %v1332
  %1366 = vmatprep.subr.bf16.mxu0 0
  %1367 = vmatpush1.bf16.msra.mxu0 0
  %1368 = vmatprep.subr.bf16.mxu0 0
  %1369 = vmatpush1.bf16.msra.mxu0 0
  %1370 = vmatprep.subr.bf16.mxu0 0
  %1371 = vmatpush1.bf16.msra.mxu0 0
  %1372 = vmatprep.subr.bf16.mxu0 0
  %1373 = vmatpush1.bf16.msra.mxu0 0
  %1374 = vmatprep.subr.bf16.mxu0 0
  %1375 = vmatpush1.bf16.msra.mxu0 0
  %1376 = vmatprep.subr.bf16.mxu0 0
  %1377 = vmatpush1.bf16.msra.mxu0 0
  %1378 = vmatprep.subr.bf16.mxu0 0
  %1379 = vmatpush1.bf16.msra.mxu0 0
  %1380 = vmatprep.subr.bf16.mxu0 0
  %1381 = vmatpush1.bf16.msra.mxu0 0
  %1382 = vmatprep.mubr.bf16.mxu0 0
  %1383 = vmatmul.mubr.bf16.gmra.mrb[0].mxu0 %v1252
  %v1384 = vpop.f32.mrb[0].mxu0
  %v1385 = vadd.f32 0.0, %v1384
  %v1386 = vpop.f32.mrb[0].mxu0
  %v1387 = vadd.f32 0.0, %v1386
  %v1388 = vpop.f32.mrb[0].mxu0
  %v1389 = vadd.f32 0.0, %v1388
  %v1390 = vpop.f32.mrb[0].mxu0
  %v1391 = vadd.f32 0.0, %v1390
  %1392 = vmatprep.mubr.bf16.mxu0 0
  %1393 = vmatmul.mubr.bf16.gmra.mrb[0].mxu0 %v1253
  %v1394 = vpop.f32.mrb[0].mxu0
  %v1395 = vadd.f32 0.0, %v1394
  %v1396 = vpop.f32.mrb[0].mxu0
  %v1397 = vadd.f32 0.0, %v1396
  %v1398 = vpop.f32.mrb[0].mxu0
  %v1399 = vadd.f32 0.0, %v1398
  %v1400 = vpop.f32.mrb[0].mxu0
  %v1401 = vadd.f32 0.0, %v1400
  %1402 = vdwg.mxu0
  %v1403 = vmax.f32 %v1385, %v1395
  %v1404 = vmax.f32 %v1389, %v1399
  %v1405 = vmax.f32 %v1403, %v1404
  %v1406 = vrot.slane %v1405, 4
  %v1407 = vmax.f32 %v1405, %v1406
  %v1408 = vrot.slane %v1407, 2
  %v1409 = vmax.f32 %v1407, %v1408
  %v1410 = vrot.slane %v1409, 1
  %v1411 = vmax.f32 %v1409, %v1410
  %v1412 = vmax.f32 %v1387, %v1397
  %v1413 = vmax.f32 %v1391, %v1401
  %v1414 = vmax.f32 %v1412, %v1413
  %v1415 = vrot.slane %v1414, 4
  %v1416 = vmax.f32 %v1414, %v1415
  %v1417 = vrot.slane %v1416, 2
  %v1418 = vmax.f32 %v1416, %v1417
  %v1419 = vrot.slane %v1418, 1
  %v1420 = vmax.f32 %v1418, %v1419
  %s1421 = scalar_lea.vmem [#allocation2], 1
  %v1422 = vld [vmem:[%s1421] ss:$2 sm:$0x3]
  %v1425 = vcombine.low %v1411, %v1420
  %v1427 = vunpack.c.l.s4 1966171168
  %v1428 = vunpack.c.0.s8 %v1427
  %v1429 = vlaneseq
  %v1430 = vshrl.u32 %v1429, 7
  %v1431 = vsub.s32 %v1428, %v1430
  %v1432 = vrot.slane %v1425, %v1431
  %v1434 = vunpack.c.l.s4 1966171168
  %v1435 = vunpack.c.0.s8 %v1434
  %v1436 = vlaneseq
  %v1437 = vshrl.u32 %v1436, 7
  %v1438 = vsub.s32 %v1435, %v1437
  %v1439 = vrot.slane %v1432, %v1438
  %v1441 = vmax.f32 %v1422, %v1439
  %1442 = vst.msk [vmem:[%s1421] ss:$2 sm:$0x3] %vm463, %v1441
  %v1443 = vld [vmem:[%s5 + $0x8] sm:$0xff]
  %v1444 = vld [vmem:[%s5 + $0x28] sm:$0xff]
  %v1445 = vld [vmem:[%s5 + $0x48] sm:$0xff]
  %v1446 = vld [vmem:[%s5 + $0x68] sm:$0xff]
  %v1447 = vld [vmem:[%s5 + $0x88] sm:$0xff]
  %v1448 = vld [vmem:[%s5 + $0xa8] sm:$0xff]
  %v1449 = vld [vmem:[%s5 + $0xc8] sm:$0xff]
  %v1450 = vld [vmem:[%s5 + $0xe8] sm:$0xff]
  %v1451 = vld [vmem:[%s5 + $0x108] sm:$0xff]
  %v1452 = vld [vmem:[%s5 + $0x128] sm:$0xff]
  %v1453 = vld [vmem:[%s5 + $0x148] sm:$0xff]
  %v1454 = vld [vmem:[%s5 + $0x168] sm:$0xff]
  %v1455 = vld [vmem:[%s5 + $0x188] sm:$0xff]
  %v1456 = vld [vmem:[%s5 + $0x1a8] sm:$0xff]
  %v1457 = vld [vmem:[%s5 + $0x1c8] sm:$0xff]
  %v1458 = vld [vmem:[%s5 + $0x1e8] sm:$0xff]
  %v1475 = vunpack.c.l.b16 %v1443
  %v1476 = vunpack.c.h.b16 %v1443
  %v1477 = vunpack.c.l.b16 %v1444
  %v1478 = vunpack.c.h.b16 %v1444
  %v1479 = vunpack.c.l.b16 %v1445
  %v1480 = vunpack.c.h.b16 %v1445
  %v1481 = vunpack.c.l.b16 %v1446
  %v1482 = vunpack.c.h.b16 %v1446
  %v1483 = vunpack.c.l.b16 %v1447
  %v1484 = vunpack.c.h.b16 %v1447
  %v1485 = vunpack.c.l.b16 %v1448
  %v1486 = vunpack.c.h.b16 %v1448
  %v1487 = vunpack.c.l.b16 %v1449
  %v1488 = vunpack.c.h.b16 %v1449
  %v1489 = vunpack.c.l.b16 %v1450
  %v1490 = vunpack.c.h.b16 %v1450
  %v1491 = vunpack.c.l.b16 %v1451
  %v1492 = vunpack.c.h.b16 %v1451
  %v1493 = vunpack.c.l.b16 %v1452
  %v1494 = vunpack.c.h.b16 %v1452
  %v1495 = vunpack.c.l.b16 %v1453
  %v1496 = vunpack.c.h.b16 %v1453
  %v1497 = vunpack.c.l.b16 %v1454
  %v1498 = vunpack.c.h.b16 %v1454
  %v1499 = vunpack.c.l.b16 %v1455
  %v1500 = vunpack.c.h.b16 %v1455
  %v1501 = vunpack.c.l.b16 %v1456
  %v1502 = vunpack.c.h.b16 %v1456
  %v1503 = vunpack.c.l.b16 %v1457
  %v1504 = vunpack.c.h.b16 %v1457
  %v1505 = vunpack.c.l.b16 %v1458
  %v1506 = vunpack.c.h.b16 %v1458
  %v1507 = vpack.c.b16 %v1477, %v1475
  %v1508 = vpack.c.b16 %v1478, %v1476
  %v1509 = vpack.c.b16 %v1481, %v1479
  %v1510 = vpack.c.b16 %v1482, %v1480
  %v1511 = vpack.c.b16 %v1485, %v1483
  %v1512 = vpack.c.b16 %v1486, %v1484
  %v1513 = vpack.c.b16 %v1489, %v1487
  %v1514 = vpack.c.b16 %v1490, %v1488
  %v1515 = vpack.c.b16 %v1493, %v1491
  %v1516 = vpack.c.b16 %v1494, %v1492
  %v1517 = vpack.c.b16 %v1497, %v1495
  %v1518 = vpack.c.b16 %v1498, %v1496
  %v1519 = vpack.c.b16 %v1501, %v1499
  %v1520 = vpack.c.b16 %v1502, %v1500
  %v1521 = vpack.c.b16 %v1505, %v1503
  %v1522 = vpack.c.b16 %v1506, %v1504
  %1539 = vmatprep.subr.bf16.mxu0 %v1508
  %1540 = vmatpush1.bf16.msra.mxu0 %v1507
  %1541 = vmatprep.subr.bf16.mxu0 %v1510
  %1542 = vmatpush1.bf16.msra.mxu0 %v1509
  %1543 = vmatprep.subr.bf16.mxu0 %v1512
  %1544 = vmatpush1.bf16.msra.mxu0 %v1511
  %1545 = vmatprep.subr.bf16.mxu0 %v1514
  %1546 = vmatpush1.bf16.msra.mxu0 %v1513
  %1547 = vmatprep.subr.bf16.mxu0 %v1516
  %1548 = vmatpush1.bf16.msra.mxu0 %v1515
  %1549 = vmatprep.subr.bf16.mxu0 %v1518
  %1550 = vmatpush1.bf16.msra.mxu0 %v1517
  %1551 = vmatprep.subr.bf16.mxu0 %v1520
  %1552 = vmatpush1.bf16.msra.mxu0 %v1519
  %1553 = vmatprep.subr.bf16.mxu0 %v1522
  %1554 = vmatpush1.bf16.msra.mxu0 %v1521
  %1555 = vmatprep.subr.bf16.mxu0 0
  %1556 = vmatpush1.bf16.msra.mxu0 0
  %1557 = vmatprep.subr.bf16.mxu0 0
  %1558 = vmatpush1.bf16.msra.mxu0 0
  %1559 = vmatprep.subr.bf16.mxu0 0
  %1560 = vmatpush1.bf16.msra.mxu0 0
  %1561 = vmatprep.subr.bf16.mxu0 0
  %1562 = vmatpush1.bf16.msra.mxu0 0
  %1563 = vmatprep.subr.bf16.mxu0 0
  %1564 = vmatpush1.bf16.msra.mxu0 0
  %1565 = vmatprep.subr.bf16.mxu0 0
  %1566 = vmatpush1.bf16.msra.mxu0 0
  %1567 = vmatprep.subr.bf16.mxu0 0
  %1568 = vmatpush1.bf16.msra.mxu0 0
  %1569 = vmatprep.subr.bf16.mxu0 0
  %1570 = vmatpush1.bf16.msra.mxu0 0
  %1571 = vmatprep.mubr.bf16.mxu0 0
  %1572 = vmatmul.mubr.bf16.gmra.mrb[0].mxu0 %v1252
  %v1573 = vpop.f32.mrb[0].mxu0
  %v1574 = vadd.f32 0.0, %v1573
  %v1575 = vpop.f32.mrb[0].mxu0
  %v1576 = vadd.f32 0.0, %v1575
  %v1577 = vpop.f32.mrb[0].mxu0
  %v1578 = vadd.f32 0.0, %v1577
  %v1579 = vpop.f32.mrb[0].mxu0
  %v1580 = vadd.f32 0.0, %v1579
  %1581 = vmatprep.mubr.bf16.mxu0 0
  %1582 = vmatmul.mubr.bf16.gmra.mrb[0].mxu0 %v1253
  %v1583 = vpop.f32.mrb[0].mxu0
  %v1584 = vadd.f32 0.0, %v1583
  %v1585 = vpop.f32.mrb[0].mxu0
  %v1586 = vadd.f32 0.0, %v1585
  %v1587 = vpop.f32.mrb[0].mxu0
  %v1588 = vadd.f32 0.0, %v1587
  %v1589 = vpop.f32.mrb[0].mxu0
  %v1590 = vadd.f32 0.0, %v1589
  %1591 = vdwg.mxu0
  %v1592 = vmax.f32 %v1574, %v1584
  %v1593 = vmax.f32 %v1578, %v1588
  %v1594 = vmax.f32 %v1592, %v1593
  %v1595 = vrot.slane %v1594, 4
  %v1596 = vmax.f32 %v1594, %v1595
  %v1597 = vrot.slane %v1596, 2
  %v1598 = vmax.f32 %v1596, %v1597
  %v1599 = vrot.slane %v1598, 1
  %v1600 = vmax.f32 %v1598, %v1599
  %v1601 = vmax.f32 %v1576, %v1586
  %v1602 = vmax.f32 %v1580, %v1590
  %v1603 = vmax.f32 %v1601, %v1602
  %v1604 = vrot.slane %v1603, 4
  %v1605 = vmax.f32 %v1603, %v1604
  %v1606 = vrot.slane %v1605, 2
  %v1607 = vmax.f32 %v1605, %v1606
  %v1608 = vrot.slane %v1607, 1
  %v1609 = vmax.f32 %v1607, %v1608
  %s1610 = scalar_lea.vmem [#allocation2], 5
  %v1611 = vld [vmem:[%s1610] ss:$2 sm:$0x3]
  %v1614 = vcombine.low %v1600, %v1609
  %v1616 = vunpack.c.l.s4 1966171168
  %v1617 = vunpack.c.0.s8 %v1616
  %v1618 = vlaneseq
  %v1619 = vshrl.u32 %v1618, 7
  %v1620 = vsub.s32 %v1617, %v1619
  %v1621 = vrot.slane %v1614, %v1620
  %v1623 = vunpack.c.l.s4 1966171168
  %v1624 = vunpack.c.0.s8 %v1623
  %v1625 = vlaneseq
  %v1626 = vshrl.u32 %v1625, 7
  %v1627 = vsub.s32 %v1624, %v1626
  %v1628 = vrot.slane %v1621, %v1627
  %v1630 = vmax.f32 %v1611, %v1628
  %1631 = vst.msk [vmem:[%s1610] ss:$2 sm:$0x3] %vm463, %v1630
  %v1632 = vld [vmem:[%s5 + $0x10] sm:$0xff]
  %v1633 = vld [vmem:[%s5 + $0x30] sm:$0xff]
  %v1634 = vld [vmem:[%s5 + $0x50] sm:$0xff]
  %v1635 = vld [vmem:[%s5 + $0x70] sm:$0xff]
  %v1636 = vld [vmem:[%s5 + $0x90] sm:$0xff]
  %v1637 = vld [vmem:[%s5 + $0xb0] sm:$0xff]
  %v1638 = vld [vmem:[%s5 + $0xd0] sm:$0xff]
  %v1639 = vld [vmem:[%s5 + $0xf0] sm:$0xff]
  %v1640 = vld [vmem:[%s5 + $0x110] sm:$0xff]
  %v1641 = vld [vmem:[%s5 + $0x130] sm:$0xff]
  %v1642 = vld [vmem:[%s5 + $0x150] sm:$0xff]
  %v1643 = vld [vmem:[%s5 + $0x170] sm:$0xff]
  %v1644 = vld [vmem:[%s5 + $0x190] sm:$0xff]
  %v1645 = vld [vmem:[%s5 + $0x1b0] sm:$0xff]
  %v1646 = vld [vmem:[%s5 + $0x1d0] sm:$0xff]
  %v1647 = vld [vmem:[%s5 + $0x1f0] sm:$0xff]
  %v1664 = vunpack.c.l.b16 %v1632
  %v1665 = vunpack.c.h.b16 %v1632
  %v1666 = vunpack.c.l.b16 %v1633
  %v1667 = vunpack.c.h.b16 %v1633
  %v1668 = vunpack.c.l.b16 %v1634
  %v1669 = vunpack.c.h.b16 %v1634
  %v1670 = vunpack.c.l.b16 %v1635
  %v1671 = vunpack.c.h.b16 %v1635
  %v1672 = vunpack.c.l.b16 %v1636
  %v1673 = vunpack.c.h.b16 %v1636
  %v1674 = vunpack.c.l.b16 %v1637
  %v1675 = vunpack.c.h.b16 %v1637
  %v1676 = vunpack.c.l.b16 %v1638
  %v1677 = vunpack.c.h.b16 %v1638
  %v1678 = vunpack.c.l.b16 %v1639
  %v1679 = vunpack.c.h.b16 %v1639
  %v1680 = vunpack.c.l.b16 %v1640
  %v1681 = vunpack.c.h.b16 %v1640
  %v1682 = vunpack.c.l.b16 %v1641
  %v1683 = vunpack.c.h.b16 %v1641
  %v1684 = vunpack.c.l.b16 %v1642
  %v1685 = vunpack.c.h.b16 %v1642
  %v1686 = vunpack.c.l.b16 %v1643
  %v1687 = vunpack.c.h.b16 %v1643
  %v1688 = vunpack.c.l.b16 %v1644
  %v1689 = vunpack.c.h.b16 %v1644
  %v1690 = vunpack.c.l.b16 %v1645
  %v1691 = vunpack.c.h.b16 %v1645
  %v1692 = vunpack.c.l.b16 %v1646
  %v1693 = vunpack.c.h.b16 %v1646
  %v1694 = vunpack.c.l.b16 %v1647
  %v1695 = vunpack.c.h.b16 %v1647
  %v1696 = vpack.c.b16 %v1666, %v1664
  %v1697 = vpack.c.b16 %v1667, %v1665
  %v1698 = vpack.c.b16 %v1670, %v1668
  %v1699 = vpack.c.b16 %v1671, %v1669
  %v1700 = vpack.c.b16 %v1674, %v1672
  %v1701 = vpack.c.b16 %v1675, %v1673
  %v1702 = vpack.c.b16 %v1678, %v1676
  %v1703 = vpack.c.b16 %v1679, %v1677
  %v1704 = vpack.c.b16 %v1682, %v1680
  %v1705 = vpack.c.b16 %v1683, %v1681
  %v1706 = vpack.c.b16 %v1686, %v1684
  %v1707 = vpack.c.b16 %v1687, %v1685
  %v1708 = vpack.c.b16 %v1690, %v1688
  %v1709 = vpack.c.b16 %v1691, %v1689
  %v1710 = vpack.c.b16 %v1694, %v1692
  %v1711 = vpack.c.b16 %v1695, %v1693
  %1728 = vmatprep.subr.bf16.mxu0 %v1697
  %1729 = vmatpush1.bf16.msra.mxu0 %v1696
  %1730 = vmatprep.subr.bf16.mxu0 %v1699
  %1731 = vmatpush1.bf16.msra.mxu0 %v1698
  %1732 = vmatprep.subr.bf16.mxu0 %v1701
  %1733 = vmatpush1.bf16.msra.mxu0 %v1700
  %1734 = vmatprep.subr.bf16.mxu0 %v1703
  %1735 = vmatpush1.bf16.msra.mxu0 %v1702
  %1736 = vmatprep.subr.bf16.mxu0 %v1705
  %1737 = vmatpush1.bf16.msra.mxu0 %v1704
  %1738 = vmatprep.subr.bf16.mxu0 %v1707
  %1739 = vmatpush1.bf16.msra.mxu0 %v1706
  %1740 = vmatprep.subr.bf16.mxu0 %v1709
  %1741 = vmatpush1.bf16.msra.mxu0 %v1708
  %1742 = vmatprep.subr.bf16.mxu0 %v1711
  %1743 = vmatpush1.bf16.msra.mxu0 %v1710
  %1744 = vmatprep.subr.bf16.mxu0 0
  %1745 = vmatpush1.bf16.msra.mxu0 0
  %1746 = vmatprep.subr.bf16.mxu0 0
  %1747 = vmatpush1.bf16.msra.mxu0 0
  %1748 = vmatprep.subr.bf16.mxu0 0
  %1749 = vmatpush1.bf16.msra.mxu0 0
  %1750 = vmatprep.subr.bf16.mxu0 0
  %1751 = vmatpush1.bf16.msra.mxu0 0
  %1752 = vmatprep.subr.bf16.mxu0 0
  %1753 = vmatpush1.bf16.msra.mxu0 0
  %1754 = vmatprep.subr.bf16.mxu0 0
  %1755 = vmatpush1.bf16.msra.mxu0 0
  %1756 = vmatprep.subr.bf16.mxu0 0
  %1757 = vmatpush1.bf16.msra.mxu0 0
  %1758 = vmatprep.subr.bf16.mxu0 0
  %1759 = vmatpush1.bf16.msra.mxu0 0
  %1760 = vmatprep.mubr.bf16.mxu0 0
  %1761 = vmatmul.mubr.bf16.gmra.mrb[0].mxu0 %v1252
  %v1762 = vpop.f32.mrb[0].mxu0
  %v1763 = vadd.f32 0.0, %v1762
  %v1764 = vpop.f32.mrb[0].mxu0
  %v1765 = vadd.f32 0.0, %v1764
  %v1766 = vpop.f32.mrb[0].mxu0
  %v1767 = vadd.f32 0.0, %v1766
  %v1768 = vpop.f32.mrb[0].mxu0
  %v1769 = vadd.f32 0.0, %v1768
  %1770 = vmatprep.mubr.bf16.mxu0 0
  %1771 = vmatmul.mubr.bf16.gmra.mrb[0].mxu0 %v1253
  %v1772 = vpop.f32.mrb[0].mxu0
  %v1773 = vadd.f32 0.0, %v1772
  %v1774 = vpop.f32.mrb[0].mxu0
  %v1775 = vadd.f32 0.0, %v1774
  %v1776 = vpop.f32.mrb[0].mxu0
  %v1777 = vadd.f32 0.0, %v1776
  %v1778 = vpop.f32.mrb[0].mxu0
  %v1779 = vadd.f32 0.0, %v1778
  %1780 = vdwg.mxu0
  %v1781 = vmax.f32 %v1763, %v1773
  %v1782 = vmax.f32 %v1767, %v1777
  %v1783 = vmax.f32 %v1781, %v1782
  %v1784 = vrot.slane %v1783, 4
  %v1785 = vmax.f32 %v1783, %v1784
  %v1786 = vrot.slane %v1785, 2
  %v1787 = vmax.f32 %v1785, %v1786
  %v1788 = vrot.slane %v1787, 1
  %v1789 = vmax.f32 %v1787, %v1788
  %v1790 = vmax.f32 %v1765, %v1775
  %v1791 = vmax.f32 %v1769, %v1779
  %v1792 = vmax.f32 %v1790, %v1791
  %v1793 = vrot.slane %v1792, 4
  %v1794 = vmax.f32 %v1792, %v1793
  %v1795 = vrot.slane %v1794, 2
  %v1796 = vmax.f32 %v1794, %v1795
  %v1797 = vrot.slane %v1796, 1
  %v1798 = vmax.f32 %v1796, %v1797
  %s1799 = scalar_lea.vmem [#allocation2], 9
  %v1800 = vld [vmem:[%s1799] ss:$2 sm:$0x3]
  %v1803 = vcombine.low %v1789, %v1798
  %v1805 = vunpack.c.l.s4 1966171168
  %v1806 = vunpack.c.0.s8 %v1805
  %v1807 = vlaneseq
  %v1808 = vshrl.u32 %v1807, 7
  %v1809 = vsub.s32 %v1806, %v1808
  %v1810 = vrot.slane %v1803, %v1809
  %v1812 = vunpack.c.l.s4 1966171168
  %v1813 = vunpack.c.0.s8 %v1812
  %v1814 = vlaneseq
  %v1815 = vshrl.u32 %v1814, 7
  %v1816 = vsub.s32 %v1813, %v1815
  %v1817 = vrot.slane %v1810, %v1816
  %v1819 = vmax.f32 %v1800, %v1817
  %1820 = vst.msk [vmem:[%s1799] ss:$2 sm:$0x3] %vm463, %v1819
  %v1821 = vld [vmem:[%s5 + $0x18] sm:$0xff]
  %v1822 = vld [vmem:[%s5 + $0x38] sm:$0xff]
  %v1823 = vld [vmem:[%s5 + $0x58] sm:$0xff]
  %v1824 = vld [vmem:[%s5 + $0x78] sm:$0xff]
  %v1825 = vld [vmem:[%s5 + $0x98] sm:$0xff]
  %v1826 = vld [vmem:[%s5 + $0xb8] sm:$0xff]
  %v1827 = vld [vmem:[%s5 + $0xd8] sm:$0xff]
  %v1828 = vld [vmem:[%s5 + $0xf8] sm:$0xff]
  %v1829 = vld [vmem:[%s5 + $0x118] sm:$0xff]
  %v1830 = vld [vmem:[%s5 + $0x138] sm:$0xff]
  %v1831 = vld [vmem:[%s5 + $0x158] sm:$0xff]
  %v1832 = vld [vmem:[%s5 + $0x178] sm:$0xff]
  %v1833 = vld [vmem:[%s5 + $0x198] sm:$0xff]
  %v1834 = vld [vmem:[%s5 + $0x1b8] sm:$0xff]
  %v1835 = vld [vmem:[%s5 + $0x1d8] sm:$0xff]
  %v1836 = vld [vmem:[%s5 + $0x1f8] sm:$0xff]
  %v1853 = vunpack.c.l.b16 %v1821
  %v1854 = vunpack.c.h.b16 %v1821
  %v1855 = vunpack.c.l.b16 %v1822
  %v1856 = vunpack.c.h.b16 %v1822
  %v1857 = vunpack.c.l.b16 %v1823
  %v1858 = vunpack.c.h.b16 %v1823
  %v1859 = vunpack.c.l.b16 %v1824
  %v1860 = vunpack.c.h.b16 %v1824
  %v1861 = vunpack.c.l.b16 %v1825
  %v1862 = vunpack.c.h.b16 %v1825
  %v1863 = vunpack.c.l.b16 %v1826
  %v1864 = vunpack.c.h.b16 %v1826
  %v1865 = vunpack.c.l.b16 %v1827
  %v1866 = vunpack.c.h.b16 %v1827
  %v1867 = vunpack.c.l.b16 %v1828
  %v1868 = vunpack.c.h.b16 %v1828
  %v1869 = vunpack.c.l.b16 %v1829
  %v1870 = vunpack.c.h.b16 %v1829
  %v1871 = vunpack.c.l.b16 %v1830
  %v1872 = vunpack.c.h.b16 %v1830
  %v1873 = vunpack.c.l.b16 %v1831
  %v1874 = vunpack.c.h.b16 %v1831
  %v1875 = vunpack.c.l.b16 %v1832
  %v1876 = vunpack.c.h.b16 %v1832
  %v1877 = vunpack.c.l.b16 %v1833
  %v1878 = vunpack.c.h.b16 %v1833
  %v1879 = vunpack.c.l.b16 %v1834
  %v1880 = vunpack.c.h.b16 %v1834
  %v1881 = vunpack.c.l.b16 %v1835
  %v1882 = vunpack.c.h.b16 %v1835
  %v1883 = vunpack.c.l.b16 %v1836
  %v1884 = vunpack.c.h.b16 %v1836
  %v1885 = vpack.c.b16 %v1855, %v1853
  %v1886 = vpack.c.b16 %v1856, %v1854
  %v1887 = vpack.c.b16 %v1859, %v1857
  %v1888 = vpack.c.b16 %v1860, %v1858
  %v1889 = vpack.c.b16 %v1863, %v1861
  %v1890 = vpack.c.b16 %v1864, %v1862
  %v1891 = vpack.c.b16 %v1867, %v1865
  %v1892 = vpack.c.b16 %v1868, %v1866
  %v1893 = vpack.c.b16 %v1871, %v1869
  %v1894 = vpack.c.b16 %v1872, %v1870
  %v1895 = vpack.c.b16 %v1875, %v1873
  %v1896 = vpack.c.b16 %v1876, %v1874
  %v1897 = vpack.c.b16 %v1879, %v1877
  %v1898 = vpack.c.b16 %v1880, %v1878
  %v1899 = vpack.c.b16 %v1883, %v1881
  %v1900 = vpack.c.b16 %v1884, %v1882
  %1917 = vmatprep.subr.bf16.mxu0 %v1886
  %1918 = vmatpush1.bf16.msra.mxu0 %v1885
  %1919 = vmatprep.subr.bf16.mxu0 %v1888
  %1920 = vmatpush1.bf16.msra.mxu0 %v1887
  %1921 = vmatprep.subr.bf16.mxu0 %v1890
  %1922 = vmatpush1.bf16.msra.mxu0 %v1889
  %1923 = vmatprep.subr.bf16.mxu0 %v1892
  %1924 = vmatpush1.bf16.msra.mxu0 %v1891
  %1925 = vmatprep.subr.bf16.mxu0 %v1894
  %1926 = vmatpush1.bf16.msra.mxu0 %v1893
  %1927 = vmatprep.subr.bf16.mxu0 %v1896
  %1928 = vmatpush1.bf16.msra.mxu0 %v1895
  %1929 = vmatprep.subr.bf16.mxu0 %v1898
  %1930 = vmatpush1.bf16.msra.mxu0 %v1897
  %1931 = vmatprep.subr.bf16.mxu0 %v1900
  %1932 = vmatpush1.bf16.msra.mxu0 %v1899
  %1933 = vmatprep.subr.bf16.mxu0 0
  %1934 = vmatpush1.bf16.msra.mxu0 0
  %1935 = vmatprep.subr.bf16.mxu0 0
  %1936 = vmatpush1.bf16.msra.mxu0 0
  %1937 = vmatprep.subr.bf16.mxu0 0
  %1938 = vmatpush1.bf16.msra.mxu0 0
  %1939 = vmatprep.subr.bf16.mxu0 0
  %1940 = vmatpush1.bf16.msra.mxu0 0
  %1941 = vmatprep.subr.bf16.mxu0 0
  %1942 = vmatpush1.bf16.msra.mxu0 0
  %1943 = vmatprep.subr.bf16.mxu0 0
  %1944 = vmatpush1.bf16.msra.mxu0 0
  %1945 = vmatprep.subr.bf16.mxu0 0
  %1946 = vmatpush1.bf16.msra.mxu0 0
  %1947 = vmatprep.subr.bf16.mxu0 0
  %1948 = vmatpush1.bf16.msra.mxu0 0
  %1949 = vmatprep.mubr.bf16.mxu0 0
  %1950 = vmatmul.mubr.bf16.gmra.mrb[0].mxu0 %v1252
  %v1951 = vpop.f32.mrb[0].mxu0
  %v1952 = vadd.f32 0.0, %v1951
  %v1953 = vpop.f32.mrb[0].mxu0
  %v1954 = vadd.f32 0.0, %v1953
  %v1955 = vpop.f32.mrb[0].mxu0
  %v1956 = vadd.f32 0.0, %v1955
  %v1957 = vpop.f32.mrb[0].mxu0
  %v1958 = vadd.f32 0.0, %v1957
  %1959 = vmatprep.mubr.bf16.mxu0 0
  %1960 = vmatmul.mubr.bf16.gmra.mrb[0].mxu0 %v1253
  %v1961 = vpop.f32.mrb[0].mxu0
  %v1962 = vadd.f32 0.0, %v1961
  %v1963 = vpop.f32.mrb[0].mxu0
  %v1964 = vadd.f32 0.0, %v1963
  %v1965 = vpop.f32.mrb[0].mxu0
  %v1966 = vadd.f32 0.0, %v1965
  %v1967 = vpop.f32.mrb[0].mxu0
  %v1968 = vadd.f32 0.0, %v1967
  %1969 = vdwg.mxu0
  %v1970 = vmax.f32 %v1952, %v1962
  %v1971 = vmax.f32 %v1956, %v1966
  %v1972 = vmax.f32 %v1970, %v1971
  %v1973 = vrot.slane %v1972, 4
  %v1974 = vmax.f32 %v1972, %v1973
  %v1975 = vrot.slane %v1974, 2
  %v1976 = vmax.f32 %v1974, %v1975
  %v1977 = vrot.slane %v1976, 1
  %v1978 = vmax.f32 %v1976, %v1977
  %v1979 = vmax.f32 %v1954, %v1964
  %v1980 = vmax.f32 %v1958, %v1968
  %v1981 = vmax.f32 %v1979, %v1980
  %v1982 = vrot.slane %v1981, 4
  %v1983 = vmax.f32 %v1981, %v1982
  %v1984 = vrot.slane %v1983, 2
  %v1985 = vmax.f32 %v1983, %v1984
  %v1986 = vrot.slane %v1985, 1
  %v1987 = vmax.f32 %v1985, %v1986
  %s1988 = scalar_lea.vmem [#allocation2], 13
  %v1989 = vld [vmem:[%s1988] ss:$2 sm:$0x3]
  %v1992 = vcombine.low %v1978, %v1987
  %v1994 = vunpack.c.l.s4 1966171168
  %v1995 = vunpack.c.0.s8 %v1994
  %v1996 = vlaneseq
  %v1997 = vshrl.u32 %v1996, 7
  %v1998 = vsub.s32 %v1995, %v1997
  %v1999 = vrot.slane %v1992, %v1998
  %v2001 = vunpack.c.l.s4 1966171168
  %v2002 = vunpack.c.0.s8 %v2001
  %v2003 = vlaneseq
  %v2004 = vshrl.u32 %v2003, 7
  %v2005 = vsub.s32 %v2002, %v2004
  %v2006 = vrot.slane %v1999, %v2005
  %v2008 = vmax.f32 %v1989, %v2006
  %2009 = vst.msk [vmem:[%s1988] ss:$2 sm:$0x3] %vm463, %v2008
  // Predicated region
  $region58: #{stnkd_forward.1} parent=0 // pred_check
    %p2010 = pneg %p45
  $region59: #{stnkd_forward.1} parent=0 // pred_check_branch
    %2012 = sbr.rel (%p2010) target = $region61
  $region60: #{stnkd_forward.1} parent=0 // pred_region
    %v2013 = vld [vmem:[#allocation2] sm:$0xff]
    %v2014 = vld [vmem:[#allocation2 + $0x8] sm:$0xff]
    %v2015 = vld [vmem:[%s6] sm:$0xff]
    %v2017 = vlaneseq
    %v2018 = vshrl.u32 %v2017, 7
    %v2019 = vsub.s32 0, %v2018
    %v2020 = vrot.slane %v2015, %v2019
    %v2021 = vlaneseq
    %v2022 = vshrl.u32 %v2021, 7
    %v2023 = vsub.s32 1, %v2022
    %v2024 = vrot.slane %v2015, %v2023
    %v2025 = vlaneseq
    %v2026 = vshrl.u32 %v2025, 7
    %v2027 = vsub.s32 2, %v2026
    %v2028 = vrot.slane %v2015, %v2027
    %v2029 = vlaneseq
    %v2030 = vshrl.u32 %v2029, 7
    %v2031 = vsub.s32 3, %v2030
    %v2032 = vrot.slane %v2015, %v2031
    %v2033 = vlaneseq
    %v2034 = vshrl.u32 %v2033, 7
    %v2035 = vsub.s32 4, %v2034
    %v2036 = vrot.slane %v2015, %v2035
    %v2037 = vlaneseq
    %v2038 = vshrl.u32 %v2037, 7
    %v2039 = vsub.s32 5, %v2038
    %v2040 = vrot.slane %v2015, %v2039
    %v2041 = vlaneseq
    %v2042 = vshrl.u32 %v2041, 7
    %v2043 = vsub.s32 6, %v2042
    %v2044 = vrot.slane %v2015, %v2043
    %v2045 = vlaneseq
    %v2046 = vshrl.u32 %v2045, 7
    %v2047 = vsub.s32 7, %v2046
    %v2048 = vrot.slane %v2015, %v2047
    %v2049 = vcombine.low %v2020, %v2024
    %v2050 = vcombine.low %v2028, %v2032
    %v2052 = vunpack.c.l.s4 1983009808
    %v2053 = vunpack.c.0.s8 %v2052
    %v2054 = vlaneseq
    %v2055 = vshrl.u32 %v2054, 7
    %v2056 = vsub.s32 %v2053, %v2055
    %v2057 = vrot.slane %v2049, %v2056
    %v2059 = vunpack.c.l.s4 1983009808
    %v2060 = vunpack.c.0.s8 %v2059
    %v2061 = vlaneseq
    %v2062 = vshrl.u32 %v2061, 7
    %v2063 = vsub.s32 %v2060, %v2062
    %v2064 = vrot.slane %v2050, %v2063
    %v2065 = vcombine.low %v2057, %v2064
    %v2066 = vcombine.low %v2036, %v2040
    %v2067 = vcombine.low %v2044, %v2048
    %v2069 = vunpack.c.l.s4 1983009808
    %v2070 = vunpack.c.0.s8 %v2069
    %v2071 = vlaneseq
    %v2072 = vshrl.u32 %v2071, 7
    %v2073 = vsub.s32 %v2070, %v2072
    %v2074 = vrot.slane %v2066, %v2073
    %v2076 = vunpack.c.l.s4 1983009808
    %v2077 = vunpack.c.0.s8 %v2076
    %v2078 = vlaneseq
    %v2079 = vshrl.u32 %v2078, 7
    %v2080 = vsub.s32 %v2077, %v2079
    %v2081 = vrot.slane %v2067, %v2080
    %v2082 = vcombine.low %v2074, %v2081
    %v2085 = vadd.f32 %v2013, %v2065
    %v2086 = vadd.f32 %v2014, %v2082
    %v2087 = vmax.f32 %v2085, 0.0
    %v2088 = vmax.f32 %v2086, 0.0
    %v2091 = vcombine.high %v2087, %v2087
    %v2093 = vunpack.c.l.s4 1983009808
    %v2094 = vunpack.c.0.s8 %v2093
    %v2095 = vlaneseq
    %v2096 = vshrl.u32 %v2095, 7
    %v2097 = vsub.s32 %v2094, %v2096
    %v2098 = vrot.slane %v2087, %v2097
    %v2100 = vunpack.c.l.s4 1983009808
    %v2101 = vunpack.c.0.s8 %v2100
    %v2102 = vlaneseq
    %v2103 = vshrl.u32 %v2102, 7
    %v2104 = vsub.s32 %v2101, %v2103
    %v2105 = vrot.slane %v2091, %v2104
    %v2106 = vcombine.high %v2098, %v2098
    %v2107 = vcombine.high %v2105, %v2105
    %v2108 = vcombine.high %v2088, %v2088
    %v2110 = vunpack.c.l.s4 1983009808
    %v2111 = vunpack.c.0.s8 %v2110
    %v2112 = vlaneseq
    %v2113 = vshrl.u32 %v2112, 7
    %v2114 = vsub.s32 %v2111, %v2113
    %v2115 = vrot.slane %v2088, %v2114
    %v2117 = vunpack.c.l.s4 1983009808
    %v2118 = vunpack.c.0.s8 %v2117
    %v2119 = vlaneseq
    %v2120 = vshrl.u32 %v2119, 7
    %v2121 = vsub.s32 %v2118, %v2120
    %v2122 = vrot.slane %v2108, %v2121
    %v2123 = vcombine.high %v2115, %v2115
    %v2124 = vcombine.high %v2122, %v2122
    %v2133 = vpack.c.bf16 %v2098, %v2098
    %v2134 = vpack.c.bf16 %v2106, %v2106
    %v2135 = vpack.c.bf16 %v2105, %v2105
    %v2136 = vpack.c.bf16 %v2107, %v2107
    %v2137 = vpack.c.bf16 %v2115, %v2115
    %v2138 = vpack.c.bf16 %v2123, %v2123
    %v2139 = vpack.c.bf16 %v2122, %v2122
    %v2140 = vpack.c.bf16 %v2124, %v2124
    %v2141 = vld [vmem:[%s7] sm:$0xff]
    %v2142 = vld [vmem:[%s7 + $0x8] sm:$0xff]
    %v2143 = vld [vmem:[%s7 + $0x10] sm:$0xff]
    %v2144 = vld [vmem:[%s7 + $0x18] sm:$0xff]
    %v2145 = vld [vmem:[%s7 + $0x20] sm:$0xff]
    %v2146 = vld [vmem:[%s7 + $0x28] sm:$0xff]
    %v2147 = vld [vmem:[%s7 + $0x30] sm:$0xff]
    %v2148 = vld [vmem:[%s7 + $0x38] sm:$0xff]
    %v2149 = vld [vmem:[%s7 + $0x40] sm:$0xff]
    %v2150 = vld [vmem:[%s7 + $0x48] sm:$0xff]
    %v2151 = vld [vmem:[%s7 + $0x50] sm:$0xff]
    %v2152 = vld [vmem:[%s7 + $0x58] sm:$0xff]
    %v2153 = vld [vmem:[%s7 + $0x60] sm:$0xff]
    %v2154 = vld [vmem:[%s7 + $0x68] sm:$0xff]
    %v2155 = vld [vmem:[%s7 + $0x70] sm:$0xff]
    %v2156 = vld [vmem:[%s7 + $0x78] sm:$0xff]
    %v2157 = vld [vmem:[%s7 + $0x80] sm:$0xff]
    %v2158 = vld [vmem:[%s7 + $0x88] sm:$0xff]
    %v2159 = vld [vmem:[%s7 + $0x90] sm:$0xff]
    %v2160 = vld [vmem:[%s7 + $0x98] sm:$0xff]
    %v2161 = vld [vmem:[%s7 + $0xa0] sm:$0xff]
    %v2162 = vld [vmem:[%s7 + $0xa8] sm:$0xff]
    %v2163 = vld [vmem:[%s7 + $0xb0] sm:$0xff]
    %v2164 = vld [vmem:[%s7 + $0xb8] sm:$0xff]
    %v2165 = vld [vmem:[%s7 + $0xc0] sm:$0xff]
    %v2166 = vld [vmem:[%s7 + $0xc8] sm:$0xff]
    %v2167 = vld [vmem:[%s7 + $0xd0] sm:$0xff]
    %v2168 = vld [vmem:[%s7 + $0xd8] sm:$0xff]
    %v2169 = vld [vmem:[%s7 + $0xe0] sm:$0xff]
    %v2170 = vld [vmem:[%s7 + $0xe8] sm:$0xff]
    %v2171 = vld [vmem:[%s7 + $0xf0] sm:$0xff]
    %v2172 = vld [vmem:[%s7 + $0xf8] sm:$0xff]
    %v2173 = vld [vmem:[%s7 + $0x100] sm:$0xff]
    %v2174 = vld [vmem:[%s7 + $0x108] sm:$0xff]
    %v2175 = vld [vmem:[%s7 + $0x110] sm:$0xff]
    %v2176 = vld [vmem:[%s7 + $0x118] sm:$0xff]
    %v2177 = vld [vmem:[%s7 + $0x120] sm:$0xff]
    %v2178 = vld [vmem:[%s7 + $0x128] sm:$0xff]
    %v2179 = vld [vmem:[%s7 + $0x130] sm:$0xff]
    %v2180 = vld [vmem:[%s7 + $0x138] sm:$0xff]
    %v2181 = vld [vmem:[%s7 + $0x140] sm:$0xff]
    %v2182 = vld [vmem:[%s7 + $0x148] sm:$0xff]
    %v2183 = vld [vmem:[%s7 + $0x150] sm:$0xff]
    %v2184 = vld [vmem:[%s7 + $0x158] sm:$0xff]
    %v2185 = vld [vmem:[%s7 + $0x160] sm:$0xff]
    %v2186 = vld [vmem:[%s7 + $0x168] sm:$0xff]
    %v2187 = vld [vmem:[%s7 + $0x170] sm:$0xff]
    %v2188 = vld [vmem:[%s7 + $0x178] sm:$0xff]
    %v2189 = vld [vmem:[%s7 + $0x180] sm:$0xff]
    %v2190 = vld [vmem:[%s7 + $0x188] sm:$0xff]
    %v2191 = vld [vmem:[%s7 + $0x190] sm:$0xff]
    %v2192 = vld [vmem:[%s7 + $0x198] sm:$0xff]
    %v2193 = vld [vmem:[%s7 + $0x1a0] sm:$0xff]
    %v2194 = vld [vmem:[%s7 + $0x1a8] sm:$0xff]
    %v2195 = vld [vmem:[%s7 + $0x1b0] sm:$0xff]
    %v2196 = vld [vmem:[%s7 + $0x1b8] sm:$0xff]
    %v2197 = vld [vmem:[%s7 + $0x1c0] sm:$0xff]
    %v2198 = vld [vmem:[%s7 + $0x1c8] sm:$0xff]
    %v2199 = vld [vmem:[%s7 + $0x1d0] sm:$0xff]
    %v2200 = vld [vmem:[%s7 + $0x1d8] sm:$0xff]
    %v2201 = vld [vmem:[%s7 + $0x1e0] sm:$0xff]
    %v2202 = vld [vmem:[%s7 + $0x1e8] sm:$0xff]
    %v2203 = vld [vmem:[%s7 + $0x1f0] sm:$0xff]
    %v2204 = vld [vmem:[%s7 + $0x1f8] sm:$0xff]
    %v2205 = vld [vmem:[%s7 + $0x200] sm:$0xff]
    %v2206 = vld [vmem:[%s7 + $0x208] sm:$0xff]
    %v2207 = vld [vmem:[%s7 + $0x210] sm:$0xff]
    %v2208 = vld [vmem:[%s7 + $0x218] sm:$0xff]
    %v2209 = vld [vmem:[%s7 + $0x220] sm:$0xff]
    %v2210 = vld [vmem:[%s7 + $0x228] sm:$0xff]
    %v2211 = vld [vmem:[%s7 + $0x230] sm:$0xff]
    %v2212 = vld [vmem:[%s7 + $0x238] sm:$0xff]
    %v2213 = vld [vmem:[%s7 + $0x240] sm:$0xff]
    %v2214 = vld [vmem:[%s7 + $0x248] sm:$0xff]
    %v2215 = vld [vmem:[%s7 + $0x250] sm:$0xff]
    %v2216 = vld [vmem:[%s7 + $0x258] sm:$0xff]
    %v2217 = vld [vmem:[%s7 + $0x260] sm:$0xff]
    %v2218 = vld [vmem:[%s7 + $0x268] sm:$0xff]
    %v2219 = vld [vmem:[%s7 + $0x270] sm:$0xff]
    %v2220 = vld [vmem:[%s7 + $0x278] sm:$0xff]
    %v2221 = vld [vmem:[%s7 + $0x280] sm:$0xff]
    %v2222 = vld [vmem:[%s7 + $0x288] sm:$0xff]
    %v2223 = vld [vmem:[%s7 + $0x290] sm:$0xff]
    %v2224 = vld [vmem:[%s7 + $0x298] sm:$0xff]
    %v2225 = vld [vmem:[%s7 + $0x2a0] sm:$0xff]
    %v2226 = vld [vmem:[%s7 + $0x2a8] sm:$0xff]
    %v2227 = vld [vmem:[%s7 + $0x2b0] sm:$0xff]
    %v2228 = vld [vmem:[%s7 + $0x2b8] sm:$0xff]
    %v2229 = vld [vmem:[%s7 + $0x2c0] sm:$0xff]
    %v2230 = vld [vmem:[%s7 + $0x2c8] sm:$0xff]
    %v2231 = vld [vmem:[%s7 + $0x2d0] sm:$0xff]
    %v2232 = vld [vmem:[%s7 + $0x2d8] sm:$0xff]
    %v2233 = vld [vmem:[%s7 + $0x2e0] sm:$0xff]
    %v2234 = vld [vmem:[%s7 + $0x2e8] sm:$0xff]
    %v2235 = vld [vmem:[%s7 + $0x2f0] sm:$0xff]
    %v2236 = vld [vmem:[%s7 + $0x2f8] sm:$0xff]
    %v2237 = vld [vmem:[%s7 + $0x300] sm:$0xff]
    %v2238 = vld [vmem:[%s7 + $0x308] sm:$0xff]
    %v2239 = vld [vmem:[%s7 + $0x310] sm:$0xff]
    %v2240 = vld [vmem:[%s7 + $0x318] sm:$0xff]
    %v2241 = vld [vmem:[%s7 + $0x320] sm:$0xff]
    %v2242 = vld [vmem:[%s7 + $0x328] sm:$0xff]
    %v2243 = vld [vmem:[%s7 + $0x330] sm:$0xff]
    %v2244 = vld [vmem:[%s7 + $0x338] sm:$0xff]
    %v2245 = vld [vmem:[%s7 + $0x340] sm:$0xff]
    %v2246 = vld [vmem:[%s7 + $0x348] sm:$0xff]
    %v2247 = vld [vmem:[%s7 + $0x350] sm:$0xff]
    %v2248 = vld [vmem:[%s7 + $0x358] sm:$0xff]
    %v2249 = vld [vmem:[%s7 + $0x360] sm:$0xff]
    %v2250 = vld [vmem:[%s7 + $0x368] sm:$0xff]
    %v2251 = vld [vmem:[%s7 + $0x370] sm:$0xff]
    %v2252 = vld [vmem:[%s7 + $0x378] sm:$0xff]
    %v2253 = vld [vmem:[%s7 + $0x380] sm:$0xff]
    %v2254 = vld [vmem:[%s7 + $0x388] sm:$0xff]
    %v2255 = vld [vmem:[%s7 + $0x390] sm:$0xff]
    %v2256 = vld [vmem:[%s7 + $0x398] sm:$0xff]
    %v2257 = vld [vmem:[%s7 + $0x3a0] sm:$0xff]
    %v2258 = vld [vmem:[%s7 + $0x3a8] sm:$0xff]
    %v2259 = vld [vmem:[%s7 + $0x3b0] sm:$0xff]
    %v2260 = vld [vmem:[%s7 + $0x3b8] sm:$0xff]
    %v2261 = vld [vmem:[%s7 + $0x3c0] sm:$0xff]
    %v2262 = vld [vmem:[%s7 + $0x3c8] sm:$0xff]
    %v2263 = vld [vmem:[%s7 + $0x3d0] sm:$0xff]
    %v2264 = vld [vmem:[%s7 + $0x3d8] sm:$0xff]
    %v2265 = vld [vmem:[%s7 + $0x3e0] sm:$0xff]
    %v2266 = vld [vmem:[%s7 + $0x3e8] sm:$0xff]
    %v2267 = vld [vmem:[%s7 + $0x3f0] sm:$0xff]
    %v2268 = vld [vmem:[%s7 + $0x3f8] sm:$0xff]
    %v2269 = vld [vmem:[%s7 + $0x400] sm:$0xff]
    %v2270 = vld [vmem:[%s7 + $0x408] sm:$0xff]
    %v2271 = vld [vmem:[%s7 + $0x410] sm:$0xff]
    %v2272 = vld [vmem:[%s7 + $0x418] sm:$0xff]
    %v2273 = vld [vmem:[%s7 + $0x420] sm:$0xff]
    %v2274 = vld [vmem:[%s7 + $0x428] sm:$0xff]
    %v2275 = vld [vmem:[%s7 + $0x430] sm:$0xff]
    %v2276 = vld [vmem:[%s7 + $0x438] sm:$0xff]
    %v2277 = vld [vmem:[%s7 + $0x440] sm:$0xff]
    %v2278 = vld [vmem:[%s7 + $0x448] sm:$0xff]
    %v2279 = vld [vmem:[%s7 + $0x450] sm:$0xff]
    %v2280 = vld [vmem:[%s7 + $0x458] sm:$0xff]
    %v2281 = vld [vmem:[%s7 + $0x460] sm:$0xff]
    %v2282 = vld [vmem:[%s7 + $0x468] sm:$0xff]
    %v2283 = vld [vmem:[%s7 + $0x470] sm:$0xff]
    %v2284 = vld [vmem:[%s7 + $0x478] sm:$0xff]
    %v2285 = vld [vmem:[%s7 + $0x480] sm:$0xff]
    %v2286 = vld [vmem:[%s7 + $0x488] sm:$0xff]
    %v2287 = vld [vmem:[%s7 + $0x490] sm:$0xff]
    %v2288 = vld [vmem:[%s7 + $0x498] sm:$0xff]
    %v2289 = vld [vmem:[%s7 + $0x4a0] sm:$0xff]
    %v2290 = vld [vmem:[%s7 + $0x4a8] sm:$0xff]
    %v2291 = vld [vmem:[%s7 + $0x4b0] sm:$0xff]
    %v2292 = vld [vmem:[%s7 + $0x4b8] sm:$0xff]
    %v2293 = vld [vmem:[%s7 + $0x4c0] sm:$0xff]
    %v2294 = vld [vmem:[%s7 + $0x4c8] sm:$0xff]
    %v2295 = vld [vmem:[%s7 + $0x4d0] sm:$0xff]
    %v2296 = vld [vmem:[%s7 + $0x4d8] sm:$0xff]
    %v2297 = vld [vmem:[%s7 + $0x4e0] sm:$0xff]
    %v2298 = vld [vmem:[%s7 + $0x4e8] sm:$0xff]
    %v2299 = vld [vmem:[%s7 + $0x4f0] sm:$0xff]
    %v2300 = vld [vmem:[%s7 + $0x4f8] sm:$0xff]
    %v2301 = vld [vmem:[%s7 + $0x500] sm:$0xff]
    %v2302 = vld [vmem:[%s7 + $0x508] sm:$0xff]
    %v2303 = vld [vmem:[%s7 + $0x510] sm:$0xff]
    %v2304 = vld [vmem:[%s7 + $0x518] sm:$0xff]
    %v2305 = vld [vmem:[%s7 + $0x520] sm:$0xff]
    %v2306 = vld [vmem:[%s7 + $0x528] sm:$0xff]
    %v2307 = vld [vmem:[%s7 + $0x530] sm:$0xff]
    %v2308 = vld [vmem:[%s7 + $0x538] sm:$0xff]
    %v2309 = vld [vmem:[%s7 + $0x540] sm:$0xff]
    %v2310 = vld [vmem:[%s7 + $0x548] sm:$0xff]
    %v2311 = vld [vmem:[%s7 + $0x550] sm:$0xff]
    %v2312 = vld [vmem:[%s7 + $0x558] sm:$0xff]
    %v2313 = vld [vmem:[%s7 + $0x560] sm:$0xff]
    %v2314 = vld [vmem:[%s7 + $0x568] sm:$0xff]
    %v2315 = vld [vmem:[%s7 + $0x570] sm:$0xff]
    %v2316 = vld [vmem:[%s7 + $0x578] sm:$0xff]
    %v2317 = vld [vmem:[%s7 + $0x580] sm:$0xff]
    %v2318 = vld [vmem:[%s7 + $0x588] sm:$0xff]
    %v2319 = vld [vmem:[%s7 + $0x590] sm:$0xff]
    %v2320 = vld [vmem:[%s7 + $0x598] sm:$0xff]
    %v2321 = vld [vmem:[%s7 + $0x5a0] sm:$0xff]
    %v2322 = vld [vmem:[%s7 + $0x5a8] sm:$0xff]
    %v2323 = vld [vmem:[%s7 + $0x5b0] sm:$0xff]
    %v2324 = vld [vmem:[%s7 + $0x5b8] sm:$0xff]
    %v2325 = vld [vmem:[%s7 + $0x5c0] sm:$0xff]
    %v2326 = vld [vmem:[%s7 + $0x5c8] sm:$0xff]
    %v2327 = vld [vmem:[%s7 + $0x5d0] sm:$0xff]
    %v2328 = vld [vmem:[%s7 + $0x5d8] sm:$0xff]
    %v2329 = vld [vmem:[%s7 + $0x5e0] sm:$0xff]
    %v2330 = vld [vmem:[%s7 + $0x5e8] sm:$0xff]
    %v2331 = vld [vmem:[%s7 + $0x5f0] sm:$0xff]
    %v2332 = vld [vmem:[%s7 + $0x5f8] sm:$0xff]
    %v2333 = vld [vmem:[%s7 + $0x600] sm:$0xff]
    %v2334 = vld [vmem:[%s7 + $0x608] sm:$0xff]
    %v2335 = vld [vmem:[%s7 + $0x610] sm:$0xff]
    %v2336 = vld [vmem:[%s7 + $0x618] sm:$0xff]
    %v2337 = vld [vmem:[%s7 + $0x620] sm:$0xff]
    %v2338 = vld [vmem:[%s7 + $0x628] sm:$0xff]
    %v2339 = vld [vmem:[%s7 + $0x630] sm:$0xff]
    %v2340 = vld [vmem:[%s7 + $0x638] sm:$0xff]
    %v2341 = vld [vmem:[%s7 + $0x640] sm:$0xff]
    %v2342 = vld [vmem:[%s7 + $0x648] sm:$0xff]
    %v2343 = vld [vmem:[%s7 + $0x650] sm:$0xff]
    %v2344 = vld [vmem:[%s7 + $0x658] sm:$0xff]
    %v2345 = vld [vmem:[%s7 + $0x660] sm:$0xff]
    %v2346 = vld [vmem:[%s7 + $0x668] sm:$0xff]
    %v2347 = vld [vmem:[%s7 + $0x670] sm:$0xff]
    %v2348 = vld [vmem:[%s7 + $0x678] sm:$0xff]
    %v2349 = vld [vmem:[%s7 + $0x680] sm:$0xff]
    %v2350 = vld [vmem:[%s7 + $0x688] sm:$0xff]
    %v2351 = vld [vmem:[%s7 + $0x690] sm:$0xff]
    %v2352 = vld [vmem:[%s7 + $0x698] sm:$0xff]
    %v2353 = vld [vmem:[%s7 + $0x6a0] sm:$0xff]
    %v2354 = vld [vmem:[%s7 + $0x6a8] sm:$0xff]
    %v2355 = vld [vmem:[%s7 + $0x6b0] sm:$0xff]
    %v2356 = vld [vmem:[%s7 + $0x6b8] sm:$0xff]
    %v2357 = vld [vmem:[%s7 + $0x6c0] sm:$0xff]
    %v2358 = vld [vmem:[%s7 + $0x6c8] sm:$0xff]
    %v2359 = vld [vmem:[%s7 + $0x6d0] sm:$0xff]
    %v2360 = vld [vmem:[%s7 + $0x6d8] sm:$0xff]
    %v2361 = vld [vmem:[%s7 + $0x6e0] sm:$0xff]
    %v2362 = vld [vmem:[%s7 + $0x6e8] sm:$0xff]
    %v2363 = vld [vmem:[%s7 + $0x6f0] sm:$0xff]
    %v2364 = vld [vmem:[%s7 + $0x6f8] sm:$0xff]
    %v2365 = vld [vmem:[%s7 + $0x700] sm:$0xff]
    %v2366 = vld [vmem:[%s7 + $0x708] sm:$0xff]
    %v2367 = vld [vmem:[%s7 + $0x710] sm:$0xff]
    %v2368 = vld [vmem:[%s7 + $0x718] sm:$0xff]
    %v2369 = vld [vmem:[%s7 + $0x720] sm:$0xff]
    %v2370 = vld [vmem:[%s7 + $0x728] sm:$0xff]
    %v2371 = vld [vmem:[%s7 + $0x730] sm:$0xff]
    %v2372 = vld [vmem:[%s7 + $0x738] sm:$0xff]
    %v2373 = vld [vmem:[%s7 + $0x740] sm:$0xff]
    %v2374 = vld [vmem:[%s7 + $0x748] sm:$0xff]
    %v2375 = vld [vmem:[%s7 + $0x750] sm:$0xff]
    %v2376 = vld [vmem:[%s7 + $0x758] sm:$0xff]
    %v2377 = vld [vmem:[%s7 + $0x760] sm:$0xff]
    %v2378 = vld [vmem:[%s7 + $0x768] sm:$0xff]
    %v2379 = vld [vmem:[%s7 + $0x770] sm:$0xff]
    %v2380 = vld [vmem:[%s7 + $0x778] sm:$0xff]
    %v2381 = vld [vmem:[%s7 + $0x780] sm:$0xff]
    %v2382 = vld [vmem:[%s7 + $0x788] sm:$0xff]
    %v2383 = vld [vmem:[%s7 + $0x790] sm:$0xff]
    %v2384 = vld [vmem:[%s7 + $0x798] sm:$0xff]
    %v2385 = vld [vmem:[%s7 + $0x7a0] sm:$0xff]
    %v2386 = vld [vmem:[%s7 + $0x7a8] sm:$0xff]
    %v2387 = vld [vmem:[%s7 + $0x7b0] sm:$0xff]
    %v2388 = vld [vmem:[%s7 + $0x7b8] sm:$0xff]
    %v2389 = vld [vmem:[%s7 + $0x7c0] sm:$0xff]
    %v2390 = vld [vmem:[%s7 + $0x7c8] sm:$0xff]
    %v2391 = vld [vmem:[%s7 + $0x7d0] sm:$0xff]
    %v2392 = vld [vmem:[%s7 + $0x7d8] sm:$0xff]
    %v2393 = vld [vmem:[%s7 + $0x7e0] sm:$0xff]
    %v2394 = vld [vmem:[%s7 + $0x7e8] sm:$0xff]
    %v2395 = vld [vmem:[%s7 + $0x7f0] sm:$0xff]
    %v2396 = vld [vmem:[%s7 + $0x7f8] sm:$0xff]
    %v2397 = vld [vmem:[%s8] sm:$0xf]
    %v2399 = vlaneseq
    %v2400 = vshrl.u32 %v2399, 7
    %v2401 = vsub.s32 0, %v2400
    %v2402 = vrot.slane %v2397, %v2401
    %v2403 = vlaneseq
    %v2404 = vshrl.u32 %v2403, 7
    %v2405 = vsub.s32 1, %v2404
    %v2406 = vrot.slane %v2397, %v2405
    %v2407 = vlaneseq
    %v2408 = vshrl.u32 %v2407, 7
    %v2409 = vsub.s32 2, %v2408
    %v2410 = vrot.slane %v2397, %v2409
    %v2411 = vlaneseq
    %v2412 = vshrl.u32 %v2411, 7
    %v2413 = vsub.s32 3, %v2412
    %v2414 = vrot.slane %v2397, %v2413
    %v2675 = vunpack.c.l.b16 %v2141
    %v2676 = vunpack.c.h.b16 %v2141
    %v2677 = vunpack.c.l.b16 %v2142
    %v2678 = vunpack.c.h.b16 %v2142
    %v2679 = vunpack.c.l.b16 %v2143
    %v2680 = vunpack.c.h.b16 %v2143
    %v2681 = vunpack.c.l.b16 %v2144
    %v2682 = vunpack.c.h.b16 %v2144
    %v2683 = vunpack.c.l.b16 %v2145
    %v2684 = vunpack.c.h.b16 %v2145
    %v2685 = vunpack.c.l.b16 %v2146
    %v2686 = vunpack.c.h.b16 %v2146
    %v2687 = vunpack.c.l.b16 %v2147
    %v2688 = vunpack.c.h.b16 %v2147
    %v2689 = vunpack.c.l.b16 %v2148
    %v2690 = vunpack.c.h.b16 %v2148
    %v2691 = vunpack.c.l.b16 %v2149
    %v2692 = vunpack.c.h.b16 %v2149
    %v2693 = vunpack.c.l.b16 %v2150
    %v2694 = vunpack.c.h.b16 %v2150
    %v2695 = vunpack.c.l.b16 %v2151
    %v2696 = vunpack.c.h.b16 %v2151
    %v2697 = vunpack.c.l.b16 %v2152
    %v2698 = vunpack.c.h.b16 %v2152
    %v2699 = vunpack.c.l.b16 %v2153
    %v2700 = vunpack.c.h.b16 %v2153
    %v2701 = vunpack.c.l.b16 %v2154
    %v2702 = vunpack.c.h.b16 %v2154
    %v2703 = vunpack.c.l.b16 %v2155
    %v2704 = vunpack.c.h.b16 %v2155
    %v2705 = vunpack.c.l.b16 %v2156
    %v2706 = vunpack.c.h.b16 %v2156
    %v2707 = vunpack.c.l.b16 %v2157
    %v2708 = vunpack.c.h.b16 %v2157
    %v2709 = vunpack.c.l.b16 %v2158
    %v2710 = vunpack.c.h.b16 %v2158
    %v2711 = vunpack.c.l.b16 %v2159
    %v2712 = vunpack.c.h.b16 %v2159
    %v2713 = vunpack.c.l.b16 %v2160
    %v2714 = vunpack.c.h.b16 %v2160
    %v2715 = vunpack.c.l.b16 %v2161
    %v2716 = vunpack.c.h.b16 %v2161
    %v2717 = vunpack.c.l.b16 %v2162
    %v2718 = vunpack.c.h.b16 %v2162
    %v2719 = vunpack.c.l.b16 %v2163
    %v2720 = vunpack.c.h.b16 %v2163
    %v2721 = vunpack.c.l.b16 %v2164
    %v2722 = vunpack.c.h.b16 %v2164
    %v2723 = vunpack.c.l.b16 %v2165
    %v2724 = vunpack.c.h.b16 %v2165
    %v2725 = vunpack.c.l.b16 %v2166
    %v2726 = vunpack.c.h.b16 %v2166
    %v2727 = vunpack.c.l.b16 %v2167
    %v2728 = vunpack.c.h.b16 %v2167
    %v2729 = vunpack.c.l.b16 %v2168
    %v2730 = vunpack.c.h.b16 %v2168
    %v2731 = vunpack.c.l.b16 %v2169
    %v2732 = vunpack.c.h.b16 %v2169
    %v2733 = vunpack.c.l.b16 %v2170
    %v2734 = vunpack.c.h.b16 %v2170
    %v2735 = vunpack.c.l.b16 %v2171
    %v2736 = vunpack.c.h.b16 %v2171
    %v2737 = vunpack.c.l.b16 %v2172
    %v2738 = vunpack.c.h.b16 %v2172
    %v2739 = vunpack.c.l.b16 %v2173
    %v2740 = vunpack.c.h.b16 %v2173
    %v2741 = vunpack.c.l.b16 %v2174
    %v2742 = vunpack.c.h.b16 %v2174
    %v2743 = vunpack.c.l.b16 %v2175
    %v2744 = vunpack.c.h.b16 %v2175
    %v2745 = vunpack.c.l.b16 %v2176
    %v2746 = vunpack.c.h.b16 %v2176
    %v2747 = vunpack.c.l.b16 %v2177
    %v2748 = vunpack.c.h.b16 %v2177
    %v2749 = vunpack.c.l.b16 %v2178
    %v2750 = vunpack.c.h.b16 %v2178
    %v2751 = vunpack.c.l.b16 %v2179
    %v2752 = vunpack.c.h.b16 %v2179
    %v2753 = vunpack.c.l.b16 %v2180
    %v2754 = vunpack.c.h.b16 %v2180
    %v2755 = vunpack.c.l.b16 %v2181
    %v2756 = vunpack.c.h.b16 %v2181
    %v2757 = vunpack.c.l.b16 %v2182
    %v2758 = vunpack.c.h.b16 %v2182
    %v2759 = vunpack.c.l.b16 %v2183
    %v2760 = vunpack.c.h.b16 %v2183
    %v2761 = vunpack.c.l.b16 %v2184
    %v2762 = vunpack.c.h.b16 %v2184
    %v2763 = vunpack.c.l.b16 %v2185
    %v2764 = vunpack.c.h.b16 %v2185
    %v2765 = vunpack.c.l.b16 %v2186
    %v2766 = vunpack.c.h.b16 %v2186
    %v2767 = vunpack.c.l.b16 %v2187
    %v2768 = vunpack.c.h.b16 %v2187
    %v2769 = vunpack.c.l.b16 %v2188
    %v2770 = vunpack.c.h.b16 %v2188
    %v2771 = vunpack.c.l.b16 %v2189
    %v2772 = vunpack.c.h.b16 %v2189
    %v2773 = vunpack.c.l.b16 %v2190
    %v2774 = vunpack.c.h.b16 %v2190
    %v2775 = vunpack.c.l.b16 %v2191
    %v2776 = vunpack.c.h.b16 %v2191
    %v2777 = vunpack.c.l.b16 %v2192
    %v2778 = vunpack.c.h.b16 %v2192
    %v2779 = vunpack.c.l.b16 %v2193
    %v2780 = vunpack.c.h.b16 %v2193
    %v2781 = vunpack.c.l.b16 %v2194
    %v2782 = vunpack.c.h.b16 %v2194
    %v2783 = vunpack.c.l.b16 %v2195
    %v2784 = vunpack.c.h.b16 %v2195
    %v2785 = vunpack.c.l.b16 %v2196
    %v2786 = vunpack.c.h.b16 %v2196
    %v2787 = vunpack.c.l.b16 %v2197
    %v2788 = vunpack.c.h.b16 %v2197
    %v2789 = vunpack.c.l.b16 %v2198
    %v2790 = vunpack.c.h.b16 %v2198
    %v2791 = vunpack.c.l.b16 %v2199
    %v2792 = vunpack.c.h.b16 %v2199
    %v2793 = vunpack.c.l.b16 %v2200
    %v2794 = vunpack.c.h.b16 %v2200
    %v2795 = vunpack.c.l.b16 %v2201
    %v2796 = vunpack.c.h.b16 %v2201
    %v2797 = vunpack.c.l.b16 %v2202
    %v2798 = vunpack.c.h.b16 %v2202
    %v2799 = vunpack.c.l.b16 %v2203
    %v2800 = vunpack.c.h.b16 %v2203
    %v2801 = vunpack.c.l.b16 %v2204
    %v2802 = vunpack.c.h.b16 %v2204
    %v2803 = vunpack.c.l.b16 %v2205
    %v2804 = vunpack.c.h.b16 %v2205
    %v2805 = vunpack.c.l.b16 %v2206
    %v2806 = vunpack.c.h.b16 %v2206
    %v2807 = vunpack.c.l.b16 %v2207
    %v2808 = vunpack.c.h.b16 %v2207
    %v2809 = vunpack.c.l.b16 %v2208
    %v2810 = vunpack.c.h.b16 %v2208
    %v2811 = vunpack.c.l.b16 %v2209
    %v2812 = vunpack.c.h.b16 %v2209
    %v2813 = vunpack.c.l.b16 %v2210
    %v2814 = vunpack.c.h.b16 %v2210
    %v2815 = vunpack.c.l.b16 %v2211
    %v2816 = vunpack.c.h.b16 %v2211
    %v2817 = vunpack.c.l.b16 %v2212
    %v2818 = vunpack.c.h.b16 %v2212
    %v2819 = vunpack.c.l.b16 %v2213
    %v2820 = vunpack.c.h.b16 %v2213
    %v2821 = vunpack.c.l.b16 %v2214
    %v2822 = vunpack.c.h.b16 %v2214
    %v2823 = vunpack.c.l.b16 %v2215
    %v2824 = vunpack.c.h.b16 %v2215
    %v2825 = vunpack.c.l.b16 %v2216
    %v2826 = vunpack.c.h.b16 %v2216
    %v2827 = vunpack.c.l.b16 %v2217
    %v2828 = vunpack.c.h.b16 %v2217
    %v2829 = vunpack.c.l.b16 %v2218
    %v2830 = vunpack.c.h.b16 %v2218
    %v2831 = vunpack.c.l.b16 %v2219
    %v2832 = vunpack.c.h.b16 %v2219
    %v2833 = vunpack.c.l.b16 %v2220
    %v2834 = vunpack.c.h.b16 %v2220
    %v2835 = vunpack.c.l.b16 %v2221
    %v2836 = vunpack.c.h.b16 %v2221
    %v2837 = vunpack.c.l.b16 %v2222
    %v2838 = vunpack.c.h.b16 %v2222
    %v2839 = vunpack.c.l.b16 %v2223
    %v2840 = vunpack.c.h.b16 %v2223
    %v2841 = vunpack.c.l.b16 %v2224
    %v2842 = vunpack.c.h.b16 %v2224
    %v2843 = vunpack.c.l.b16 %v2225
    %v2844 = vunpack.c.h.b16 %v2225
    %v2845 = vunpack.c.l.b16 %v2226
    %v2846 = vunpack.c.h.b16 %v2226
    %v2847 = vunpack.c.l.b16 %v2227
    %v2848 = vunpack.c.h.b16 %v2227
    %v2849 = vunpack.c.l.b16 %v2228
    %v2850 = vunpack.c.h.b16 %v2228
    %v2851 = vunpack.c.l.b16 %v2229
    %v2852 = vunpack.c.h.b16 %v2229
    %v2853 = vunpack.c.l.b16 %v2230
    %v2854 = vunpack.c.h.b16 %v2230
    %v2855 = vunpack.c.l.b16 %v2231
    %v2856 = vunpack.c.h.b16 %v2231
    %v2857 = vunpack.c.l.b16 %v2232
    %v2858 = vunpack.c.h.b16 %v2232
    %v2859 = vunpack.c.l.b16 %v2233
    %v2860 = vunpack.c.h.b16 %v2233
    %v2861 = vunpack.c.l.b16 %v2234
    %v2862 = vunpack.c.h.b16 %v2234
    %v2863 = vunpack.c.l.b16 %v2235
    %v2864 = vunpack.c.h.b16 %v2235
    %v2865 = vunpack.c.l.b16 %v2236
    %v2866 = vunpack.c.h.b16 %v2236
    %v2867 = vunpack.c.l.b16 %v2237
    %v2868 = vunpack.c.h.b16 %v2237
    %v2869 = vunpack.c.l.b16 %v2238
    %v2870 = vunpack.c.h.b16 %v2238
    %v2871 = vunpack.c.l.b16 %v2239
    %v2872 = vunpack.c.h.b16 %v2239
    %v2873 = vunpack.c.l.b16 %v2240
    %v2874 = vunpack.c.h.b16 %v2240
    %v2875 = vunpack.c.l.b16 %v2241
    %v2876 = vunpack.c.h.b16 %v2241
    %v2877 = vunpack.c.l.b16 %v2242
    %v2878 = vunpack.c.h.b16 %v2242
    %v2879 = vunpack.c.l.b16 %v2243
    %v2880 = vunpack.c.h.b16 %v2243
    %v2881 = vunpack.c.l.b16 %v2244
    %v2882 = vunpack.c.h.b16 %v2244
    %v2883 = vunpack.c.l.b16 %v2245
    %v2884 = vunpack.c.h.b16 %v2245
    %v2885 = vunpack.c.l.b16 %v2246
    %v2886 = vunpack.c.h.b16 %v2246
    %v2887 = vunpack.c.l.b16 %v2247
    %v2888 = vunpack.c.h.b16 %v2247
    %v2889 = vunpack.c.l.b16 %v2248
    %v2890 = vunpack.c.h.b16 %v2248
    %v2891 = vunpack.c.l.b16 %v2249
    %v2892 = vunpack.c.h.b16 %v2249
    %v2893 = vunpack.c.l.b16 %v2250
    %v2894 = vunpack.c.h.b16 %v2250
    %v2895 = vunpack.c.l.b16 %v2251
    %v2896 = vunpack.c.h.b16 %v2251
    %v2897 = vunpack.c.l.b16 %v2252
    %v2898 = vunpack.c.h.b16 %v2252
    %v2899 = vunpack.c.l.b16 %v2253
    %v2900 = vunpack.c.h.b16 %v2253
    %v2901 = vunpack.c.l.b16 %v2254
    %v2902 = vunpack.c.h.b16 %v2254
    %v2903 = vunpack.c.l.b16 %v2255
    %v2904 = vunpack.c.h.b16 %v2255
    %v2905 = vunpack.c.l.b16 %v2256
    %v2906 = vunpack.c.h.b16 %v2256
    %v2907 = vunpack.c.l.b16 %v2257
    %v2908 = vunpack.c.h.b16 %v2257
    %v2909 = vunpack.c.l.b16 %v2258
    %v2910 = vunpack.c.h.b16 %v2258
    %v2911 = vunpack.c.l.b16 %v2259
    %v2912 = vunpack.c.h.b16 %v2259
    %v2913 = vunpack.c.l.b16 %v2260
    %v2914 = vunpack.c.h.b16 %v2260
    %v2915 = vunpack.c.l.b16 %v2261
    %v2916 = vunpack.c.h.b16 %v2261
    %v2917 = vunpack.c.l.b16 %v2262
    %v2918 = vunpack.c.h.b16 %v2262
    %v2919 = vunpack.c.l.b16 %v2263
    %v2920 = vunpack.c.h.b16 %v2263
    %v2921 = vunpack.c.l.b16 %v2264
    %v2922 = vunpack.c.h.b16 %v2264
    %v2923 = vunpack.c.l.b16 %v2265
    %v2924 = vunpack.c.h.b16 %v2265
    %v2925 = vunpack.c.l.b16 %v2266
    %v2926 = vunpack.c.h.b16 %v2266
    %v2927 = vunpack.c.l.b16 %v2267
    %v2928 = vunpack.c.h.b16 %v2267
    %v2929 = vunpack.c.l.b16 %v2268
    %v2930 = vunpack.c.h.b16 %v2268
    %v2931 = vunpack.c.l.b16 %v2269
    %v2932 = vunpack.c.h.b16 %v2269
    %v2933 = vunpack.c.l.b16 %v2270
    %v2934 = vunpack.c.h.b16 %v2270
    %v2935 = vunpack.c.l.b16 %v2271
    %v2936 = vunpack.c.h.b16 %v2271
    %v2937 = vunpack.c.l.b16 %v2272
    %v2938 = vunpack.c.h.b16 %v2272
    %v2939 = vunpack.c.l.b16 %v2273
    %v2940 = vunpack.c.h.b16 %v2273
    %v2941 = vunpack.c.l.b16 %v2274
    %v2942 = vunpack.c.h.b16 %v2274
    %v2943 = vunpack.c.l.b16 %v2275
    %v2944 = vunpack.c.h.b16 %v2275
    %v2945 = vunpack.c.l.b16 %v2276
    %v2946 = vunpack.c.h.b16 %v2276
    %v2947 = vunpack.c.l.b16 %v2277
    %v2948 = vunpack.c.h.b16 %v2277
    %v2949 = vunpack.c.l.b16 %v2278
    %v2950 = vunpack.c.h.b16 %v2278
    %v2951 = vunpack.c.l.b16 %v2279
    %v2952 = vunpack.c.h.b16 %v2279
    %v2953 = vunpack.c.l.b16 %v2280
    %v2954 = vunpack.c.h.b16 %v2280
    %v2955 = vunpack.c.l.b16 %v2281
    %v2956 = vunpack.c.h.b16 %v2281
    %v2957 = vunpack.c.l.b16 %v2282
    %v2958 = vunpack.c.h.b16 %v2282
    %v2959 = vunpack.c.l.b16 %v2283
    %v2960 = vunpack.c.h.b16 %v2283
    %v2961 = vunpack.c.l.b16 %v2284
    %v2962 = vunpack.c.h.b16 %v2284
    %v2963 = vunpack.c.l.b16 %v2285
    %v2964 = vunpack.c.h.b16 %v2285
    %v2965 = vunpack.c.l.b16 %v2286
    %v2966 = vunpack.c.h.b16 %v2286
    %v2967 = vunpack.c.l.b16 %v2287
    %v2968 = vunpack.c.h.b16 %v2287
    %v2969 = vunpack.c.l.b16 %v2288
    %v2970 = vunpack.c.h.b16 %v2288
    %v2971 = vunpack.c.l.b16 %v2289
    %v2972 = vunpack.c.h.b16 %v2289
    %v2973 = vunpack.c.l.b16 %v2290
    %v2974 = vunpack.c.h.b16 %v2290
    %v2975 = vunpack.c.l.b16 %v2291
    %v2976 = vunpack.c.h.b16 %v2291
    %v2977 = vunpack.c.l.b16 %v2292
    %v2978 = vunpack.c.h.b16 %v2292
    %v2979 = vunpack.c.l.b16 %v2293
    %v2980 = vunpack.c.h.b16 %v2293
    %v2981 = vunpack.c.l.b16 %v2294
    %v2982 = vunpack.c.h.b16 %v2294
    %v2983 = vunpack.c.l.b16 %v2295
    %v2984 = vunpack.c.h.b16 %v2295
    %v2985 = vunpack.c.l.b16 %v2296
    %v2986 = vunpack.c.h.b16 %v2296
    %v2987 = vunpack.c.l.b16 %v2297
    %v2988 = vunpack.c.h.b16 %v2297
    %v2989 = vunpack.c.l.b16 %v2298
    %v2990 = vunpack.c.h.b16 %v2298
    %v2991 = vunpack.c.l.b16 %v2299
    %v2992 = vunpack.c.h.b16 %v2299
    %v2993 = vunpack.c.l.b16 %v2300
    %v2994 = vunpack.c.h.b16 %v2300
    %v2995 = vunpack.c.l.b16 %v2301
    %v2996 = vunpack.c.h.b16 %v2301
    %v2997 = vunpack.c.l.b16 %v2302
    %v2998 = vunpack.c.h.b16 %v2302
    %v2999 = vunpack.c.l.b16 %v2303
    %v3000 = vunpack.c.h.b16 %v2303
    %v3001 = vunpack.c.l.b16 %v2304
    %v3002 = vunpack.c.h.b16 %v2304
    %v3003 = vunpack.c.l.b16 %v2305
    %v3004 = vunpack.c.h.b16 %v2305
    %v3005 = vunpack.c.l.b16 %v2306
    %v3006 = vunpack.c.h.b16 %v2306
    %v3007 = vunpack.c.l.b16 %v2307
    %v3008 = vunpack.c.h.b16 %v2307
    %v3009 = vunpack.c.l.b16 %v2308
    %v3010 = vunpack.c.h.b16 %v2308
    %v3011 = vunpack.c.l.b16 %v2309
    %v3012 = vunpack.c.h.b16 %v2309
    %v3013 = vunpack.c.l.b16 %v2310
    %v3014 = vunpack.c.h.b16 %v2310
    %v3015 = vunpack.c.l.b16 %v2311
    %v3016 = vunpack.c.h.b16 %v2311
    %v3017 = vunpack.c.l.b16 %v2312
    %v3018 = vunpack.c.h.b16 %v2312
    %v3019 = vunpack.c.l.b16 %v2313
    %v3020 = vunpack.c.h.b16 %v2313
    %v3021 = vunpack.c.l.b16 %v2314
    %v3022 = vunpack.c.h.b16 %v2314
    %v3023 = vunpack.c.l.b16 %v2315
    %v3024 = vunpack.c.h.b16 %v2315
    %v3025 = vunpack.c.l.b16 %v2316
    %v3026 = vunpack.c.h.b16 %v2316
    %v3027 = vunpack.c.l.b16 %v2317
    %v3028 = vunpack.c.h.b16 %v2317
    %v3029 = vunpack.c.l.b16 %v2318
    %v3030 = vunpack.c.h.b16 %v2318
    %v3031 = vunpack.c.l.b16 %v2319
    %v3032 = vunpack.c.h.b16 %v2319
    %v3033 = vunpack.c.l.b16 %v2320
    %v3034 = vunpack.c.h.b16 %v2320
    %v3035 = vunpack.c.l.b16 %v2321
    %v3036 = vunpack.c.h.b16 %v2321
    %v3037 = vunpack.c.l.b16 %v2322
    %v3038 = vunpack.c.h.b16 %v2322
    %v3039 = vunpack.c.l.b16 %v2323
    %v3040 = vunpack.c.h.b16 %v2323
    %v3041 = vunpack.c.l.b16 %v2324
    %v3042 = vunpack.c.h.b16 %v2324
    %v3043 = vunpack.c.l.b16 %v2325
    %v3044 = vunpack.c.h.b16 %v2325
    %v3045 = vunpack.c.l.b16 %v2326
    %v3046 = vunpack.c.h.b16 %v2326
    %v3047 = vunpack.c.l.b16 %v2327
    %v3048 = vunpack.c.h.b16 %v2327
    %v3049 = vunpack.c.l.b16 %v2328
    %v3050 = vunpack.c.h.b16 %v2328
    %v3051 = vunpack.c.l.b16 %v2329
    %v3052 = vunpack.c.h.b16 %v2329
    %v3053 = vunpack.c.l.b16 %v2330
    %v3054 = vunpack.c.h.b16 %v2330
    %v3055 = vunpack.c.l.b16 %v2331
    %v3056 = vunpack.c.h.b16 %v2331
    %v3057 = vunpack.c.l.b16 %v2332
    %v3058 = vunpack.c.h.b16 %v2332
    %v3059 = vunpack.c.l.b16 %v2333
    %v3060 = vunpack.c.h.b16 %v2333
    %v3061 = vunpack.c.l.b16 %v2334
    %v3062 = vunpack.c.h.b16 %v2334
    %v3063 = vunpack.c.l.b16 %v2335
    %v3064 = vunpack.c.h.b16 %v2335
    %v3065 = vunpack.c.l.b16 %v2336
    %v3066 = vunpack.c.h.b16 %v2336
    %v3067 = vunpack.c.l.b16 %v2337
    %v3068 = vunpack.c.h.b16 %v2337
    %v3069 = vunpack.c.l.b16 %v2338
    %v3070 = vunpack.c.h.b16 %v2338
    %v3071 = vunpack.c.l.b16 %v2339
    %v3072 = vunpack.c.h.b16 %v2339
    %v3073 = vunpack.c.l.b16 %v2340
    %v3074 = vunpack.c.h.b16 %v2340
    %v3075 = vunpack.c.l.b16 %v2341
    %v3076 = vunpack.c.h.b16 %v2341
    %v3077 = vunpack.c.l.b16 %v2342
    %v3078 = vunpack.c.h.b16 %v2342
    %v3079 = vunpack.c.l.b16 %v2343
    %v3080 = vunpack.c.h.b16 %v2343
    %v3081 = vunpack.c.l.b16 %v2344
    %v3082 = vunpack.c.h.b16 %v2344
    %v3083 = vunpack.c.l.b16 %v2345
    %v3084 = vunpack.c.h.b16 %v2345
    %v3085 = vunpack.c.l.b16 %v2346
    %v3086 = vunpack.c.h.b16 %v2346
    %v3087 = vunpack.c.l.b16 %v2347
    %v3088 = vunpack.c.h.b16 %v2347
    %v3089 = vunpack.c.l.b16 %v2348
    %v3090 = vunpack.c.h.b16 %v2348
    %v3091 = vunpack.c.l.b16 %v2349
    %v3092 = vunpack.c.h.b16 %v2349
    %v3093 = vunpack.c.l.b16 %v2350
    %v3094 = vunpack.c.h.b16 %v2350
    %v3095 = vunpack.c.l.b16 %v2351
    %v3096 = vunpack.c.h.b16 %v2351
    %v3097 = vunpack.c.l.b16 %v2352
    %v3098 = vunpack.c.h.b16 %v2352
    %v3099 = vunpack.c.l.b16 %v2353
    %v3100 = vunpack.c.h.b16 %v2353
    %v3101 = vunpack.c.l.b16 %v2354
    %v3102 = vunpack.c.h.b16 %v2354
    %v3103 = vunpack.c.l.b16 %v2355
    %v3104 = vunpack.c.h.b16 %v2355
    %v3105 = vunpack.c.l.b16 %v2356
    %v3106 = vunpack.c.h.b16 %v2356
    %v3107 = vunpack.c.l.b16 %v2357
    %v3108 = vunpack.c.h.b16 %v2357
    %v3109 = vunpack.c.l.b16 %v2358
    %v3110 = vunpack.c.h.b16 %v2358
    %v3111 = vunpack.c.l.b16 %v2359
    %v3112 = vunpack.c.h.b16 %v2359
    %v3113 = vunpack.c.l.b16 %v2360
    %v3114 = vunpack.c.h.b16 %v2360
    %v3115 = vunpack.c.l.b16 %v2361
    %v3116 = vunpack.c.h.b16 %v2361
    %v3117 = vunpack.c.l.b16 %v2362
    %v3118 = vunpack.c.h.b16 %v2362
    %v3119 = vunpack.c.l.b16 %v2363
    %v3120 = vunpack.c.h.b16 %v2363
    %v3121 = vunpack.c.l.b16 %v2364
    %v3122 = vunpack.c.h.b16 %v2364
    %v3123 = vunpack.c.l.b16 %v2365
    %v3124 = vunpack.c.h.b16 %v2365
    %v3125 = vunpack.c.l.b16 %v2366
    %v3126 = vunpack.c.h.b16 %v2366
    %v3127 = vunpack.c.l.b16 %v2367
    %v3128 = vunpack.c.h.b16 %v2367
    %v3129 = vunpack.c.l.b16 %v2368
    %v3130 = vunpack.c.h.b16 %v2368
    %v3131 = vunpack.c.l.b16 %v2369
    %v3132 = vunpack.c.h.b16 %v2369
    %v3133 = vunpack.c.l.b16 %v2370
    %v3134 = vunpack.c.h.b16 %v2370
    %v3135 = vunpack.c.l.b16 %v2371
    %v3136 = vunpack.c.h.b16 %v2371
    %v3137 = vunpack.c.l.b16 %v2372
    %v3138 = vunpack.c.h.b16 %v2372
    %v3139 = vunpack.c.l.b16 %v2373
    %v3140 = vunpack.c.h.b16 %v2373
    %v3141 = vunpack.c.l.b16 %v2374
    %v3142 = vunpack.c.h.b16 %v2374
    %v3143 = vunpack.c.l.b16 %v2375
    %v3144 = vunpack.c.h.b16 %v2375
    %v3145 = vunpack.c.l.b16 %v2376
    %v3146 = vunpack.c.h.b16 %v2376
    %v3147 = vunpack.c.l.b16 %v2377
    %v3148 = vunpack.c.h.b16 %v2377
    %v3149 = vunpack.c.l.b16 %v2378
    %v3150 = vunpack.c.h.b16 %v2378
    %v3151 = vunpack.c.l.b16 %v2379
    %v3152 = vunpack.c.h.b16 %v2379
    %v3153 = vunpack.c.l.b16 %v2380
    %v3154 = vunpack.c.h.b16 %v2380
    %v3155 = vunpack.c.l.b16 %v2381
    %v3156 = vunpack.c.h.b16 %v2381
    %v3157 = vunpack.c.l.b16 %v2382
    %v3158 = vunpack.c.h.b16 %v2382
    %v3159 = vunpack.c.l.b16 %v2383
    %v3160 = vunpack.c.h.b16 %v2383
    %v3161 = vunpack.c.l.b16 %v2384
    %v3162 = vunpack.c.h.b16 %v2384
    %v3163 = vunpack.c.l.b16 %v2385
    %v3164 = vunpack.c.h.b16 %v2385
    %v3165 = vunpack.c.l.b16 %v2386
    %v3166 = vunpack.c.h.b16 %v2386
    %v3167 = vunpack.c.l.b16 %v2387
    %v3168 = vunpack.c.h.b16 %v2387
    %v3169 = vunpack.c.l.b16 %v2388
    %v3170 = vunpack.c.h.b16 %v2388
    %v3171 = vunpack.c.l.b16 %v2389
    %v3172 = vunpack.c.h.b16 %v2389
    %v3173 = vunpack.c.l.b16 %v2390
    %v3174 = vunpack.c.h.b16 %v2390
    %v3175 = vunpack.c.l.b16 %v2391
    %v3176 = vunpack.c.h.b16 %v2391
    %v3177 = vunpack.c.l.b16 %v2392
    %v3178 = vunpack.c.h.b16 %v2392
    %v3179 = vunpack.c.l.b16 %v2393
    %v3180 = vunpack.c.h.b16 %v2393
    %v3181 = vunpack.c.l.b16 %v2394
    %v3182 = vunpack.c.h.b16 %v2394
    %v3183 = vunpack.c.l.b16 %v2395
    %v3184 = vunpack.c.h.b16 %v2395
    %v3185 = vunpack.c.l.b16 %v2396
    %v3186 = vunpack.c.h.b16 %v2396
    %v3187 = vpack.c.b16 %v2679, %v2675
    %v3188 = vpack.c.b16 %v2680, %v2676
    %v3189 = vpack.c.b16 %v2681, %v2677
    %v3190 = vpack.c.b16 %v2682, %v2678
    %v3191 = vpack.c.b16 %v2687, %v2683
    %v3192 = vpack.c.b16 %v2688, %v2684
    %v3193 = vpack.c.b16 %v2689, %v2685
    %v3194 = vpack.c.b16 %v2690, %v2686
    %v3195 = vpack.c.b16 %v2695, %v2691
    %v3196 = vpack.c.b16 %v2696, %v2692
    %v3197 = vpack.c.b16 %v2697, %v2693
    %v3198 = vpack.c.b16 %v2698, %v2694
    %v3199 = vpack.c.b16 %v2703, %v2699
    %v3200 = vpack.c.b16 %v2704, %v2700
    %v3201 = vpack.c.b16 %v2705, %v2701
    %v3202 = vpack.c.b16 %v2706, %v2702
    %v3203 = vpack.c.b16 %v2711, %v2707
    %v3204 = vpack.c.b16 %v2712, %v2708
    %v3205 = vpack.c.b16 %v2713, %v2709
    %v3206 = vpack.c.b16 %v2714, %v2710
    %v3207 = vpack.c.b16 %v2719, %v2715
    %v3208 = vpack.c.b16 %v2720, %v2716
    %v3209 = vpack.c.b16 %v2721, %v2717
    %v3210 = vpack.c.b16 %v2722, %v2718
    %v3211 = vpack.c.b16 %v2727, %v2723
    %v3212 = vpack.c.b16 %v2728, %v2724
    %v3213 = vpack.c.b16 %v2729, %v2725
    %v3214 = vpack.c.b16 %v2730, %v2726
    %v3215 = vpack.c.b16 %v2735, %v2731
    %v3216 = vpack.c.b16 %v2736, %v2732
    %v3217 = vpack.c.b16 %v2737, %v2733
    %v3218 = vpack.c.b16 %v2738, %v2734
    %v3219 = vpack.c.b16 %v2743, %v2739
    %v3220 = vpack.c.b16 %v2744, %v2740
    %v3221 = vpack.c.b16 %v2745, %v2741
    %v3222 = vpack.c.b16 %v2746, %v2742
    %v3223 = vpack.c.b16 %v2751, %v2747
    %v3224 = vpack.c.b16 %v2752, %v2748
    %v3225 = vpack.c.b16 %v2753, %v2749
    %v3226 = vpack.c.b16 %v2754, %v2750
    %v3227 = vpack.c.b16 %v2759, %v2755
    %v3228 = vpack.c.b16 %v2760, %v2756
    %v3229 = vpack.c.b16 %v2761, %v2757
    %v3230 = vpack.c.b16 %v2762, %v2758
    %v3231 = vpack.c.b16 %v2767, %v2763
    %v3232 = vpack.c.b16 %v2768, %v2764
    %v3233 = vpack.c.b16 %v2769, %v2765
    %v3234 = vpack.c.b16 %v2770, %v2766
    %v3235 = vpack.c.b16 %v2775, %v2771
    %v3236 = vpack.c.b16 %v2776, %v2772
    %v3237 = vpack.c.b16 %v2777, %v2773
    %v3238 = vpack.c.b16 %v2778, %v2774
    %v3239 = vpack.c.b16 %v2783, %v2779
    %v3240 = vpack.c.b16 %v2784, %v2780
    %v3241 = vpack.c.b16 %v2785, %v2781
    %v3242 = vpack.c.b16 %v2786, %v2782
    %v3243 = vpack.c.b16 %v2791, %v2787
    %v3244 = vpack.c.b16 %v2792, %v2788
    %v3245 = vpack.c.b16 %v2793, %v2789
    %v3246 = vpack.c.b16 %v2794, %v2790
    %v3247 = vpack.c.b16 %v2799, %v2795
    %v3248 = vpack.c.b16 %v2800, %v2796
    %v3249 = vpack.c.b16 %v2801, %v2797
    %v3250 = vpack.c.b16 %v2802, %v2798
    %v3251 = vpack.c.b16 %v2807, %v2803
    %v3252 = vpack.c.b16 %v2808, %v2804
    %v3253 = vpack.c.b16 %v2809, %v2805
    %v3254 = vpack.c.b16 %v2810, %v2806
    %v3255 = vpack.c.b16 %v2815, %v2811
    %v3256 = vpack.c.b16 %v2816, %v2812
    %v3257 = vpack.c.b16 %v2817, %v2813
    %v3258 = vpack.c.b16 %v2818, %v2814
    %v3259 = vpack.c.b16 %v2823, %v2819
    %v3260 = vpack.c.b16 %v2824, %v2820
    %v3261 = vpack.c.b16 %v2825, %v2821
    %v3262 = vpack.c.b16 %v2826, %v2822
    %v3263 = vpack.c.b16 %v2831, %v2827
    %v3264 = vpack.c.b16 %v2832, %v2828
    %v3265 = vpack.c.b16 %v2833, %v2829
    %v3266 = vpack.c.b16 %v2834, %v2830
    %v3267 = vpack.c.b16 %v2839, %v2835
    %v3268 = vpack.c.b16 %v2840, %v2836
    %v3269 = vpack.c.b16 %v2841, %v2837
    %v3270 = vpack.c.b16 %v2842, %v2838
    %v3271 = vpack.c.b16 %v2847, %v2843
    %v3272 = vpack.c.b16 %v2848, %v2844
    %v3273 = vpack.c.b16 %v2849, %v2845
    %v3274 = vpack.c.b16 %v2850, %v2846
    %v3275 = vpack.c.b16 %v2855, %v2851
    %v3276 = vpack.c.b16 %v2856, %v2852
    %v3277 = vpack.c.b16 %v2857, %v2853
    %v3278 = vpack.c.b16 %v2858, %v2854
    %v3279 = vpack.c.b16 %v2863, %v2859
    %v3280 = vpack.c.b16 %v2864, %v2860
    %v3281 = vpack.c.b16 %v2865, %v2861
    %v3282 = vpack.c.b16 %v2866, %v2862
    %v3283 = vpack.c.b16 %v2871, %v2867
    %v3284 = vpack.c.b16 %v2872, %v2868
    %v3285 = vpack.c.b16 %v2873, %v2869
    %v3286 = vpack.c.b16 %v2874, %v2870
    %v3287 = vpack.c.b16 %v2879, %v2875
    %v3288 = vpack.c.b16 %v2880, %v2876
    %v3289 = vpack.c.b16 %v2881, %v2877
    %v3290 = vpack.c.b16 %v2882, %v2878
    %v3291 = vpack.c.b16 %v2887, %v2883
    %v3292 = vpack.c.b16 %v2888, %v2884
    %v3293 = vpack.c.b16 %v2889, %v2885
    %v3294 = vpack.c.b16 %v2890, %v2886
    %v3295 = vpack.c.b16 %v2895, %v2891
    %v3296 = vpack.c.b16 %v2896, %v2892
    %v3297 = vpack.c.b16 %v2897, %v2893
    %v3298 = vpack.c.b16 %v2898, %v2894
    %v3299 = vpack.c.b16 %v2903, %v2899
    %v3300 = vpack.c.b16 %v2904, %v2900
    %v3301 = vpack.c.b16 %v2905, %v2901
    %v3302 = vpack.c.b16 %v2906, %v2902
    %v3303 = vpack.c.b16 %v2911, %v2907
    %v3304 = vpack.c.b16 %v2912, %v2908
    %v3305 = vpack.c.b16 %v2913, %v2909
    %v3306 = vpack.c.b16 %v2914, %v2910
    %v3307 = vpack.c.b16 %v2919, %v2915
    %v3308 = vpack.c.b16 %v2920, %v2916
    %v3309 = vpack.c.b16 %v2921, %v2917
    %v3310 = vpack.c.b16 %v2922, %v2918
    %v3311 = vpack.c.b16 %v2927, %v2923
    %v3312 = vpack.c.b16 %v2928, %v2924
    %v3313 = vpack.c.b16 %v2929, %v2925
    %v3314 = vpack.c.b16 %v2930, %v2926
    %v3315 = vpack.c.b16 %v2935, %v2931
    %v3316 = vpack.c.b16 %v2936, %v2932
    %v3317 = vpack.c.b16 %v2937, %v2933
    %v3318 = vpack.c.b16 %v2938, %v2934
    %v3319 = vpack.c.b16 %v2943, %v2939
    %v3320 = vpack.c.b16 %v2944, %v2940
    %v3321 = vpack.c.b16 %v2945, %v2941
    %v3322 = vpack.c.b16 %v2946, %v2942
    %v3323 = vpack.c.b16 %v2951, %v2947
    %v3324 = vpack.c.b16 %v2952, %v2948
    %v3325 = vpack.c.b16 %v2953, %v2949
    %v3326 = vpack.c.b16 %v2954, %v2950
    %v3327 = vpack.c.b16 %v2959, %v2955
    %v3328 = vpack.c.b16 %v2960, %v2956
    %v3329 = vpack.c.b16 %v2961, %v2957
    %v3330 = vpack.c.b16 %v2962, %v2958
    %v3331 = vpack.c.b16 %v2967, %v2963
    %v3332 = vpack.c.b16 %v2968, %v2964
    %v3333 = vpack.c.b16 %v2969, %v2965
    %v3334 = vpack.c.b16 %v2970, %v2966
    %v3335 = vpack.c.b16 %v2975, %v2971
    %v3336 = vpack.c.b16 %v2976, %v2972
    %v3337 = vpack.c.b16 %v2977, %v2973
    %v3338 = vpack.c.b16 %v2978, %v2974
    %v3339 = vpack.c.b16 %v2983, %v2979
    %v3340 = vpack.c.b16 %v2984, %v2980
    %v3341 = vpack.c.b16 %v2985, %v2981
    %v3342 = vpack.c.b16 %v2986, %v2982
    %v3343 = vpack.c.b16 %v2991, %v2987
    %v3344 = vpack.c.b16 %v2992, %v2988
    %v3345 = vpack.c.b16 %v2993, %v2989
    %v3346 = vpack.c.b16 %v2994, %v2990
    %v3347 = vpack.c.b16 %v2999, %v2995
    %v3348 = vpack.c.b16 %v3000, %v2996
    %v3349 = vpack.c.b16 %v3001, %v2997
    %v3350 = vpack.c.b16 %v3002, %v2998
    %v3351 = vpack.c.b16 %v3007, %v3003
    %v3352 = vpack.c.b16 %v3008, %v3004
    %v3353 = vpack.c.b16 %v3009, %v3005
    %v3354 = vpack.c.b16 %v3010, %v3006
    %v3355 = vpack.c.b16 %v3015, %v3011
    %v3356 = vpack.c.b16 %v3016, %v3012
    %v3357 = vpack.c.b16 %v3017, %v3013
    %v3358 = vpack.c.b16 %v3018, %v3014
    %v3359 = vpack.c.b16 %v3023, %v3019
    %v3360 = vpack.c.b16 %v3024, %v3020
    %v3361 = vpack.c.b16 %v3025, %v3021
    %v3362 = vpack.c.b16 %v3026, %v3022
    %v3363 = vpack.c.b16 %v3031, %v3027
    %v3364 = vpack.c.b16 %v3032, %v3028
    %v3365 = vpack.c.b16 %v3033, %v3029
    %v3366 = vpack.c.b16 %v3034, %v3030
    %v3367 = vpack.c.b16 %v3039, %v3035
    %v3368 = vpack.c.b16 %v3040, %v3036
    %v3369 = vpack.c.b16 %v3041, %v3037
    %v3370 = vpack.c.b16 %v3042, %v3038
    %v3371 = vpack.c.b16 %v3047, %v3043
    %v3372 = vpack.c.b16 %v3048, %v3044
    %v3373 = vpack.c.b16 %v3049, %v3045
    %v3374 = vpack.c.b16 %v3050, %v3046
    %v3375 = vpack.c.b16 %v3055, %v3051
    %v3376 = vpack.c.b16 %v3056, %v3052
    %v3377 = vpack.c.b16 %v3057, %v3053
    %v3378 = vpack.c.b16 %v3058, %v3054
    %v3379 = vpack.c.b16 %v3063, %v3059
    %v3380 = vpack.c.b16 %v3064, %v3060
    %v3381 = vpack.c.b16 %v3065, %v3061
    %v3382 = vpack.c.b16 %v3066, %v3062
    %v3383 = vpack.c.b16 %v3071, %v3067
    %v3384 = vpack.c.b16 %v3072, %v3068
    %v3385 = vpack.c.b16 %v3073, %v3069
    %v3386 = vpack.c.b16 %v3074, %v3070
    %v3387 = vpack.c.b16 %v3079, %v3075
    %v3388 = vpack.c.b16 %v3080, %v3076
    %v3389 = vpack.c.b16 %v3081, %v3077
    %v3390 = vpack.c.b16 %v3082, %v3078
    %v3391 = vpack.c.b16 %v3087, %v3083
    %v3392 = vpack.c.b16 %v3088, %v3084
    %v3393 = vpack.c.b16 %v3089, %v3085
    %v3394 = vpack.c.b16 %v3090, %v3086
    %v3395 = vpack.c.b16 %v3095, %v3091
    %v3396 = vpack.c.b16 %v3096, %v3092
    %v3397 = vpack.c.b16 %v3097, %v3093
    %v3398 = vpack.c.b16 %v3098, %v3094
    %v3399 = vpack.c.b16 %v3103, %v3099
    %v3400 = vpack.c.b16 %v3104, %v3100
    %v3401 = vpack.c.b16 %v3105, %v3101
    %v3402 = vpack.c.b16 %v3106, %v3102
    %v3403 = vpack.c.b16 %v3111, %v3107
    %v3404 = vpack.c.b16 %v3112, %v3108
    %v3405 = vpack.c.b16 %v3113, %v3109
    %v3406 = vpack.c.b16 %v3114, %v3110
    %v3407 = vpack.c.b16 %v3119, %v3115
    %v3408 = vpack.c.b16 %v3120, %v3116
    %v3409 = vpack.c.b16 %v3121, %v3117
    %v3410 = vpack.c.b16 %v3122, %v3118
    %v3411 = vpack.c.b16 %v3127, %v3123
    %v3412 = vpack.c.b16 %v3128, %v3124
    %v3413 = vpack.c.b16 %v3129, %v3125
    %v3414 = vpack.c.b16 %v3130, %v3126
    %v3415 = vpack.c.b16 %v3135, %v3131
    %v3416 = vpack.c.b16 %v3136, %v3132
    %v3417 = vpack.c.b16 %v3137, %v3133
    %v3418 = vpack.c.b16 %v3138, %v3134
    %v3419 = vpack.c.b16 %v3143, %v3139
    %v3420 = vpack.c.b16 %v3144, %v3140
    %v3421 = vpack.c.b16 %v3145, %v3141
    %v3422 = vpack.c.b16 %v3146, %v3142
    %v3423 = vpack.c.b16 %v3151, %v3147
    %v3424 = vpack.c.b16 %v3152, %v3148
    %v3425 = vpack.c.b16 %v3153, %v3149
    %v3426 = vpack.c.b16 %v3154, %v3150
    %v3427 = vpack.c.b16 %v3159, %v3155
    %v3428 = vpack.c.b16 %v3160, %v3156
    %v3429 = vpack.c.b16 %v3161, %v3157
    %v3430 = vpack.c.b16 %v3162, %v3158
    %v3431 = vpack.c.b16 %v3167, %v3163
    %v3432 = vpack.c.b16 %v3168, %v3164
    %v3433 = vpack.c.b16 %v3169, %v3165
    %v3434 = vpack.c.b16 %v3170, %v3166
    %v3435 = vpack.c.b16 %v3175, %v3171
    %v3436 = vpack.c.b16 %v3176, %v3172
    %v3437 = vpack.c.b16 %v3177, %v3173
    %v3438 = vpack.c.b16 %v3178, %v3174
    %v3439 = vpack.c.b16 %v3183, %v3179
    %v3440 = vpack.c.b16 %v3184, %v3180
    %v3441 = vpack.c.b16 %v3185, %v3181
    %v3442 = vpack.c.b16 %v3186, %v3182
    %3699 = vmatprep.subr.bf16.mxu0 %v3188
    %3700 = vmatpush1.bf16.msra.mxu0 %v3187
    %3701 = vmatprep.subr.bf16.mxu0 %v3192
    %3702 = vmatpush1.bf16.msra.mxu0 %v3191
    %3703 = vmatprep.subr.bf16.mxu0 %v3196
    %3704 = vmatpush1.bf16.msra.mxu0 %v3195
    %3705 = vmatprep.subr.bf16.mxu0 %v3200
    %3706 = vmatpush1.bf16.msra.mxu0 %v3199
    %3707 = vmatprep.subr.bf16.mxu0 %v3204
    %3708 = vmatpush1.bf16.msra.mxu0 %v3203
    %3709 = vmatprep.subr.bf16.mxu0 %v3208
    %3710 = vmatpush1.bf16.msra.mxu0 %v3207
    %3711 = vmatprep.subr.bf16.mxu0 %v3212
    %3712 = vmatpush1.bf16.msra.mxu0 %v3211
    %3713 = vmatprep.subr.bf16.mxu0 %v3216
    %3714 = vmatpush1.bf16.msra.mxu0 %v3215
    %3715 = vmatprep.subr.bf16.mxu0 %v3220
    %3716 = vmatpush1.bf16.msra.mxu0 %v3219
    %3717 = vmatprep.subr.bf16.mxu0 %v3224
    %3718 = vmatpush1.bf16.msra.mxu0 %v3223
    %3719 = vmatprep.subr.bf16.mxu0 %v3228
    %3720 = vmatpush1.bf16.msra.mxu0 %v3227
    %3721 = vmatprep.subr.bf16.mxu0 %v3232
    %3722 = vmatpush1.bf16.msra.mxu0 %v3231
    %3723 = vmatprep.subr.bf16.mxu0 %v3236
    %3724 = vmatpush1.bf16.msra.mxu0 %v3235
    %3725 = vmatprep.subr.bf16.mxu0 %v3240
    %3726 = vmatpush1.bf16.msra.mxu0 %v3239
    %3727 = vmatprep.subr.bf16.mxu0 %v3244
    %3728 = vmatpush1.bf16.msra.mxu0 %v3243
    %3729 = vmatprep.subr.bf16.mxu0 %v3248
    %3730 = vmatpush1.bf16.msra.mxu0 %v3247
    %3731 = vmatprep.mubr.bf16.mxu0 %v2134
    %3732 = vmatmul.mubr.bf16.gmra.mrb[0].mxu0 %v2133
    %v3733 = vpop.f32.mrb[0].mxu0
    %v3734 = vadd.f32 %v2402, %v3733
    %v3735 = vpop.f32.mrb[0].mxu0
    %v3736 = vadd.f32 %v2406, %v3735
    %v3737 = vpop.f32.mrb[0].mxu0
    %v3738 = vpop.f32.mrb[0].mxu0
    %3739 = vdwg.mxu0
    %3740 = vmatprep.subr.bf16.mxu0 %v3252
    %3741 = vmatpush1.bf16.msra.mxu0 %v3251
    %3742 = vmatprep.subr.bf16.mxu0 %v3256
    %3743 = vmatpush1.bf16.msra.mxu0 %v3255
    %3744 = vmatprep.subr.bf16.mxu0 %v3260
    %3745 = vmatpush1.bf16.msra.mxu0 %v3259
    %3746 = vmatprep.subr.bf16.mxu0 %v3264
    %3747 = vmatpush1.bf16.msra.mxu0 %v3263
    %3748 = vmatprep.subr.bf16.mxu0 %v3268
    %3749 = vmatpush1.bf16.msra.mxu0 %v3267
    %3750 = vmatprep.subr.bf16.mxu0 %v3272
    %3751 = vmatpush1.bf16.msra.mxu0 %v3271
    %3752 = vmatprep.subr.bf16.mxu0 %v3276
    %3753 = vmatpush1.bf16.msra.mxu0 %v3275
    %3754 = vmatprep.subr.bf16.mxu0 %v3280
    %3755 = vmatpush1.bf16.msra.mxu0 %v3279
    %3756 = vmatprep.subr.bf16.mxu0 %v3284
    %3757 = vmatpush1.bf16.msra.mxu0 %v3283
    %3758 = vmatprep.subr.bf16.mxu0 %v3288
    %3759 = vmatpush1.bf16.msra.mxu0 %v3287
    %3760 = vmatprep.subr.bf16.mxu0 %v3292
    %3761 = vmatpush1.bf16.msra.mxu0 %v3291
    %3762 = vmatprep.subr.bf16.mxu0 %v3296
    %3763 = vmatpush1.bf16.msra.mxu0 %v3295
    %3764 = vmatprep.subr.bf16.mxu0 %v3300
    %3765 = vmatpush1.bf16.msra.mxu0 %v3299
    %3766 = vmatprep.subr.bf16.mxu0 %v3304
    %3767 = vmatpush1.bf16.msra.mxu0 %v3303
    %3768 = vmatprep.subr.bf16.mxu0 %v3308
    %3769 = vmatpush1.bf16.msra.mxu0 %v3307
    %3770 = vmatprep.subr.bf16.mxu0 %v3312
    %3771 = vmatpush1.bf16.msra.mxu0 %v3311
    %3772 = vmatprep.mubr.bf16.mxu0 %v2136
    %3773 = vmatmul.mubr.bf16.gmra.mrb[0].mxu0 %v2135
    %v3774 = vpop.f32.mrb[0].mxu0
    %v3775 = vadd.f32 %v3734, %v3774
    %v3776 = vpop.f32.mrb[0].mxu0
    %v3777 = vadd.f32 %v3736, %v3776
    %v3778 = vpop.f32.mrb[0].mxu0
    %v3779 = vpop.f32.mrb[0].mxu0
    %3780 = vdwg.mxu0
    %3781 = vmatprep.subr.bf16.mxu0 %v3316
    %3782 = vmatpush1.bf16.msra.mxu0 %v3315
    %3783 = vmatprep.subr.bf16.mxu0 %v3320
    %3784 = vmatpush1.bf16.msra.mxu0 %v3319
    %3785 = vmatprep.subr.bf16.mxu0 %v3324
    %3786 = vmatpush1.bf16.msra.mxu0 %v3323
    %3787 = vmatprep.subr.bf16.mxu0 %v3328
    %3788 = vmatpush1.bf16.msra.mxu0 %v3327
    %3789 = vmatprep.subr.bf16.mxu0 %v3332
    %3790 = vmatpush1.bf16.msra.mxu0 %v3331
    %3791 = vmatprep.subr.bf16.mxu0 %v3336
    %3792 = vmatpush1.bf16.msra.mxu0 %v3335
    %3793 = vmatprep.subr.bf16.mxu0 %v3340
    %3794 = vmatpush1.bf16.msra.mxu0 %v3339
    %3795 = vmatprep.subr.bf16.mxu0 %v3344
    %3796 = vmatpush1.bf16.msra.mxu0 %v3343
    %3797 = vmatprep.subr.bf16.mxu0 %v3348
    %3798 = vmatpush1.bf16.msra.mxu0 %v3347
    %3799 = vmatprep.subr.bf16.mxu0 %v3352
    %3800 = vmatpush1.bf16.msra.mxu0 %v3351
    %3801 = vmatprep.subr.bf16.mxu0 %v3356
    %3802 = vmatpush1.bf16.msra.mxu0 %v3355
    %3803 = vmatprep.subr.bf16.mxu0 %v3360
    %3804 = vmatpush1.bf16.msra.mxu0 %v3359
    %3805 = vmatprep.subr.bf16.mxu0 %v3364
    %3806 = vmatpush1.bf16.msra.mxu0 %v3363
    %3807 = vmatprep.subr.bf16.mxu0 %v3368
    %3808 = vmatpush1.bf16.msra.mxu0 %v3367
    %3809 = vmatprep.subr.bf16.mxu0 %v3372
    %3810 = vmatpush1.bf16.msra.mxu0 %v3371
    %3811 = vmatprep.subr.bf16.mxu0 %v3376
    %3812 = vmatpush1.bf16.msra.mxu0 %v3375
    %3813 = vmatprep.mubr.bf16.mxu0 %v2138
    %3814 = vmatmul.mubr.bf16.gmra.mrb[0].mxu0 %v2137
    %v3815 = vpop.f32.mrb[0].mxu0
    %v3816 = vadd.f32 %v3775, %v3815
    %v3817 = vpop.f32.mrb[0].mxu0
    %v3818 = vadd.f32 %v3777, %v3817
    %v3819 = vpop.f32.mrb[0].mxu0
    %v3820 = vpop.f32.mrb[0].mxu0
    %3821 = vdwg.mxu0
    %3822 = vmatprep.subr.bf16.mxu0 %v3380
    %3823 = vmatpush1.bf16.msra.mxu0 %v3379
    %3824 = vmatprep.subr.bf16.mxu0 %v3384
    %3825 = vmatpush1.bf16.msra.mxu0 %v3383
    %3826 = vmatprep.subr.bf16.mxu0 %v3388
    %3827 = vmatpush1.bf16.msra.mxu0 %v3387
    %3828 = vmatprep.subr.bf16.mxu0 %v3392
    %3829 = vmatpush1.bf16.msra.mxu0 %v3391
    %3830 = vmatprep.subr.bf16.mxu0 %v3396
    %3831 = vmatpush1.bf16.msra.mxu0 %v3395
    %3832 = vmatprep.subr.bf16.mxu0 %v3400
    %3833 = vmatpush1.bf16.msra.mxu0 %v3399
    %3834 = vmatprep.subr.bf16.mxu0 %v3404
    %3835 = vmatpush1.bf16.msra.mxu0 %v3403
    %3836 = vmatprep.subr.bf16.mxu0 %v3408
    %3837 = vmatpush1.bf16.msra.mxu0 %v3407
    %3838 = vmatprep.subr.bf16.mxu0 %v3412
    %3839 = vmatpush1.bf16.msra.mxu0 %v3411
    %3840 = vmatprep.subr.bf16.mxu0 %v3416
    %3841 = vmatpush1.bf16.msra.mxu0 %v3415
    %3842 = vmatprep.subr.bf16.mxu0 %v3420
    %3843 = vmatpush1.bf16.msra.mxu0 %v3419
    %3844 = vmatprep.subr.bf16.mxu0 %v3424
    %3845 = vmatpush1.bf16.msra.mxu0 %v3423
    %3846 = vmatprep.subr.bf16.mxu0 %v3428
    %3847 = vmatpush1.bf16.msra.mxu0 %v3427
    %3848 = vmatprep.subr.bf16.mxu0 %v3432
    %3849 = vmatpush1.bf16.msra.mxu0 %v3431
    %3850 = vmatprep.subr.bf16.mxu0 %v3436
    %3851 = vmatpush1.bf16.msra.mxu0 %v3435
    %3852 = vmatprep.subr.bf16.mxu0 %v3440
    %3853 = vmatpush1.bf16.msra.mxu0 %v3439
    %3854 = vmatprep.mubr.bf16.mxu0 %v2140
    %3855 = vmatmul.mubr.bf16.gmra.mrb[0].mxu0 %v2139
    %v3856 = vpop.f32.mrb[0].mxu0
    %v3857 = vadd.f32 %v3816, %v3856
    %v3858 = vpop.f32.mrb[0].mxu0
    %v3859 = vadd.f32 %v3818, %v3858
    %v3860 = vpop.f32.mrb[0].mxu0
    %v3861 = vpop.f32.mrb[0].mxu0
    %3862 = vdwg.mxu0
    %3863 = vmatprep.subr.bf16.mxu0 %v3190
    %3864 = vmatpush1.bf16.msra.mxu0 %v3189
    %3865 = vmatprep.subr.bf16.mxu0 %v3194
    %3866 = vmatpush1.bf16.msra.mxu0 %v3193
    %3867 = vmatprep.subr.bf16.mxu0 %v3198
    %3868 = vmatpush1.bf16.msra.mxu0 %v3197
    %3869 = vmatprep.subr.bf16.mxu0 %v3202
    %3870 = vmatpush1.bf16.msra.mxu0 %v3201
    %3871 = vmatprep.subr.bf16.mxu0 %v3206
    %3872 = vmatpush1.bf16.msra.mxu0 %v3205
    %3873 = vmatprep.subr.bf16.mxu0 %v3210
    %3874 = vmatpush1.bf16.msra.mxu0 %v3209
    %3875 = vmatprep.subr.bf16.mxu0 %v3214
    %3876 = vmatpush1.bf16.msra.mxu0 %v3213
    %3877 = vmatprep.subr.bf16.mxu0 %v3218
    %3878 = vmatpush1.bf16.msra.mxu0 %v3217
    %3879 = vmatprep.subr.bf16.mxu0 %v3222
    %3880 = vmatpush1.bf16.msra.mxu0 %v3221
    %3881 = vmatprep.subr.bf16.mxu0 %v3226
    %3882 = vmatpush1.bf16.msra.mxu0 %v3225
    %3883 = vmatprep.subr.bf16.mxu0 %v3230
    %3884 = vmatpush1.bf16.msra.mxu0 %v3229
    %3885 = vmatprep.subr.bf16.mxu0 %v3234
    %3886 = vmatpush1.bf16.msra.mxu0 %v3233
    %3887 = vmatprep.subr.bf16.mxu0 %v3238
    %3888 = vmatpush1.bf16.msra.mxu0 %v3237
    %3889 = vmatprep.subr.bf16.mxu0 %v3242
    %3890 = vmatpush1.bf16.msra.mxu0 %v3241
    %3891 = vmatprep.subr.bf16.mxu0 %v3246
    %3892 = vmatpush1.bf16.msra.mxu0 %v3245
    %3893 = vmatprep.subr.bf16.mxu0 %v3250
    %3894 = vmatpush1.bf16.msra.mxu0 %v3249
    %3895 = vmatprep.mubr.bf16.mxu0 %v2134
    %3896 = vmatmul.mubr.bf16.gmra.mrb[0].mxu0 %v2133
    %v3897 = vpop.f32.mrb[0].mxu0
    %v3898 = vadd.f32 %v2410, %v3897
    %v3899 = vpop.f32.mrb[0].mxu0
    %v3900 = vadd.f32 %v2414, %v3899
    %v3901 = vpop.f32.mrb[0].mxu0
    %v3902 = vpop.f32.mrb[0].mxu0
    %3903 = vdwg.mxu0
    %3904 = vmatprep.subr.bf16.mxu0 %v3254
    %3905 = vmatpush1.bf16.msra.mxu0 %v3253
    %3906 = vmatprep.subr.bf16.mxu0 %v3258
    %3907 = vmatpush1.bf16.msra.mxu0 %v3257
    %3908 = vmatprep.subr.bf16.mxu0 %v3262
    %3909 = vmatpush1.bf16.msra.mxu0 %v3261
    %3910 = vmatprep.subr.bf16.mxu0 %v3266
    %3911 = vmatpush1.bf16.msra.mxu0 %v3265
    %3912 = vmatprep.subr.bf16.mxu0 %v3270
    %3913 = vmatpush1.bf16.msra.mxu0 %v3269
    %3914 = vmatprep.subr.bf16.mxu0 %v3274
    %3915 = vmatpush1.bf16.msra.mxu0 %v3273
    %3916 = vmatprep.subr.bf16.mxu0 %v3278
    %3917 = vmatpush1.bf16.msra.mxu0 %v3277
    %3918 = vmatprep.subr.bf16.mxu0 %v3282
    %3919 = vmatpush1.bf16.msra.mxu0 %v3281
    %3920 = vmatprep.subr.bf16.mxu0 %v3286
    %3921 = vmatpush1.bf16.msra.mxu0 %v3285
    %3922 = vmatprep.subr.bf16.mxu0 %v3290
    %3923 = vmatpush1.bf16.msra.mxu0 %v3289
    %3924 = vmatprep.subr.bf16.mxu0 %v3294
    %3925 = vmatpush1.bf16.msra.mxu0 %v3293
    %3926 = vmatprep.subr.bf16.mxu0 %v3298
    %3927 = vmatpush1.bf16.msra.mxu0 %v3297
    %3928 = vmatprep.subr.bf16.mxu0 %v3302
    %3929 = vmatpush1.bf16.msra.mxu0 %v3301
    %3930 = vmatprep.subr.bf16.mxu0 %v3306
    %3931 = vmatpush1.bf16.msra.mxu0 %v3305
    %3932 = vmatprep.subr.bf16.mxu0 %v3310
    %3933 = vmatpush1.bf16.msra.mxu0 %v3309
    %3934 = vmatprep.subr.bf16.mxu0 %v3314
    %3935 = vmatpush1.bf16.msra.mxu0 %v3313
    %3936 = vmatprep.mubr.bf16.mxu0 %v2136
    %3937 = vmatmul.mubr.bf16.gmra.mrb[0].mxu0 %v2135
    %v3938 = vpop.f32.mrb[0].mxu0
    %v3939 = vadd.f32 %v3898, %v3938
    %v3940 = vpop.f32.mrb[0].mxu0
    %v3941 = vadd.f32 %v3900, %v3940
    %v3942 = vpop.f32.mrb[0].mxu0
    %v3943 = vpop.f32.mrb[0].mxu0
    %3944 = vdwg.mxu0
    %3945 = vmatprep.subr.bf16.mxu0 %v3318
    %3946 = vmatpush1.bf16.msra.mxu0 %v3317
    %3947 = vmatprep.subr.bf16.mxu0 %v3322
    %3948 = vmatpush1.bf16.msra.mxu0 %v3321
    %3949 = vmatprep.subr.bf16.mxu0 %v3326
    %3950 = vmatpush1.bf16.msra.mxu0 %v3325
    %3951 = vmatprep.subr.bf16.mxu0 %v3330
    %3952 = vmatpush1.bf16.msra.mxu0 %v3329
    %3953 = vmatprep.subr.bf16.mxu0 %v3334
    %3954 = vmatpush1.bf16.msra.mxu0 %v3333
    %3955 = vmatprep.subr.bf16.mxu0 %v3338
    %3956 = vmatpush1.bf16.msra.mxu0 %v3337
    %3957 = vmatprep.subr.bf16.mxu0 %v3342
    %3958 = vmatpush1.bf16.msra.mxu0 %v3341
    %3959 = vmatprep.subr.bf16.mxu0 %v3346
    %3960 = vmatpush1.bf16.msra.mxu0 %v3345
    %3961 = vmatprep.subr.bf16.mxu0 %v3350
    %3962 = vmatpush1.bf16.msra.mxu0 %v3349
    %3963 = vmatprep.subr.bf16.mxu0 %v3354
    %3964 = vmatpush1.bf16.msra.mxu0 %v3353
    %3965 = vmatprep.subr.bf16.mxu0 %v3358
    %3966 = vmatpush1.bf16.msra.mxu0 %v3357
    %3967 = vmatprep.subr.bf16.mxu0 %v3362
    %3968 = vmatpush1.bf16.msra.mxu0 %v3361
    %3969 = vmatprep.subr.bf16.mxu0 %v3366
    %3970 = vmatpush1.bf16.msra.mxu0 %v3365
    %3971 = vmatprep.subr.bf16.mxu0 %v3370
    %3972 = vmatpush1.bf16.msra.mxu0 %v3369
    %3973 = vmatprep.subr.bf16.mxu0 %v3374
    %3974 = vmatpush1.bf16.msra.mxu0 %v3373
    %3975 = vmatprep.subr.bf16.mxu0 %v3378
    %3976 = vmatpush1.bf16.msra.mxu0 %v3377
    %3977 = vmatprep.mubr.bf16.mxu0 %v2138
    %3978 = vmatmul.mubr.bf16.gmra.mrb[0].mxu0 %v2137
    %v3979 = vpop.f32.mrb[0].mxu0
    %v3980 = vadd.f32 %v3939, %v3979
    %v3981 = vpop.f32.mrb[0].mxu0
    %v3982 = vadd.f32 %v3941, %v3981
    %v3983 = vpop.f32.mrb[0].mxu0
    %v3984 = vpop.f32.mrb[0].mxu0
    %3985 = vdwg.mxu0
    %3986 = vmatprep.subr.bf16.mxu0 %v3382
    %3987 = vmatpush1.bf16.msra.mxu0 %v3381
    %3988 = vmatprep.subr.bf16.mxu0 %v3386
    %3989 = vmatpush1.bf16.msra.mxu0 %v3385
    %3990 = vmatprep.subr.bf16.mxu0 %v3390
    %3991 = vmatpush1.bf16.msra.mxu0 %v3389
    %3992 = vmatprep.subr.bf16.mxu0 %v3394
    %3993 = vmatpush1.bf16.msra.mxu0 %v3393
    %3994 = vmatprep.subr.bf16.mxu0 %v3398
    %3995 = vmatpush1.bf16.msra.mxu0 %v3397
    %3996 = vmatprep.subr.bf16.mxu0 %v3402
    %3997 = vmatpush1.bf16.msra.mxu0 %v3401
    %3998 = vmatprep.subr.bf16.mxu0 %v3406
    %3999 = vmatpush1.bf16.msra.mxu0 %v3405
    %4000 = vmatprep.subr.bf16.mxu0 %v3410
    %4001 = vmatpush1.bf16.msra.mxu0 %v3409
    %4002 = vmatprep.subr.bf16.mxu0 %v3414
    %4003 = vmatpush1.bf16.msra.mxu0 %v3413
    %4004 = vmatprep.subr.bf16.mxu0 %v3418
    %4005 = vmatpush1.bf16.msra.mxu0 %v3417
    %4006 = vmatprep.subr.bf16.mxu0 %v3422
    %4007 = vmatpush1.bf16.msra.mxu0 %v3421
    %4008 = vmatprep.subr.bf16.mxu0 %v3426
    %4009 = vmatpush1.bf16.msra.mxu0 %v3425
    %4010 = vmatprep.subr.bf16.mxu0 %v3430
    %4011 = vmatpush1.bf16.msra.mxu0 %v3429
    %4012 = vmatprep.subr.bf16.mxu0 %v3434
    %4013 = vmatpush1.bf16.msra.mxu0 %v3433
    %4014 = vmatprep.subr.bf16.mxu0 %v3438
    %4015 = vmatpush1.bf16.msra.mxu0 %v3437
    %4016 = vmatprep.subr.bf16.mxu0 %v3442
    %4017 = vmatpush1.bf16.msra.mxu0 %v3441
    %4018 = vmatprep.mubr.bf16.mxu0 %v2140
    %4019 = vmatmul.mubr.bf16.gmra.mrb[0].mxu0 %v2139
    %v4020 = vpop.f32.mrb[0].mxu0
    %v4021 = vadd.f32 %v3980, %v4020
    %v4022 = vpop.f32.mrb[0].mxu0
    %v4023 = vadd.f32 %v3982, %v4022
    %v4024 = vpop.f32.mrb[0].mxu0
    %v4025 = vpop.f32.mrb[0].mxu0
    %4026 = vdwg.mxu0
    %v4027 = vmax.f32 %v3857, 0.0
    %v4028 = vmax.f32 %v3859, 0.0
    %v4029 = vmax.f32 %v4021, 0.0
    %v4030 = vmax.f32 %v4023, 0.0
    %v4031 = vpack.c.bf16 %v4027, %v4027
    %v4032 = vpack.c.bf16 %v4028, %v4028
    %v4033 = vpack.c.bf16 %v4029, %v4029
    %v4034 = vpack.c.bf16 %v4030, %v4030
    %v4035 = vld [vmem:[%s9] sm:$0xff]
    %v4036 = vld [vmem:[%s9 + $0x8] sm:$0xff]
    %v4037 = vld [vmem:[%s9 + $0x10] sm:$0xff]
    %v4038 = vld [vmem:[%s9 + $0x18] sm:$0xff]
    %v4039 = vld [vmem:[%s9 + $0x20] sm:$0xff]
    %v4040 = vld [vmem:[%s9 + $0x28] sm:$0xff]
    %v4041 = vld [vmem:[%s9 + $0x30] sm:$0xff]
    %v4042 = vld [vmem:[%s9 + $0x38] sm:$0xff]
    %v4043 = vld [vmem:[%s9 + $0x40] sm:$0xff]
    %v4044 = vld [vmem:[%s9 + $0x48] sm:$0xff]
    %v4045 = vld [vmem:[%s9 + $0x50] sm:$0xff]
    %v4046 = vld [vmem:[%s9 + $0x58] sm:$0xff]
    %v4047 = vld [vmem:[%s9 + $0x60] sm:$0xff]
    %v4048 = vld [vmem:[%s9 + $0x68] sm:$0xff]
    %v4049 = vld [vmem:[%s9 + $0x70] sm:$0xff]
    %v4050 = vld [vmem:[%s9 + $0x78] sm:$0xff]
    %v4051 = vld [vmem:[%s9 + $0x80] sm:$0xff]
    %v4052 = vld [vmem:[%s9 + $0x88] sm:$0xff]
    %v4053 = vld [vmem:[%s9 + $0x90] sm:$0xff]
    %v4054 = vld [vmem:[%s9 + $0x98] sm:$0xff]
    %v4055 = vld [vmem:[%s9 + $0xa0] sm:$0xff]
    %v4056 = vld [vmem:[%s9 + $0xa8] sm:$0xff]
    %v4057 = vld [vmem:[%s9 + $0xb0] sm:$0xff]
    %v4058 = vld [vmem:[%s9 + $0xb8] sm:$0xff]
    %v4059 = vld [vmem:[%s9 + $0xc0] sm:$0xff]
    %v4060 = vld [vmem:[%s9 + $0xc8] sm:$0xff]
    %v4061 = vld [vmem:[%s9 + $0xd0] sm:$0xff]
    %v4062 = vld [vmem:[%s9 + $0xd8] sm:$0xff]
    %v4063 = vld [vmem:[%s9 + $0xe0] sm:$0xff]
    %v4064 = vld [vmem:[%s9 + $0xe8] sm:$0xff]
    %v4065 = vld [vmem:[%s9 + $0xf0] sm:$0xff]
    %v4066 = vld [vmem:[%s9 + $0xf8] sm:$0xff]
    %v4067 = vld [vmem:[%s9 + $0x100] sm:$0xff]
    %v4068 = vld [vmem:[%s9 + $0x108] sm:$0xff]
    %v4069 = vld [vmem:[%s9 + $0x110] sm:$0xff]
    %v4070 = vld [vmem:[%s9 + $0x118] sm:$0xff]
    %v4071 = vld [vmem:[%s9 + $0x120] sm:$0xff]
    %v4072 = vld [vmem:[%s9 + $0x128] sm:$0xff]
    %v4073 = vld [vmem:[%s9 + $0x130] sm:$0xff]
    %v4074 = vld [vmem:[%s9 + $0x138] sm:$0xff]
    %v4075 = vld [vmem:[%s9 + $0x140] sm:$0xff]
    %v4076 = vld [vmem:[%s9 + $0x148] sm:$0xff]
    %v4077 = vld [vmem:[%s9 + $0x150] sm:$0xff]
    %v4078 = vld [vmem:[%s9 + $0x158] sm:$0xff]
    %v4079 = vld [vmem:[%s9 + $0x160] sm:$0xff]
    %v4080 = vld [vmem:[%s9 + $0x168] sm:$0xff]
    %v4081 = vld [vmem:[%s9 + $0x170] sm:$0xff]
    %v4082 = vld [vmem:[%s9 + $0x178] sm:$0xff]
    %v4083 = vld [vmem:[%s9 + $0x180] sm:$0xff]
    %v4084 = vld [vmem:[%s9 + $0x188] sm:$0xff]
    %v4085 = vld [vmem:[%s9 + $0x190] sm:$0xff]
    %v4086 = vld [vmem:[%s9 + $0x198] sm:$0xff]
    %v4087 = vld [vmem:[%s9 + $0x1a0] sm:$0xff]
    %v4088 = vld [vmem:[%s9 + $0x1a8] sm:$0xff]
    %v4089 = vld [vmem:[%s9 + $0x1b0] sm:$0xff]
    %v4090 = vld [vmem:[%s9 + $0x1b8] sm:$0xff]
    %v4091 = vld [vmem:[%s9 + $0x1c0] sm:$0xff]
    %v4092 = vld [vmem:[%s9 + $0x1c8] sm:$0xff]
    %v4093 = vld [vmem:[%s9 + $0x1d0] sm:$0xff]
    %v4094 = vld [vmem:[%s9 + $0x1d8] sm:$0xff]
    %v4095 = vld [vmem:[%s9 + $0x1e0] sm:$0xff]
    %v4096 = vld [vmem:[%s9 + $0x1e8] sm:$0xff]
    %v4097 = vld [vmem:[%s9 + $0x1f0] sm:$0xff]
    %v4098 = vld [vmem:[%s9 + $0x1f8] sm:$0xff]
    %v4099 = vld [vmem:[%s10] sm:$0x3]
    %v4101 = vlaneseq
    %v4102 = vshrl.u32 %v4101, 7
    %v4103 = vsub.s32 0, %v4102
    %v4104 = vrot.slane %v4099, %v4103
    %v4105 = vlaneseq
    %v4106 = vshrl.u32 %v4105, 7
    %v4107 = vsub.s32 1, %v4106
    %v4108 = vrot.slane %v4099, %v4107
    %v4175 = vunpack.c.l.b16 %v4035
    %v4176 = vunpack.c.h.b16 %v4035
    %v4177 = vunpack.c.l.b16 %v4036
    %v4178 = vunpack.c.h.b16 %v4036
    %v4179 = vunpack.c.l.b16 %v4037
    %v4180 = vunpack.c.h.b16 %v4037
    %v4181 = vunpack.c.l.b16 %v4038
    %v4182 = vunpack.c.h.b16 %v4038
    %v4183 = vunpack.c.l.b16 %v4039
    %v4184 = vunpack.c.h.b16 %v4039
    %v4185 = vunpack.c.l.b16 %v4040
    %v4186 = vunpack.c.h.b16 %v4040
    %v4187 = vunpack.c.l.b16 %v4041
    %v4188 = vunpack.c.h.b16 %v4041
    %v4189 = vunpack.c.l.b16 %v4042
    %v4190 = vunpack.c.h.b16 %v4042
    %v4191 = vunpack.c.l.b16 %v4043
    %v4192 = vunpack.c.h.b16 %v4043
    %v4193 = vunpack.c.l.b16 %v4044
    %v4194 = vunpack.c.h.b16 %v4044
    %v4195 = vunpack.c.l.b16 %v4045
    %v4196 = vunpack.c.h.b16 %v4045
    %v4197 = vunpack.c.l.b16 %v4046
    %v4198 = vunpack.c.h.b16 %v4046
    %v4199 = vunpack.c.l.b16 %v4047
    %v4200 = vunpack.c.h.b16 %v4047
    %v4201 = vunpack.c.l.b16 %v4048
    %v4202 = vunpack.c.h.b16 %v4048
    %v4203 = vunpack.c.l.b16 %v4049
    %v4204 = vunpack.c.h.b16 %v4049
    %v4205 = vunpack.c.l.b16 %v4050
    %v4206 = vunpack.c.h.b16 %v4050
    %v4207 = vunpack.c.l.b16 %v4051
    %v4208 = vunpack.c.h.b16 %v4051
    %v4209 = vunpack.c.l.b16 %v4052
    %v4210 = vunpack.c.h.b16 %v4052
    %v4211 = vunpack.c.l.b16 %v4053
    %v4212 = vunpack.c.h.b16 %v4053
    %v4213 = vunpack.c.l.b16 %v4054
    %v4214 = vunpack.c.h.b16 %v4054
    %v4215 = vunpack.c.l.b16 %v4055
    %v4216 = vunpack.c.h.b16 %v4055
    %v4217 = vunpack.c.l.b16 %v4056
    %v4218 = vunpack.c.h.b16 %v4056
    %v4219 = vunpack.c.l.b16 %v4057
    %v4220 = vunpack.c.h.b16 %v4057
    %v4221 = vunpack.c.l.b16 %v4058
    %v4222 = vunpack.c.h.b16 %v4058
    %v4223 = vunpack.c.l.b16 %v4059
    %v4224 = vunpack.c.h.b16 %v4059
    %v4225 = vunpack.c.l.b16 %v4060
    %v4226 = vunpack.c.h.b16 %v4060
    %v4227 = vunpack.c.l.b16 %v4061
    %v4228 = vunpack.c.h.b16 %v4061
    %v4229 = vunpack.c.l.b16 %v4062
    %v4230 = vunpack.c.h.b16 %v4062
    %v4231 = vunpack.c.l.b16 %v4063
    %v4232 = vunpack.c.h.b16 %v4063
    %v4233 = vunpack.c.l.b16 %v4064
    %v4234 = vunpack.c.h.b16 %v4064
    %v4235 = vunpack.c.l.b16 %v4065
    %v4236 = vunpack.c.h.b16 %v4065
    %v4237 = vunpack.c.l.b16 %v4066
    %v4238 = vunpack.c.h.b16 %v4066
    %v4239 = vunpack.c.l.b16 %v4067
    %v4240 = vunpack.c.h.b16 %v4067
    %v4241 = vunpack.c.l.b16 %v4068
    %v4242 = vunpack.c.h.b16 %v4068
    %v4243 = vunpack.c.l.b16 %v4069
    %v4244 = vunpack.c.h.b16 %v4069
    %v4245 = vunpack.c.l.b16 %v4070
    %v4246 = vunpack.c.h.b16 %v4070
    %v4247 = vunpack.c.l.b16 %v4071
    %v4248 = vunpack.c.h.b16 %v4071
    %v4249 = vunpack.c.l.b16 %v4072
    %v4250 = vunpack.c.h.b16 %v4072
    %v4251 = vunpack.c.l.b16 %v4073
    %v4252 = vunpack.c.h.b16 %v4073
    %v4253 = vunpack.c.l.b16 %v4074
    %v4254 = vunpack.c.h.b16 %v4074
    %v4255 = vunpack.c.l.b16 %v4075
    %v4256 = vunpack.c.h.b16 %v4075
    %v4257 = vunpack.c.l.b16 %v4076
    %v4258 = vunpack.c.h.b16 %v4076
    %v4259 = vunpack.c.l.b16 %v4077
    %v4260 = vunpack.c.h.b16 %v4077
    %v4261 = vunpack.c.l.b16 %v4078
    %v4262 = vunpack.c.h.b16 %v4078
    %v4263 = vunpack.c.l.b16 %v4079
    %v4264 = vunpack.c.h.b16 %v4079
    %v4265 = vunpack.c.l.b16 %v4080
    %v4266 = vunpack.c.h.b16 %v4080
    %v4267 = vunpack.c.l.b16 %v4081
    %v4268 = vunpack.c.h.b16 %v4081
    %v4269 = vunpack.c.l.b16 %v4082
    %v4270 = vunpack.c.h.b16 %v4082
    %v4271 = vunpack.c.l.b16 %v4083
    %v4272 = vunpack.c.h.b16 %v4083
    %v4273 = vunpack.c.l.b16 %v4084
    %v4274 = vunpack.c.h.b16 %v4084
    %v4275 = vunpack.c.l.b16 %v4085
    %v4276 = vunpack.c.h.b16 %v4085
    %v4277 = vunpack.c.l.b16 %v4086
    %v4278 = vunpack.c.h.b16 %v4086
    %v4279 = vunpack.c.l.b16 %v4087
    %v4280 = vunpack.c.h.b16 %v4087
    %v4281 = vunpack.c.l.b16 %v4088
    %v4282 = vunpack.c.h.b16 %v4088
    %v4283 = vunpack.c.l.b16 %v4089
    %v4284 = vunpack.c.h.b16 %v4089
    %v4285 = vunpack.c.l.b16 %v4090
    %v4286 = vunpack.c.h.b16 %v4090
    %v4287 = vunpack.c.l.b16 %v4091
    %v4288 = vunpack.c.h.b16 %v4091
    %v4289 = vunpack.c.l.b16 %v4092
    %v4290 = vunpack.c.h.b16 %v4092
    %v4291 = vunpack.c.l.b16 %v4093
    %v4292 = vunpack.c.h.b16 %v4093
    %v4293 = vunpack.c.l.b16 %v4094
    %v4294 = vunpack.c.h.b16 %v4094
    %v4295 = vunpack.c.l.b16 %v4095
    %v4296 = vunpack.c.h.b16 %v4095
    %v4297 = vunpack.c.l.b16 %v4096
    %v4298 = vunpack.c.h.b16 %v4096
    %v4299 = vunpack.c.l.b16 %v4097
    %v4300 = vunpack.c.h.b16 %v4097
    %v4301 = vunpack.c.l.b16 %v4098
    %v4302 = vunpack.c.h.b16 %v4098
    %v4303 = vpack.c.b16 %v4177, %v4175
    %v4304 = vpack.c.b16 %v4178, %v4176
    %v4305 = vpack.c.b16 %v4181, %v4179
    %v4306 = vpack.c.b16 %v4182, %v4180
    %v4307 = vpack.c.b16 %v4185, %v4183
    %v4308 = vpack.c.b16 %v4186, %v4184
    %v4309 = vpack.c.b16 %v4189, %v4187
    %v4310 = vpack.c.b16 %v4190, %v4188
    %v4311 = vpack.c.b16 %v4193, %v4191
    %v4312 = vpack.c.b16 %v4194, %v4192
    %v4313 = vpack.c.b16 %v4197, %v4195
    %v4314 = vpack.c.b16 %v4198, %v4196
    %v4315 = vpack.c.b16 %v4201, %v4199
    %v4316 = vpack.c.b16 %v4202, %v4200
    %v4317 = vpack.c.b16 %v4205, %v4203
    %v4318 = vpack.c.b16 %v4206, %v4204
    %v4319 = vpack.c.b16 %v4209, %v4207
    %v4320 = vpack.c.b16 %v4210, %v4208
    %v4321 = vpack.c.b16 %v4213, %v4211
    %v4322 = vpack.c.b16 %v4214, %v4212
    %v4323 = vpack.c.b16 %v4217, %v4215
    %v4324 = vpack.c.b16 %v4218, %v4216
    %v4325 = vpack.c.b16 %v4221, %v4219
    %v4326 = vpack.c.b16 %v4222, %v4220
    %v4327 = vpack.c.b16 %v4225, %v4223
    %v4328 = vpack.c.b16 %v4226, %v4224
    %v4329 = vpack.c.b16 %v4229, %v4227
    %v4330 = vpack.c.b16 %v4230, %v4228
    %v4331 = vpack.c.b16 %v4233, %v4231
    %v4332 = vpack.c.b16 %v4234, %v4232
    %v4333 = vpack.c.b16 %v4237, %v4235
    %v4334 = vpack.c.b16 %v4238, %v4236
    %v4335 = vpack.c.b16 %v4241, %v4239
    %v4336 = vpack.c.b16 %v4242, %v4240
    %v4337 = vpack.c.b16 %v4245, %v4243
    %v4338 = vpack.c.b16 %v4246, %v4244
    %v4339 = vpack.c.b16 %v4249, %v4247
    %v4340 = vpack.c.b16 %v4250, %v4248
    %v4341 = vpack.c.b16 %v4253, %v4251
    %v4342 = vpack.c.b16 %v4254, %v4252
    %v4343 = vpack.c.b16 %v4257, %v4255
    %v4344 = vpack.c.b16 %v4258, %v4256
    %v4345 = vpack.c.b16 %v4261, %v4259
    %v4346 = vpack.c.b16 %v4262, %v4260
    %v4347 = vpack.c.b16 %v4265, %v4263
    %v4348 = vpack.c.b16 %v4266, %v4264
    %v4349 = vpack.c.b16 %v4269, %v4267
    %v4350 = vpack.c.b16 %v4270, %v4268
    %v4351 = vpack.c.b16 %v4273, %v4271
    %v4352 = vpack.c.b16 %v4274, %v4272
    %v4353 = vpack.c.b16 %v4277, %v4275
    %v4354 = vpack.c.b16 %v4278, %v4276
    %v4355 = vpack.c.b16 %v4281, %v4279
    %v4356 = vpack.c.b16 %v4282, %v4280
    %v4357 = vpack.c.b16 %v4285, %v4283
    %v4358 = vpack.c.b16 %v4286, %v4284
    %v4359 = vpack.c.b16 %v4289, %v4287
    %v4360 = vpack.c.b16 %v4290, %v4288
    %v4361 = vpack.c.b16 %v4293, %v4291
    %v4362 = vpack.c.b16 %v4294, %v4292
    %v4363 = vpack.c.b16 %v4297, %v4295
    %v4364 = vpack.c.b16 %v4298, %v4296
    %v4365 = vpack.c.b16 %v4301, %v4299
    %v4366 = vpack.c.b16 %v4302, %v4300
    %4431 = vmatprep.subr.bf16.mxu0 %v4304
    %4432 = vmatpush1.bf16.msra.mxu0 %v4303
    %4433 = vmatprep.subr.bf16.mxu0 %v4306
    %4434 = vmatpush1.bf16.msra.mxu0 %v4305
    %4435 = vmatprep.subr.bf16.mxu0 %v4308
    %4436 = vmatpush1.bf16.msra.mxu0 %v4307
    %4437 = vmatprep.subr.bf16.mxu0 %v4310
    %4438 = vmatpush1.bf16.msra.mxu0 %v4309
    %4439 = vmatprep.subr.bf16.mxu0 %v4312
    %4440 = vmatpush1.bf16.msra.mxu0 %v4311
    %4441 = vmatprep.subr.bf16.mxu0 %v4314
    %4442 = vmatpush1.bf16.msra.mxu0 %v4313
    %4443 = vmatprep.subr.bf16.mxu0 %v4316
    %4444 = vmatpush1.bf16.msra.mxu0 %v4315
    %4445 = vmatprep.subr.bf16.mxu0 %v4318
    %4446 = vmatpush1.bf16.msra.mxu0 %v4317
    %4447 = vmatprep.subr.bf16.mxu0 %v4320
    %4448 = vmatpush1.bf16.msra.mxu0 %v4319
    %4449 = vmatprep.subr.bf16.mxu0 %v4322
    %4450 = vmatpush1.bf16.msra.mxu0 %v4321
    %4451 = vmatprep.subr.bf16.mxu0 %v4324
    %4452 = vmatpush1.bf16.msra.mxu0 %v4323
    %4453 = vmatprep.subr.bf16.mxu0 %v4326
    %4454 = vmatpush1.bf16.msra.mxu0 %v4325
    %4455 = vmatprep.subr.bf16.mxu0 %v4328
    %4456 = vmatpush1.bf16.msra.mxu0 %v4327
    %4457 = vmatprep.subr.bf16.mxu0 %v4330
    %4458 = vmatpush1.bf16.msra.mxu0 %v4329
    %4459 = vmatprep.subr.bf16.mxu0 %v4332
    %4460 = vmatpush1.bf16.msra.mxu0 %v4331
    %4461 = vmatprep.subr.bf16.mxu0 %v4334
    %4462 = vmatpush1.bf16.msra.mxu0 %v4333
    %4463 = vmatprep.mubr.bf16.mxu0 %v4032
    %4464 = vmatmul.mubr.bf16.gmra.mrb[0].mxu0 %v4031
    %v4465 = vpop.f32.mrb[0].mxu0
    %v4466 = vadd.f32 %v4104, %v4465
    %v4467 = vpop.f32.mrb[0].mxu0
    %v4468 = vadd.f32 %v4108, %v4467
    %v4469 = vpop.f32.mrb[0].mxu0
    %v4470 = vpop.f32.mrb[0].mxu0
    %4471 = vdwg.mxu0
    %4472 = vmatprep.subr.bf16.mxu0 %v4336
    %4473 = vmatpush1.bf16.msra.mxu0 %v4335
    %4474 = vmatprep.subr.bf16.mxu0 %v4338
    %4475 = vmatpush1.bf16.msra.mxu0 %v4337
    %4476 = vmatprep.subr.bf16.mxu0 %v4340
    %4477 = vmatpush1.bf16.msra.mxu0 %v4339
    %4478 = vmatprep.subr.bf16.mxu0 %v4342
    %4479 = vmatpush1.bf16.msra.mxu0 %v4341
    %4480 = vmatprep.subr.bf16.mxu0 %v4344
    %4481 = vmatpush1.bf16.msra.mxu0 %v4343
    %4482 = vmatprep.subr.bf16.mxu0 %v4346
    %4483 = vmatpush1.bf16.msra.mxu0 %v4345
    %4484 = vmatprep.subr.bf16.mxu0 %v4348
    %4485 = vmatpush1.bf16.msra.mxu0 %v4347
    %4486 = vmatprep.subr.bf16.mxu0 %v4350
    %4487 = vmatpush1.bf16.msra.mxu0 %v4349
    %4488 = vmatprep.subr.bf16.mxu0 %v4352
    %4489 = vmatpush1.bf16.msra.mxu0 %v4351
    %4490 = vmatprep.subr.bf16.mxu0 %v4354
    %4491 = vmatpush1.bf16.msra.mxu0 %v4353
    %4492 = vmatprep.subr.bf16.mxu0 %v4356
    %4493 = vmatpush1.bf16.msra.mxu0 %v4355
    %4494 = vmatprep.subr.bf16.mxu0 %v4358
    %4495 = vmatpush1.bf16.msra.mxu0 %v4357
    %4496 = vmatprep.subr.bf16.mxu0 %v4360
    %4497 = vmatpush1.bf16.msra.mxu0 %v4359
    %4498 = vmatprep.subr.bf16.mxu0 %v4362
    %4499 = vmatpush1.bf16.msra.mxu0 %v4361
    %4500 = vmatprep.subr.bf16.mxu0 %v4364
    %4501 = vmatpush1.bf16.msra.mxu0 %v4363
    %4502 = vmatprep.subr.bf16.mxu0 %v4366
    %4503 = vmatpush1.bf16.msra.mxu0 %v4365
    %4504 = vmatprep.mubr.bf16.mxu0 %v4034
    %4505 = vmatmul.mubr.bf16.gmra.mrb[0].mxu0 %v4033
    %v4506 = vpop.f32.mrb[0].mxu0
    %v4507 = vadd.f32 %v4466, %v4506
    %v4508 = vpop.f32.mrb[0].mxu0
    %v4509 = vadd.f32 %v4468, %v4508
    %v4510 = vpop.f32.mrb[0].mxu0
    %v4511 = vpop.f32.mrb[0].mxu0
    %4512 = vdwg.mxu0
    %v4513 = vmax.f32 %v4507, 0.0
    %v4514 = vmax.f32 %v4509, 0.0
    %v4515 = vpack.c.bf16 %v4513, %v4513
    %v4516 = vpack.c.bf16 %v4514, %v4514
    %v4517 = vld [vmem:[%s11] sm:$0xff]
    %v4518 = vld [vmem:[%s11 + $0x8] sm:$0xff]
    %v4519 = vld [vmem:[%s11 + $0x10] sm:$0xff]
    %v4520 = vld [vmem:[%s11 + $0x18] sm:$0xff]
    %v4521 = vld [vmem:[%s11 + $0x20] sm:$0xff]
    %v4522 = vld [vmem:[%s11 + $0x28] sm:$0xff]
    %v4523 = vld [vmem:[%s11 + $0x30] sm:$0xff]
    %v4524 = vld [vmem:[%s11 + $0x38] sm:$0xff]
    %v4525 = vld [vmem:[%s11 + $0x40] sm:$0xff]
    %v4526 = vld [vmem:[%s11 + $0x48] sm:$0xff]
    %v4527 = vld [vmem:[%s11 + $0x50] sm:$0xff]
    %v4528 = vld [vmem:[%s11 + $0x58] sm:$0xff]
    %v4529 = vld [vmem:[%s11 + $0x60] sm:$0xff]
    %v4530 = vld [vmem:[%s11 + $0x68] sm:$0xff]
    %v4531 = vld [vmem:[%s11 + $0x70] sm:$0xff]
    %v4532 = vld [vmem:[%s11 + $0x78] sm:$0xff]
    %v4533 = vld [vmem:[%s11 + $0x80] sm:$0xff]
    %v4534 = vld [vmem:[%s11 + $0x88] sm:$0xff]
    %v4535 = vld [vmem:[%s11 + $0x90] sm:$0xff]
    %v4536 = vld [vmem:[%s11 + $0x98] sm:$0xff]
    %v4537 = vld [vmem:[%s11 + $0xa0] sm:$0xff]
    %v4538 = vld [vmem:[%s11 + $0xa8] sm:$0xff]
    %v4539 = vld [vmem:[%s11 + $0xb0] sm:$0xff]
    %v4540 = vld [vmem:[%s11 + $0xb8] sm:$0xff]
    %v4541 = vld [vmem:[%s11 + $0xc0] sm:$0xff]
    %v4542 = vld [vmem:[%s11 + $0xc8] sm:$0xff]
    %v4543 = vld [vmem:[%s11 + $0xd0] sm:$0xff]
    %v4544 = vld [vmem:[%s11 + $0xd8] sm:$0xff]
    %v4545 = vld [vmem:[%s11 + $0xe0] sm:$0xff]
    %v4546 = vld [vmem:[%s11 + $0xe8] sm:$0xff]
    %v4547 = vld [vmem:[%s11 + $0xf0] sm:$0xff]
    %v4548 = vld [vmem:[%s11 + $0xf8] sm:$0xff]
    %v4549 = vld [vmem:[%s12] sm:$0x3]
    %v4551 = vlaneseq
    %v4552 = vshrl.u32 %v4551, 7
    %v4553 = vsub.s32 0, %v4552
    %v4554 = vrot.slane %v4549, %v4553
    %v4555 = vlaneseq
    %v4556 = vshrl.u32 %v4555, 7
    %v4557 = vsub.s32 1, %v4556
    %v4558 = vrot.slane %v4549, %v4557
    %v4593 = vunpack.c.l.b16 %v4517
    %v4594 = vunpack.c.h.b16 %v4517
    %v4595 = vunpack.c.l.b16 %v4518
    %v4596 = vunpack.c.h.b16 %v4518
    %v4597 = vunpack.c.l.b16 %v4519
    %v4598 = vunpack.c.h.b16 %v4519
    %v4599 = vunpack.c.l.b16 %v4520
    %v4600 = vunpack.c.h.b16 %v4520
    %v4601 = vunpack.c.l.b16 %v4521
    %v4602 = vunpack.c.h.b16 %v4521
    %v4603 = vunpack.c.l.b16 %v4522
    %v4604 = vunpack.c.h.b16 %v4522
    %v4605 = vunpack.c.l.b16 %v4523
    %v4606 = vunpack.c.h.b16 %v4523
    %v4607 = vunpack.c.l.b16 %v4524
    %v4608 = vunpack.c.h.b16 %v4524
    %v4609 = vunpack.c.l.b16 %v4525
    %v4610 = vunpack.c.h.b16 %v4525
    %v4611 = vunpack.c.l.b16 %v4526
    %v4612 = vunpack.c.h.b16 %v4526
    %v4613 = vunpack.c.l.b16 %v4527
    %v4614 = vunpack.c.h.b16 %v4527
    %v4615 = vunpack.c.l.b16 %v4528
    %v4616 = vunpack.c.h.b16 %v4528
    %v4617 = vunpack.c.l.b16 %v4529
    %v4618 = vunpack.c.h.b16 %v4529
    %v4619 = vunpack.c.l.b16 %v4530
    %v4620 = vunpack.c.h.b16 %v4530
    %v4621 = vunpack.c.l.b16 %v4531
    %v4622 = vunpack.c.h.b16 %v4531
    %v4623 = vunpack.c.l.b16 %v4532
    %v4624 = vunpack.c.h.b16 %v4532
    %v4625 = vunpack.c.l.b16 %v4533
    %v4626 = vunpack.c.h.b16 %v4533
    %v4627 = vunpack.c.l.b16 %v4534
    %v4628 = vunpack.c.h.b16 %v4534
    %v4629 = vunpack.c.l.b16 %v4535
    %v4630 = vunpack.c.h.b16 %v4535
    %v4631 = vunpack.c.l.b16 %v4536
    %v4632 = vunpack.c.h.b16 %v4536
    %v4633 = vunpack.c.l.b16 %v4537
    %v4634 = vunpack.c.h.b16 %v4537
    %v4635 = vunpack.c.l.b16 %v4538
    %v4636 = vunpack.c.h.b16 %v4538
    %v4637 = vunpack.c.l.b16 %v4539
    %v4638 = vunpack.c.h.b16 %v4539
    %v4639 = vunpack.c.l.b16 %v4540
    %v4640 = vunpack.c.h.b16 %v4540
    %v4641 = vunpack.c.l.b16 %v4541
    %v4642 = vunpack.c.h.b16 %v4541
    %v4643 = vunpack.c.l.b16 %v4542
    %v4644 = vunpack.c.h.b16 %v4542
    %v4645 = vunpack.c.l.b16 %v4543
    %v4646 = vunpack.c.h.b16 %v4543
    %v4647 = vunpack.c.l.b16 %v4544
    %v4648 = vunpack.c.h.b16 %v4544
    %v4649 = vunpack.c.l.b16 %v4545
    %v4650 = vunpack.c.h.b16 %v4545
    %v4651 = vunpack.c.l.b16 %v4546
    %v4652 = vunpack.c.h.b16 %v4546
    %v4653 = vunpack.c.l.b16 %v4547
    %v4654 = vunpack.c.h.b16 %v4547
    %v4655 = vunpack.c.l.b16 %v4548
    %v4656 = vunpack.c.h.b16 %v4548
    %v4657 = vpack.c.b16 %v4595, %v4593
    %v4658 = vpack.c.b16 %v4596, %v4594
    %v4659 = vpack.c.b16 %v4599, %v4597
    %v4660 = vpack.c.b16 %v4600, %v4598
    %v4661 = vpack.c.b16 %v4603, %v4601
    %v4662 = vpack.c.b16 %v4604, %v4602
    %v4663 = vpack.c.b16 %v4607, %v4605
    %v4664 = vpack.c.b16 %v4608, %v4606
    %v4665 = vpack.c.b16 %v4611, %v4609
    %v4666 = vpack.c.b16 %v4612, %v4610
    %v4667 = vpack.c.b16 %v4615, %v4613
    %v4668 = vpack.c.b16 %v4616, %v4614
    %v4669 = vpack.c.b16 %v4619, %v4617
    %v4670 = vpack.c.b16 %v4620, %v4618
    %v4671 = vpack.c.b16 %v4623, %v4621
    %v4672 = vpack.c.b16 %v4624, %v4622
    %v4673 = vpack.c.b16 %v4627, %v4625
    %v4674 = vpack.c.b16 %v4628, %v4626
    %v4675 = vpack.c.b16 %v4631, %v4629
    %v4676 = vpack.c.b16 %v4632, %v4630
    %v4677 = vpack.c.b16 %v4635, %v4633
    %v4678 = vpack.c.b16 %v4636, %v4634
    %v4679 = vpack.c.b16 %v4639, %v4637
    %v4680 = vpack.c.b16 %v4640, %v4638
    %v4681 = vpack.c.b16 %v4643, %v4641
    %v4682 = vpack.c.b16 %v4644, %v4642
    %v4683 = vpack.c.b16 %v4647, %v4645
    %v4684 = vpack.c.b16 %v4648, %v4646
    %v4685 = vpack.c.b16 %v4651, %v4649
    %v4686 = vpack.c.b16 %v4652, %v4650
    %v4687 = vpack.c.b16 %v4655, %v4653
    %v4688 = vpack.c.b16 %v4656, %v4654
    %4721 = vmatprep.subr.bf16.mxu0 %v4658
    %4722 = vmatpush1.bf16.msra.mxu0 %v4657
    %4723 = vmatprep.subr.bf16.mxu0 %v4660
    %4724 = vmatpush1.bf16.msra.mxu0 %v4659
    %4725 = vmatprep.subr.bf16.mxu0 %v4662
    %4726 = vmatpush1.bf16.msra.mxu0 %v4661
    %4727 = vmatprep.subr.bf16.mxu0 %v4664
    %4728 = vmatpush1.bf16.msra.mxu0 %v4663
    %4729 = vmatprep.subr.bf16.mxu0 %v4666
    %4730 = vmatpush1.bf16.msra.mxu0 %v4665
    %4731 = vmatprep.subr.bf16.mxu0 %v4668
    %4732 = vmatpush1.bf16.msra.mxu0 %v4667
    %4733 = vmatprep.subr.bf16.mxu0 %v4670
    %4734 = vmatpush1.bf16.msra.mxu0 %v4669
    %4735 = vmatprep.subr.bf16.mxu0 %v4672
    %4736 = vmatpush1.bf16.msra.mxu0 %v4671
    %4737 = vmatprep.subr.bf16.mxu0 %v4674
    %4738 = vmatpush1.bf16.msra.mxu0 %v4673
    %4739 = vmatprep.subr.bf16.mxu0 %v4676
    %4740 = vmatpush1.bf16.msra.mxu0 %v4675
    %4741 = vmatprep.subr.bf16.mxu0 %v4678
    %4742 = vmatpush1.bf16.msra.mxu0 %v4677
    %4743 = vmatprep.subr.bf16.mxu0 %v4680
    %4744 = vmatpush1.bf16.msra.mxu0 %v4679
    %4745 = vmatprep.subr.bf16.mxu0 %v4682
    %4746 = vmatpush1.bf16.msra.mxu0 %v4681
    %4747 = vmatprep.subr.bf16.mxu0 %v4684
    %4748 = vmatpush1.bf16.msra.mxu0 %v4683
    %4749 = vmatprep.subr.bf16.mxu0 %v4686
    %4750 = vmatpush1.bf16.msra.mxu0 %v4685
    %4751 = vmatprep.subr.bf16.mxu0 %v4688
    %4752 = vmatpush1.bf16.msra.mxu0 %v4687
    %4753 = vmatprep.mubr.bf16.mxu0 %v4516
    %4754 = vmatmul.mubr.bf16.gmra.mrb[0].mxu0 %v4515
    %v4755 = vpop.f32.mrb[0].mxu0
    %v4756 = vadd.f32 %v4554, %v4755
    %v4757 = vpop.f32.mrb[0].mxu0
    %v4758 = vadd.f32 %v4558, %v4757
    %v4759 = vpop.f32.mrb[0].mxu0
    %v4760 = vpop.f32.mrb[0].mxu0
    %4761 = vdwg.mxu0
    %v4764 = vcombine.low %v4756, %v4758
    %v4766 = vunpack.c.l.s4 1983009808
    %v4767 = vunpack.c.0.s8 %v4766
    %v4768 = vlaneseq
    %v4769 = vshrl.u32 %v4768, 7
    %v4770 = vsub.s32 %v4767, %v4769
    %v4771 = vrot.slane %v4764, %v4770
    %4773 = vst [vmem:[%s13] sm:$0xf] %v4771
  $region61: #{stnkd_forward.1} parent=0 // pred_fallthru
    _
  // Predicated region
  $region62: #{stnkd_forward.1} parent=0 // pred_check
    _
  $region63: #{stnkd_forward.1} parent=0 // pred_check_branch
    %4775 = sbr.rel (0) target = $region65
  $region64: #{stnkd_forward.1} parent=0 // pred_region
    _
  $region65: #{stnkd_forward.1} parent=0 // pred_fallthru
    _
  // Predicated region
  $region66: #{stnkd_forward.1} parent=0 // pred_check
    _
  $region67: #{stnkd_forward.1} parent=0 // pred_check_branch
    %4777 = sbr.rel (0) target = $region69
  $region68: #{stnkd_forward.1} parent=0 // pred_region
    _
  $region69: #{stnkd_forward.1} parent=0 // pred_fallthru
    _

</llo_original>
